<compile_context>
chip_gen: v7x
topology: tpu7x:2x2x1
jax: 0.10.0
libtpu: 0.0.40
codegen_flags: <defaults>
</compile_context>

<pallas_src>
import functools
import math

import jax
import jax.numpy as jnp
from jax import lax
from jax.experimental import pallas as pl
from jax.experimental.pallas import tpu as pltpu

_LN_EPS = 1e-6  # BEiT-style norm_layer = partial(nn.LayerNorm, eps=1e-6)


# ----------------------------- Pallas kernels -----------------------------

def _layernorm(x, g, b, eps):
    mu = jnp.mean(x, axis=-1, keepdims=True)
    xc = x - mu
    var = jnp.mean(xc * xc, axis=-1, keepdims=True)
    return xc * lax.rsqrt(var + eps) * g + b


def _encoder_kernel(tok_ref, wi_ref, bi_ref, row0_ref, pos_ref,
                    ln1_g, ln1_b, wqkv, bqkv, wproj, bproj,
                    ln2_g, ln2_b, w1, b1, w2, b2,
                    o_ref, *, num_heads, scale, eps):
    """grid = (batch_tiles, depth). The output block is constant across depth,
    so the activation stays resident in VMEM for the whole layer loop."""
    layer = pl.program_id(1)
    bt, S, D = o_ref.shape
    HW = S - 1
    dh = D // num_heads
    bf = jnp.bfloat16
    f32 = jnp.float32

    # ---- layer 0: fused embed (input_proj GEMM + cls token + pos_embed) ----
    # pos_drop is identity in eval mode.
    @pl.when(layer == 0)
    def _embed():
        C = tok_ref.shape[-1]
        t = jnp.dot(tok_ref[...].reshape(bt * HW, C).astype(bf), wi_ref[...],
                    preferred_element_type=f32) + bi_ref[...]            # (bt*HW, D)
        t = t.reshape(bt, HW, D) + pos_ref[...]                          # + pos[1:]
        o_ref[:, 0:1, :] = jnp.broadcast_to(row0_ref[...], (bt, 1, D))   # cls + pos[0]
        o_ref[:, 1:, :] = t

    # ---- one transformer block on the VMEM-resident activation -------------
    x = o_ref[...].reshape(bt * S, D)                                    # f32

    # LN1 + fused QKV projection (one dense M=bt*S, N=3D GEMM)
    xn = _layernorm(x, ln1_g[0], ln1_b[0], eps)
    qkv = jnp.dot(xn.astype(bf), wqkv[0], preferred_element_type=f32) + bqkv[0]

    # Multi-head attention.  PyTorch qkv packing: columns = [q | k | v], each
    # head-major, so head hd of q lives in columns [hd*dh : (hd+1)*dh].
    attn_rows = []
    for b in range(bt):                                  # static unroll (small bt)
        r0 = b * S
        heads = []
        for hd in range(num_heads):                      # static unroll
            q = qkv[r0:r0 + S, hd * dh:(hd + 1) * dh].astype(bf)
            k = qkv[r0:r0 + S, D + hd * dh:D + (hd + 1) * dh].astype(bf)
            v = qkv[r0:r0 + S, 2 * D + hd * dh:2 * D + (hd + 1) * dh].astype(bf)
            s = lax.dot_general(q, k, (((1,), (1,)), ((), ())),
                                preferred_element_type=f32) * scale
            s = s - jnp.max(s, axis=-1, keepdims=True)
            p = jnp.exp(s)
            p = p * pl.reciprocal(jnp.sum(p, axis=-1, keepdims=True), approx=True)
            heads.append(jnp.dot(p.astype(bf), v, preferred_element_type=f32))
        attn_rows.append(heads[0] if num_heads == 1
                         else jnp.concatenate(heads, axis=-1))           # (S, D)
    attn = attn_rows[0] if bt == 1 else jnp.concatenate(attn_rows, axis=0)

    # Single K=D output-projection GEMM + residual
    y = x + jnp.dot(attn.astype(bf), wproj[0], preferred_element_type=f32) + bproj[0]

    # LN2 + MLP (exact erf GELU, matches nn.GELU) + residual
    yn = _layernorm(y, ln2_g[0], ln2_b[0], eps)
    h1 = jnp.dot(yn.astype(bf), w1[0], preferred_element_type=f32) + b1[0]
    h1 = 0.5 * h1 * (1.0 + lax.erf(h1 * 0.7071067811865476))
    out = y + jnp.dot(h1.astype(bf), w2[0], preferred_element_type=f32) + b2[0]

    o_ref[...] = out.reshape(bt, S, D)


def _head_kernel(x_ref, w_ref, b_ref, tgt_ref, rec_ref, pred_ref):
    """One batch element per grid step: output_proj GEMM over all S rows,
    drop the cls row, per-patch L2 vs target."""
    rec_full = jnp.dot(x_ref[0].astype(jnp.bfloat16), w_ref[...],
                       preferred_element_type=jnp.float32) + b_ref[...]   # (S, C)
    rec = rec_full[1:, :]                                                 # drop cls
    rec_ref[0] = rec
    diff = rec - tgt_ref[0]
    pred_ref[0] = jnp.sqrt(jnp.sum(diff * diff, axis=-1))[None, :]        # (1, HW)


# ----------------------------- wrappers -----------------------------

def encode(tokens, prep, *, num_heads, batch_tile=1, eps=_LN_EPS):
    B, HW, C = tokens.shape
    D = prep["wi"].shape[1]
    S = HW + 1
    depth = prep["wqkv"].shape[0]
    hid = prep["w1"].shape[2]
    bt = batch_tile
    assert B % bt == 0, "batch must be divisible by batch_tile"
    dh = D // num_heads
    assert dh * num_heads == D, "embed_dim must be divisible by num_heads"
    scale = dh ** -0.5

    def const(shape):
        return pl.BlockSpec(shape, lambda i, l, _n=len(shape): (0,) * _n)

    def perlayer(shape):
        return pl.BlockSpec((1,) + shape,
                            lambda i, l, _n=len(shape): (l,) + (0,) * _n)

    flops = (2 * B * HW * C * D
             + B * depth * (2 * S * D * 3 * D + 4 * S * S * D
                            + 2 * S * D * D + 4 * S * D * hid))
    trans = B * depth * (num_heads * S * S + S * hid + 4 * S)
    weight_keys = ("wi", "bi", "row0", "pos_patch", "ln1_g", "ln1_b", "wqkv",
                   "bqkv", "wproj", "bproj", "ln2_g", "ln2_b", "w1", "b1",
                   "w2", "b2")
    weight_bytes = sum(int(prep[k].size) * prep[k].dtype.itemsize for k in weight_keys)
    bytes_acc = int(tokens.size) * 4 + B * S * D * 4 + weight_bytes

    kern = functools.partial(_encoder_kernel, num_heads=num_heads,
                             scale=scale, eps=eps)
    return pl.pallas_call(
        kern,
        out_shape=jax.ShapeDtypeStruct((B, S, D), jnp.float32),
        grid=(B // bt, depth),
        in_specs=[
            pl.BlockSpec((bt, HW, C), lambda i, l: (i, 0, 0)),   # tokens
            const((C, D)), const((1, D)),                        # input_proj W / b
            const((1, D)), const((HW, D)),                       # cls+pos0, pos[1:]
            perlayer((1, D)), perlayer((1, D)),                  # ln1 gamma / beta
            perlayer((D, 3 * D)), perlayer((1, 3 * D)),          # qkv W / b
            perlayer((D, D)), perlayer((1, D)),                  # proj W / b
            perlayer((1, D)), perlayer((1, D)),                  # ln2 gamma / beta
            perlayer((D, hid)), perlayer((1, hid)),              # fc1 W / b
            perlayer((hid, D)), perlayer((1, D)),                # fc2 W / b
        ],
        out_specs=pl.BlockSpec((bt, S, D), lambda i, l: (i, 0, 0)),
        compiler_params=pltpu.CompilerParams(
            dimension_semantics=("parallel", "arbitrary"),
            vmem_limit_bytes=48 * 1024 * 1024),
        cost_estimate=pl.CostEstimate(flops=flops, transcendentals=trans,
                                      bytes_accessed=bytes_acc),
    )(tokens,
      prep["wi"], prep["bi"], prep["row0"], prep["pos_patch"],
      prep["ln1_g"], prep["ln1_b"], prep["wqkv"], prep["bqkv"],
      prep["wproj"], prep["bproj"], prep["ln2_g"], prep["ln2_b"],
      prep["w1"], prep["b1"], prep["w2"], prep["b2"])


def output_head(x, wo, bo, tgt_tokens):
    B, S, D = x.shape
    HW = S - 1
    C = wo.shape[1]
    bytes_acc = (int(x.size) + int(tgt_tokens.size)) * 4 \
        + B * HW * C * 4 + B * HW * 4 + D * C * 2 + C * 4
    return pl.pallas_call(
        _head_kernel,
        out_shape=(jax.ShapeDtypeStruct((B, HW, C), jnp.float32),   # rec tokens
                   jax.ShapeDtypeStruct((B, 1, HW), jnp.float32)),  # per-patch L2
        grid=(B,),
        in_specs=[
            pl.BlockSpec((1, S, D), lambda i: (i, 0, 0)),
            pl.BlockSpec((D, C), lambda i: (0, 0)),
            pl.BlockSpec((1, C), lambda i: (0, 0)),
            pl.BlockSpec((1, HW, C), lambda i: (i, 0, 0)),
        ],
        out_specs=(pl.BlockSpec((1, HW, C), lambda i: (i, 0, 0)),
                   pl.BlockSpec((1, 1, HW), lambda i: (i, 0, 0))),
        compiler_params=pltpu.CompilerParams(
            dimension_semantics=("parallel",),
            vmem_limit_bytes=48 * 1024 * 1024),
        cost_estimate=pl.CostEstimate(flops=2 * B * S * D * C,
                                      transcendentals=B * HW,
                                      bytes_accessed=bytes_acc),
    )(x, wo, bo, tgt_tokens)


@functools.lru_cache(maxsize=None)
def _interp_matrix(in_size, out_size):
    # 1-D linear interpolation matrix, align_corners=True (UpsamplingBilinear2d)
    idx = jnp.arange(out_size, dtype=jnp.float32) * (in_size - 1) / (out_size - 1)
    lo = jnp.clip(jnp.floor(idx).astype(jnp.int32), 0, in_size - 2)
    frac = idx - lo.astype(jnp.float32)
    rows = jnp.arange(out_size)
    A = jnp.zeros((out_size, in_size), jnp.float32)
    A = A.at[rows, lo].set(1.0 - frac)
    A = A.at[rows, lo + 1].add(frac)
    return A


# ----------------------------- params -----------------------------

def init_params(key, *, outplane, embed_dim, depth, num_patches,
                mlp_ratio=4.0, init_std=0.02):
    f32 = jnp.float32
    keys = jax.random.split(key, 4 + depth)
    hidden = int(embed_dim * mlp_ratio)
    p = {
        "cls_token": init_std * jax.random.normal(keys[0], (1, 1, embed_dim), f32),
        "pos_embed": init_std * jax.random.normal(
            keys[1], (1, num_patches + 1, embed_dim), f32),
        "input_proj_w": init_std * jax.random.normal(keys[2], (outplane, embed_dim), f32),
        "input_proj_b": jnp.zeros((embed_dim,), f32),
        "output_proj_w": init_std * jax.random.normal(keys[3], (embed_dim, outplane), f32),
        "output_proj_b": jnp.zeros((outplane,), f32),
    }
    blocks = []
    for i in range(depth):
        bk = jax.random.split(keys[4 + i], 4)
        rescale = 1.0 / math.sqrt(2.0 * (i + 1))   # fix_init_weight()
        blocks.append({
            "ln1_g": jnp.ones((embed_dim,), f32), "ln1_b": jnp.zeros((embed_dim,), f32),
            "w_qkv": init_std * jax.random.normal(bk[0], (embed_dim, 3 * embed_dim), f32),
            "b_qkv": jnp.zeros((3 * embed_dim,), f32),
            "w_proj": rescale * init_std * jax.random.normal(bk[1], (embed_dim, embed_dim), f32),
            "b_proj": jnp.zeros((embed_dim,), f32),
            "ln2_g": jnp.ones((embed_dim,), f32), "ln2_b": jnp.zeros((embed_dim,), f32),
            "w1": init_std * jax.random.normal(bk[2], (embed_dim, hidden), f32),
            "b1": jnp.zeros((hidden,), f32),
            "w2": rescale * init_std * jax.random.normal(bk[3], (hidden, embed_dim), f32),
            "b2": jnp.zeros((embed_dim,), f32),
        })
    p["blocks"] = blocks
    return p


def prepare_params(params):
    """One-time prep: stack per-layer weights along a leading depth axis and
    pre-cast all matmul weights to bf16 (no per-forward cast pass, half the
    weight DMA bytes into VMEM)."""
    bf, f32 = jnp.bfloat16, jnp.float32
    blocks = params["blocks"]

    def stackv(name):   # (depth, 1, N) f32 vectors
        return jnp.stack([b[name].reshape(1, -1) for b in blocks]).astype(f32)

    def stackm(name):   # (depth, K, N) bf16 matrices
        return jnp.stack([b[name] for b in blocks]).astype(bf)

    pos = params["pos_embed"]
    return {
        "wi": params["input_proj_w"].astype(bf),
        "bi": params["input_proj_b"].reshape(1, -1).astype(f32),
        "row0": (params["cls_token"][0] + pos[0, 0:1, :]).astype(f32),   # (1, D)
        "pos_patch": pos[0, 1:, :].astype(f32),                          # (HW, D)
        "ln1_g": stackv("ln1_g"), "ln1_b": stackv("ln1_b"),
        "wqkv": stackm("w_qkv"), "bqkv": stackv("b_qkv"),
        "wproj": stackm("w_proj"), "bproj": stackv("b_proj"),
        "ln2_g": stackv("ln2_g"), "ln2_b": stackv("ln2_b"),
        "w1": stackm("w1"), "b1": stackv("b1"),
        "w2": stackm("w2"), "b2": stackv("b2"),
        "wo": params["output_proj_w"].astype(bf),
        "bo": params["output_proj_b"].reshape(1, -1).astype(f32),
    }


# ----------------------------- model -----------------------------

def forward(feature_align, target_feature_align, prep, num_heads, batch_tile=1):
    """PatchLevelReconstructionModel.forward (eval; dropout/drop_path identity)."""
    B, C, h, w = feature_align.shape
    HW = h * w

    # b c h w -> b (h w) c
    tokens = jnp.transpose(feature_align.reshape(B, C, HW), (0, 2, 1))     # (B,HW,C)

    # embed + all transformer blocks: one fused pallas_call, activation resident
    x = encode(tokens, prep, num_heads=num_heads, batch_tile=batch_tile)   # (B,S,D)

    # output_proj + drop cls token + per-patch L2 vs target (fused, grid over B)
    tgt_tokens = jnp.transpose(target_feature_align.reshape(B, C, HW), (0, 2, 1))
    rec_tokens, pred3 = output_head(x, prep["wo"], prep["bo"], tgt_tokens)
    pred = pred3[:, 0, :]                                  # (B, HW) per-patch L2

    feature_rec = jnp.transpose(rec_tokens, (0, 2, 1)).reshape(B, C, h, w)

    # TODO(synk): PyTorch forward saves feature_rec[9] to .npy files (file I/O) — omitted.

    # tiny final reductions (plain JAX on a (B, HW) array)
    patches_distribution = pred.T                          # (HW, B)
    score = jnp.mean(pred, axis=0)                         # (HW,) mean over batch
    RMSE_patches_score = score.reshape(HW, 1)              # (HW, 1)
    RMSE_patches_loss = jnp.mean(score)
    MSELoss = jnp.sum(pred * pred) / (B * HW * C)          # nn.MSELoss

    # 16x bilinear upsample, align_corners=True: two tiny constant matmuls.
    Ah = _interp_matrix(h, 16 * h)
    Aw = _interp_matrix(w, 16 * w)
    score_map = Ah @ score.reshape(h, w) @ Aw.T
    RMSE_patches_score_map = score_map.reshape(1, 1, 16 * h, 16 * w)

    return {
        "feature_rec": feature_rec,
        "feature_align": feature_align,
        "patches_distribution": patches_distribution,
        "RMSE_patches_score": RMSE_patches_score,
        "RMSE_patches_score_map": RMSE_patches_score_map,
        "MSELoss": MSELoss,
        "RMSE_patches_loss": RMSE_patches_loss,
    }


# ----------------------------- main -----------------------------

if __name__ == "__main__":
    # small config consistent with the module: outplane channels, 4x4 feature
    # map, ViT blocks over (h*w + 1) tokens.
    B = 2
    C = 32            # outplane
    h = w = 4         # feature_size
    D = 64            # embed_dim
    depth = 2
    num_heads = 4

    key = jax.random.PRNGKey(0)
    k_in, k_tgt, k_par = jax.random.split(key, 3)
    feature_align = jax.random.normal(k_in, (B, C, h, w), jnp.float32)
    tokenimg_feature_align = jax.random.normal(k_tgt, (B, C, h, w), jnp.float32)
    params = init_params(k_par, outplane=C, embed_dim=D, depth=depth,
                         num_patches=h * w)
    prep = prepare_params(params)   # one-time bf16 cast + layer stacking

    fwd = jax.jit(forward, static_argnums=(3, 4))
    out = fwd(feature_align, tokenimg_feature_align, prep, num_heads, 1)
    out = jax.block_until_ready(out)

    assert out["feature_rec"].shape == (B, C, h, w)
    assert out["patches_distribution"].shape == (h * w, B)
    assert out["RMSE_patches_score"].shape == (h * w, 1)
    assert out["RMSE_patches_score_map"].shape == (1, 1, 16 * h, 16 * w)
    assert out["MSELoss"].shape == () and out["RMSE_patches_loss"].shape == ()
    assert bool(jnp.isfinite(out["MSELoss"]))
    assert bool(jnp.isfinite(out["RMSE_patches_loss"]))
    print("KERNEL_OK")
</pallas_src>

<mosaic_0001>
module attributes {stable_mosaic.version = 11 : i64} {
  func.func private @main(%arg0: i32) attributes {dimension_semantics = [#tpu.dimension_semantics<core_parallel>], iteration_bounds = array<i64: 2>, tpu.core_type = #tpu.core_type<sc_scalar_subcore>, window_params = []} {
    return
  }
}

module attributes {stable_mosaic.version = 11 : i64} {
  func.func private @main(%arg0: i32) attributes {dimension_semantics = [#tpu.dimension_semantics<core_parallel>], iteration_bounds = array<i64: 2>, tpu.core_type = #tpu.core_type<sc_scalar_subcore>, window_params = []} {
    return
  }
}

module attributes {stable_mosaic.version = 11 : i64} {
  func.func @_head_kernel(%arg0: i32, %arg1: memref<1x17x64xf32, #tpu.memory_space<vmem>>, %arg2: memref<64x32xbf16, #tpu.memory_space<vmem>>, %arg3: memref<1x32xf32, #tpu.memory_space<vmem>>, %arg4: memref<1x16x32xf32, #tpu.memory_space<vmem>>, %arg5: memref<1x16x32xf32, #tpu.memory_space<vmem>>, %arg6: memref<1x1x16xf32, #tpu.memory_space<vmem>>) attributes {dimension_semantics = [#tpu.dimension_semantics<parallel>], iteration_bounds = array<i64: 2>, scalar_prefetch = 0 : i64, scratch_operands = 0 : i64, tpu.core_type = #tpu.core_type<tc>, window_params = [{transform_indices = @transform_0, window_bounds = array<i64: 1, 17, 64>}, {pipeline_mode = #tpu.pipeline_mode<synchronous>, transform_indices = @transform_1, window_bounds = array<i64: 64, 32>}, {pipeline_mode = #tpu.pipeline_mode<synchronous>, transform_indices = @transform_2, window_bounds = array<i64: 1, 32>}, {transform_indices = @transform_3, window_bounds = array<i64: 1, 16, 32>}, {transform_indices = @transform_4, window_bounds = array<i64: 1, 16, 32>}, {transform_indices = @transform_5, window_bounds = array<i64: 1, 1, 16>}]} {
    %c0 = arith.constant 0 : index
    %c0_0 = arith.constant 0 : index
    %c0_1 = arith.constant 0 : index
    %0 = vector.load %arg1[%c0, %c0_0, %c0_1] : memref<1x17x64xf32, #tpu.memory_space<vmem>>, vector<1x17x64xf32>
    %1 = vector.shape_cast %0 : vector<1x17x64xf32> to vector<17x64xf32>
    %2 = arith.truncf %1 : vector<17x64xf32> to vector<17x64xbf16>
    %c0_2 = arith.constant 0 : index
    %c0_3 = arith.constant 0 : index
    %3 = vector.load %arg2[%c0_2, %c0_3] : memref<64x32xbf16, #tpu.memory_space<vmem>>, vector<64x32xbf16>
    %cst = arith.constant dense<0.000000e+00> : vector<17x32xf32>
    %4 = tpu.matmul %2, %3, %cst {dimension_numbers = #tpu.dot_dimension_numbers<[1], [0], [0], [1], [0, 0, 1, 1], [], []>} : vector<17x64xbf16>, vector<64x32xbf16>, vector<17x32xf32> -> vector<17x32xf32>
    %c0_4 = arith.constant 0 : index
    %c0_5 = arith.constant 0 : index
    %5 = vector.load %arg3[%c0_4, %c0_5] : memref<1x32xf32, #tpu.memory_space<vmem>>, vector<1x32xf32>
    %6 = vector.broadcast %5 : vector<1x32xf32> to vector<17x32xf32>
    %7 = arith.addf %4, %6 : vector<17x32xf32>
    %8 = vector.extract_strided_slice %7 {offsets = [1, 0], sizes = [16, 32], strides = [1, 1]} : vector<17x32xf32> to vector<16x32xf32>
    %c0_6 = arith.constant 0 : index
    %c0_7 = arith.constant 0 : index
    %c0_8 = arith.constant 0 : index
    %9 = vector.load %arg5[%c0_6, %c0_7, %c0_8] : memref<1x16x32xf32, #tpu.memory_space<vmem>>, vector<1x16x32xf32>
    %10 = vector.shape_cast %9 : vector<1x16x32xf32> to vector<16x32xf32>
    %11 = vector.shape_cast %8 : vector<16x32xf32> to vector<1x16x32xf32>
    tpu.vector_store %arg5[%c0_6, %c0_7, %c0_8], %11 {strides = array<i32>} : memref<1x16x32xf32, #tpu.memory_space<vmem>>, vector<1x16x32xf32>,
    %c0_9 = arith.constant 0 : index
    %c0_10 = arith.constant 0 : index
    %c0_11 = arith.constant 0 : index
    %12 = vector.load %arg4[%c0_9, %c0_10, %c0_11] : memref<1x16x32xf32, #tpu.memory_space<vmem>>, vector<1x16x32xf32>
    %13 = vector.shape_cast %12 : vector<1x16x32xf32> to vector<16x32xf32>
    %14 = arith.subf %8, %13 : vector<16x32xf32>
    %15 = arith.mulf %14, %14 : vector<16x32xf32>
    %cst_12 = arith.constant dense<0.000000e+00> : vector<16xf32>
    %16 = vector.multi_reduction <add>, %15, %cst_12 [1] : vector<16x32xf32> to vector<16xf32>
    %17 = math.sqrt %16 : vector<16xf32>
    %18 = vector.shape_cast %17 : vector<16xf32> to vector<1x16xf32>
    %c0_13 = arith.constant 0 : index
    %c0_14 = arith.constant 0 : index
    %c0_15 = arith.constant 0 : index
    %19 = vector.load %arg6[%c0_13, %c0_14, %c0_15] : memref<1x1x16xf32, #tpu.memory_space<vmem>>, vector<1x1x16xf32>
    %20 = vector.shape_cast %19 : vector<1x1x16xf32> to vector<1x16xf32>
    %21 = vector.shape_cast %18 : vector<1x16xf32> to vector<1x1x16xf32>
    tpu.vector_store %arg6[%c0_13, %c0_14, %c0_15], %21 {strides = array<i32>} : memref<1x1x16xf32, #tpu.memory_space<vmem>>, vector<1x1x16xf32>,
    return
  }
  func.func @transform_0(%arg0: i32) -> (i32, i32, i32) {
    %c0_i32 = arith.constant 0 : i32
    %c0_i32_0 = arith.constant 0 : i32
    %c0_i32_1 = arith.constant 0 : i32
    return %arg0, %c0_i32, %c0_i32_0 : i32, i32, i32
  }
  func.func @transform_1(%arg0: i32) -> (i32, i32) {
    %c0_i32 = arith.constant 0 : i32
    %c0_i32_0 = arith.constant 0 : i32
    %c0_i32_1 = arith.constant 0 : i32
    return %c0_i32, %c0_i32_0 : i32, i32
  }
  func.func @transform_2(%arg0: i32) -> (i32, i32) {
    %c0_i32 = arith.constant 0 : i32
    %c0_i32_0 = arith.constant 0 : i32
    %c0_i32_1 = arith.constant 0 : i32
    return %c0_i32, %c0_i32_0 : i32, i32
  }
  func.func @transform_3(%arg0: i32) -> (i32, i32, i32) {
    %c0_i32 = arith.constant 0 : i32
    %c0_i32_0 = arith.constant 0 : i32
    %c0_i32_1 = arith.constant 0 : i32
    return %arg0, %c0_i32, %c0_i32_0 : i32, i32, i32
  }
  func.func @transform_4(%arg0: i32) -> (i32, i32, i32) {
    %c0_i32 = arith.constant 0 : i32
    %c0_i32_0 = arith.constant 0 : i32
    %c0_i32_1 = arith.constant 0 : i32
    return %arg0, %c0_i32, %c0_i32_0 : i32, i32, i32
  }
  func.func @transform_5(%arg0: i32) -> (i32, i32, i32) {
    %c0_i32 = arith.constant 0 : i32
    %c0_i32_0 = arith.constant 0 : i32
    %c0_i32_1 = arith.constant 0 : i32
    return %arg0, %c0_i32, %c0_i32_0 : i32, i32, i32
  }
}

module attributes {stable_mosaic.version = 11 : i64} {
  func.func @_encoder_kernel(%arg0: i32, %arg1: i32, %arg2: memref<1x16x32xf32, #tpu.memory_space<vmem>>, %arg3: memref<32x64xbf16, #tpu.memory_space<vmem>>, %arg4: memref<1x64xf32, #tpu.memory_space<vmem>>, %arg5: memref<1x64xf32, #tpu.memory_space<vmem>>, %arg6: memref<16x64xf32, #tpu.memory_space<vmem>>, %arg7: memref<1x1x64xf32, #tpu.memory_space<vmem>>, %arg8: memref<1x1x64xf32, #tpu.memory_space<vmem>>, %arg9: memref<1x64x192xbf16, #tpu.memory_space<vmem>>, %arg10: memref<1x1x192xf32, #tpu.memory_space<vmem>>, %arg11: memref<1x64x64xbf16, #tpu.memory_space<vmem>>, %arg12: memref<1x1x64xf32, #tpu.memory_space<vmem>>, %arg13: memref<1x1x64xf32, #tpu.memory_space<vmem>>, %arg14: memref<1x1x64xf32, #tpu.memory_space<vmem>>, %arg15: memref<1x64x256xbf16, #tpu.memory_space<vmem>>, %arg16: memref<1x1x256xf32, #tpu.memory_space<vmem>>, %arg17: memref<1x256x64xbf16, #tpu.memory_space<vmem>>, %arg18: memref<1x1x64xf32, #tpu.memory_space<vmem>>, %arg19: memref<1x17x64xf32, #tpu.memory_space<vmem>>) attributes {dimension_semantics = [#tpu.dimension_semantics<parallel>, #tpu.dimension_semantics<arbitrary>], iteration_bounds = array<i64: 2, 2>, scalar_prefetch = 0 : i64, scratch_operands = 0 : i64, tpu.core_type = #tpu.core_type<tc>, window_params = [{transform_indices = @transform_0, window_bounds = array<i64: 1, 16, 32>}, {pipeline_mode = #tpu.pipeline_mode<synchronous>, transform_indices = @transform_1, window_bounds = array<i64: 32, 64>}, {pipeline_mode = #tpu.pipeline_mode<synchronous>, transform_indices = @transform_2, window_bounds = array<i64: 1, 64>}, {pipeline_mode = #tpu.pipeline_mode<synchronous>, transform_indices = @transform_3, window_bounds = array<i64: 1, 64>}, {pipeline_mode = #tpu.pipeline_mode<synchronous>, transform_indices = @transform_4, window_bounds = array<i64: 16, 64>}, {transform_indices = @transform_5, window_bounds = array<i64: 1, 1, 64>}, {transform_indices = @transform_6, window_bounds = array<i64: 1, 1, 64>}, {transform_indices = @transform_7, window_bounds = array<i64: 1, 64, 192>}, {transform_indices = @transform_8, window_bounds = array<i64: 1, 1, 192>}, {transform_indices = @transform_9, window_bounds = array<i64: 1, 64, 64>}, {transform_indices = @transform_10, window_bounds = array<i64: 1, 1, 64>}, {transform_indices = @transform_11, window_bounds = array<i64: 1, 1, 64>}, {transform_indices = @transform_12, window_bounds = array<i64: 1, 1, 64>}, {transform_indices = @transform_13, window_bounds = array<i64: 1, 64, 256>}, {transform_indices = @transform_14, window_bounds = array<i64: 1, 1, 256>}, {transform_indices = @transform_15, window_bounds = array<i64: 1, 256, 64>}, {transform_indices = @transform_16, window_bounds = array<i64: 1, 1, 64>}, {transform_indices = @transform_17, window_bounds = array<i64: 1, 17, 64>}]} {
    %c0_i32 = arith.constant 0 : i32
    %0 = arith.cmpi eq, %arg1, %c0_i32 : i32
    %1 = arith.extui %0 : i1 to i32
    %c0_i32_0 = arith.constant 0 : i32
    %2 = arith.cmpi ne, %1, %c0_i32_0 : i32
    scf.if %2 {
      %c0_78 = arith.constant 0 : index
      %c0_79 = arith.constant 0 : index
      %c0_80 = arith.constant 0 : index
      %182 = vector.load %arg2[%c0_78, %c0_79, %c0_80] : memref<1x16x32xf32, #tpu.memory_space<vmem>>, vector<1x16x32xf32>
      %183 = vector.shape_cast %182 : vector<1x16x32xf32> to vector<16x32xf32>
      %184 = arith.truncf %183 : vector<16x32xf32> to vector<16x32xbf16>
      %c0_81 = arith.constant 0 : index
      %c0_82 = arith.constant 0 : index
      %185 = vector.load %arg3[%c0_81, %c0_82] : memref<32x64xbf16, #tpu.memory_space<vmem>>, vector<32x64xbf16>
      %cst_83 = arith.constant dense<0.000000e+00> : vector<16x64xf32>
      %186 = tpu.matmul %184, %185, %cst_83 {dimension_numbers = #tpu.dot_dimension_numbers<[1], [0], [0], [1], [0, 0, 1, 1], [], []>} : vector<16x32xbf16>, vector<32x64xbf16>, vector<16x64xf32> -> vector<16x64xf32>
      %c0_84 = arith.constant 0 : index
      %c0_85 = arith.constant 0 : index
      %187 = vector.load %arg4[%c0_84, %c0_85] : memref<1x64xf32, #tpu.memory_space<vmem>>, vector<1x64xf32>
      %188 = vector.broadcast %187 : vector<1x64xf32> to vector<16x64xf32>
      %189 = arith.addf %186, %188 : vector<16x64xf32>
      %190 = vector.shape_cast %189 : vector<16x64xf32> to vector<1x16x64xf32>
      %c0_86 = arith.constant 0 : index
      %c0_87 = arith.constant 0 : index
      %191 = vector.load %arg6[%c0_86, %c0_87] : memref<16x64xf32, #tpu.memory_space<vmem>>, vector<16x64xf32>
      %192 = vector.shape_cast %191 : vector<16x64xf32> to vector<1x16x64xf32>
      %193 = arith.addf %190, %192 : vector<1x16x64xf32>
      %c0_88 = arith.constant 0 : index
      %c0_89 = arith.constant 0 : index
      %194 = vector.load %arg5[%c0_88, %c0_89] : memref<1x64xf32, #tpu.memory_space<vmem>>, vector<1x64xf32>
      %195 = vector.shape_cast %194 : vector<1x64xf32> to vector<1x1x64xf32>
      %c0_90 = arith.constant 0 : index
      %c0_91 = arith.constant 0 : index
      %c0_92 = arith.constant 0 : index
      %196 = vector.load %arg19[%c0_90, %c0_91, %c0_92] : memref<1x17x64xf32, #tpu.memory_space<vmem>>, vector<1x1x64xf32>
      tpu.vector_store %arg19[%c0_90, %c0_91, %c0_92], %195 {strides = array<i32>} : memref<1x17x64xf32, #tpu.memory_space<vmem>>, vector<1x1x64xf32>,
      %c0_93 = arith.constant 0 : index
      %c1 = arith.constant 1 : index
      %c0_94 = arith.constant 0 : index
      %197 = vector.load %arg19[%c0_93, %c1, %c0_94] : memref<1x17x64xf32, #tpu.memory_space<vmem>>, vector<1x16x64xf32>
      tpu.vector_store %arg19[%c0_93, %c1, %c0_94], %193 {strides = array<i32>} : memref<1x17x64xf32, #tpu.memory_space<vmem>>, vector<1x16x64xf32>,
    } else {
    }
    %c0 = arith.constant 0 : index
    %c0_1 = arith.constant 0 : index
    %c0_2 = arith.constant 0 : index
    %3 = vector.load %arg19[%c0, %c0_1, %c0_2] : memref<1x17x64xf32, #tpu.memory_space<vmem>>, vector<1x17x64xf32>
    %4 = vector.shape_cast %3 : vector<1x17x64xf32> to vector<17x64xf32>
    %c0_3 = arith.constant 0 : index
    %c0_4 = arith.constant 0 : index
    %c0_5 = arith.constant 0 : index
    %5 = vector.load %arg7[%c0_3, %c0_4, %c0_5] : memref<1x1x64xf32, #tpu.memory_space<vmem>>, vector<1x1x64xf32>
    %6 = vector.shape_cast %5 : vector<1x1x64xf32> to vector<1x64xf32>
    %c0_6 = arith.constant 0 : index
    %c0_7 = arith.constant 0 : index
    %c0_8 = arith.constant 0 : index
    %7 = vector.load %arg8[%c0_6, %c0_7, %c0_8] : memref<1x1x64xf32, #tpu.memory_space<vmem>>, vector<1x1x64xf32>
    %8 = vector.shape_cast %7 : vector<1x1x64xf32> to vector<1x64xf32>
    %cst = arith.constant dense<0.000000e+00> : vector<17xf32>
    %9 = vector.multi_reduction <add>, %4, %cst [1] : vector<17x64xf32> to vector<17xf32>
    %10 = vector.shape_cast %9 : vector<17xf32> to vector<17x1xf32>
    %cst_9 = arith.constant 6.400000e+01 : f32
    %11 = vector.broadcast %cst_9 : f32 to vector<17x1xf32>
    %12 = arith.divf %10, %11 : vector<17x1xf32>
    %13 = vector.broadcast %12 : vector<17x1xf32> to vector<17x64xf32>
    %14 = arith.subf %4, %13 : vector<17x64xf32>
    %15 = arith.mulf %14, %14 : vector<17x64xf32>
    %cst_10 = arith.constant dense<0.000000e+00> : vector<17xf32>
    %16 = vector.multi_reduction <add>, %15, %cst_10 [1] : vector<17x64xf32> to vector<17xf32>
    %17 = vector.shape_cast %16 : vector<17xf32> to vector<17x1xf32>
    %cst_11 = arith.constant 6.400000e+01 : f32
    %18 = vector.broadcast %cst_11 : f32 to vector<17x1xf32>
    %19 = arith.divf %17, %18 : vector<17x1xf32>
    %cst_12 = arith.constant 9.99999997E-7 : f32
    %20 = vector.broadcast %cst_12 : f32 to vector<17x1xf32>
    %21 = arith.addf %19, %20 : vector<17x1xf32>
    %22 = math.rsqrt %21 : vector<17x1xf32>
    %23 = vector.broadcast %22 : vector<17x1xf32> to vector<17x64xf32>
    %24 = arith.mulf %14, %23 : vector<17x64xf32>
    %25 = vector.broadcast %6 : vector<1x64xf32> to vector<17x64xf32>
    %26 = arith.mulf %24, %25 : vector<17x64xf32>
    %27 = vector.broadcast %8 : vector<1x64xf32> to vector<17x64xf32>
    %28 = arith.addf %26, %27 : vector<17x64xf32>
    %29 = arith.truncf %28 : vector<17x64xf32> to vector<17x64xbf16>
    %c0_13 = arith.constant 0 : index
    %c0_14 = arith.constant 0 : index
    %c0_15 = arith.constant 0 : index
    %30 = vector.load %arg9[%c0_13, %c0_14, %c0_15] : memref<1x64x192xbf16, #tpu.memory_space<vmem>>, vector<1x64x192xbf16>
    %31 = vector.shape_cast %30 : vector<1x64x192xbf16> to vector<64x192xbf16>
    %cst_16 = arith.constant dense<0.000000e+00> : vector<17x192xf32>
    %32 = tpu.matmul %29, %31, %cst_16 {dimension_numbers = #tpu.dot_dimension_numbers<[1], [0], [0], [1], [0, 0, 1, 1], [], []>} : vector<17x64xbf16>, vector<64x192xbf16>, vector<17x192xf32> -> vector<17x192xf32>
    %c0_17 = arith.constant 0 : index
    %c0_18 = arith.constant 0 : index
    %c0_19 = arith.constant 0 : index
    %33 = vector.load %arg10[%c0_17, %c0_18, %c0_19] : memref<1x1x192xf32, #tpu.memory_space<vmem>>, vector<1x1x192xf32>
    %34 = vector.shape_cast %33 : vector<1x1x192xf32> to vector<1x192xf32>
    %35 = vector.broadcast %34 : vector<1x192xf32> to vector<17x192xf32>
    %36 = arith.addf %32, %35 : vector<17x192xf32>
    %37 = vector.extract_strided_slice %36 {offsets = [0, 0], sizes = [17, 16], strides = [1, 1]} : vector<17x192xf32> to vector<17x16xf32>
    %38 = arith.truncf %37 : vector<17x16xf32> to vector<17x16xbf16>
    %39 = vector.extract_strided_slice %36 {offsets = [0, 64], sizes = [17, 16], strides = [1, 1]} : vector<17x192xf32> to vector<17x16xf32>
    %40 = arith.truncf %39 : vector<17x16xf32> to vector<17x16xbf16>
    %41 = vector.extract_strided_slice %36 {offsets = [0, 128], sizes = [17, 16], strides = [1, 1]} : vector<17x192xf32> to vector<17x16xf32>
    %42 = arith.truncf %41 : vector<17x16xf32> to vector<17x16xbf16>
    %cst_20 = arith.constant dense<0.000000e+00> : vector<17x17xf32>
    %43 = tpu.matmul %38, %40, %cst_20 {dimension_numbers = #tpu.dot_dimension_numbers<[1], [1], [0], [0], [0, 0, 1, 0], [], []>} : vector<17x16xbf16>, vector<17x16xbf16>, vector<17x17xf32> -> vector<17x17xf32>
    %cst_21 = arith.constant 2.500000e-01 : f32
    %44 = vector.broadcast %cst_21 : f32 to vector<17x17xf32>
    %45 = arith.mulf %43, %44 : vector<17x17xf32>
    %cst_22 = arith.constant dense<0xFF800000> : vector<17xf32>
    %46 = vector.multi_reduction <maximumf>, %45, %cst_22 [1] : vector<17x17xf32> to vector<17xf32>
    %47 = vector.shape_cast %46 : vector<17xf32> to vector<17x1xf32>
    %48 = vector.broadcast %47 : vector<17x1xf32> to vector<17x17xf32>
    %49 = arith.subf %45, %48 : vector<17x17xf32>
    %50 = math.exp %49 : vector<17x17xf32>
    %cst_23 = arith.constant dense<0.000000e+00> : vector<17xf32>
    %51 = vector.multi_reduction <add>, %50, %cst_23 [1] : vector<17x17xf32> to vector<17xf32>
    %52 = vector.shape_cast %51 : vector<17xf32> to vector<17x1xf32>
    %53 = tpu.reciprocal %52 {approx = true} : vector<17x1xf32> -> vector<17x1xf32>
    %54 = vector.broadcast %53 : vector<17x1xf32> to vector<17x17xf32>
    %55 = arith.mulf %50, %54 : vector<17x17xf32>
    %56 = arith.truncf %55 : vector<17x17xf32> to vector<17x17xbf16>
    %cst_24 = arith.constant dense<0.000000e+00> : vector<17x16xf32>
    %57 = tpu.matmul %56, %42, %cst_24 {dimension_numbers = #tpu.dot_dimension_numbers<[1], [0], [0], [1], [0, 0, 1, 1], [], []>} : vector<17x17xbf16>, vector<17x16xbf16>, vector<17x16xf32> -> vector<17x16xf32>
    %58 = vector.extract_strided_slice %36 {offsets = [0, 16], sizes = [17, 16], strides = [1, 1]} : vector<17x192xf32> to vector<17x16xf32>
    %59 = arith.truncf %58 : vector<17x16xf32> to vector<17x16xbf16>
    %60 = vector.extract_strided_slice %36 {offsets = [0, 80], sizes = [17, 16], strides = [1, 1]} : vector<17x192xf32> to vector<17x16xf32>
    %61 = arith.truncf %60 : vector<17x16xf32> to vector<17x16xbf16>
    %62 = vector.extract_strided_slice %36 {offsets = [0, 144], sizes = [17, 16], strides = [1, 1]} : vector<17x192xf32> to vector<17x16xf32>
    %63 = arith.truncf %62 : vector<17x16xf32> to vector<17x16xbf16>
    %cst_25 = arith.constant dense<0.000000e+00> : vector<17x17xf32>
    %64 = tpu.matmul %59, %61, %cst_25 {dimension_numbers = #tpu.dot_dimension_numbers<[1], [1], [0], [0], [0, 0, 1, 0], [], []>} : vector<17x16xbf16>, vector<17x16xbf16>, vector<17x17xf32> -> vector<17x17xf32>
    %cst_26 = arith.constant 2.500000e-01 : f32
    %65 = vector.broadcast %cst_26 : f32 to vector<17x17xf32>
    %66 = arith.mulf %64, %65 : vector<17x17xf32>
    %cst_27 = arith.constant dense<0xFF800000> : vector<17xf32>
    %67 = vector.multi_reduction <maximumf>, %66, %cst_27 [1] : vector<17x17xf32> to vector<17xf32>
    %68 = vector.shape_cast %67 : vector<17xf32> to vector<17x1xf32>
    %69 = vector.broadcast %68 : vector<17x1xf32> to vector<17x17xf32>
    %70 = arith.subf %66, %69 : vector<17x17xf32>
    %71 = math.exp %70 : vector<17x17xf32>
    %cst_28 = arith.constant dense<0.000000e+00> : vector<17xf32>
    %72 = vector.multi_reduction <add>, %71, %cst_28 [1] : vector<17x17xf32> to vector<17xf32>
    %73 = vector.shape_cast %72 : vector<17xf32> to vector<17x1xf32>
    %74 = tpu.reciprocal %73 {approx = true} : vector<17x1xf32> -> vector<17x1xf32>
    %75 = vector.broadcast %74 : vector<17x1xf32> to vector<17x17xf32>
    %76 = arith.mulf %71, %75 : vector<17x17xf32>
    %77 = arith.truncf %76 : vector<17x17xf32> to vector<17x17xbf16>
    %cst_29 = arith.constant dense<0.000000e+00> : vector<17x16xf32>
    %78 = tpu.matmul %77, %63, %cst_29 {dimension_numbers = #tpu.dot_dimension_numbers<[1], [0], [0], [1], [0, 0, 1, 1], [], []>} : vector<17x17xbf16>, vector<17x16xbf16>, vector<17x16xf32> -> vector<17x16xf32>
    %79 = vector.extract_strided_slice %36 {offsets = [0, 32], sizes = [17, 16], strides = [1, 1]} : vector<17x192xf32> to vector<17x16xf32>
    %80 = arith.truncf %79 : vector<17x16xf32> to vector<17x16xbf16>
    %81 = vector.extract_strided_slice %36 {offsets = [0, 96], sizes = [17, 16], strides = [1, 1]} : vector<17x192xf32> to vector<17x16xf32>
    %82 = arith.truncf %81 : vector<17x16xf32> to vector<17x16xbf16>
    %83 = vector.extract_strided_slice %36 {offsets = [0, 160], sizes = [17, 16], strides = [1, 1]} : vector<17x192xf32> to vector<17x16xf32>
    %84 = arith.truncf %83 : vector<17x16xf32> to vector<17x16xbf16>
    %cst_30 = arith.constant dense<0.000000e+00> : vector<17x17xf32>
    %85 = tpu.matmul %80, %82, %cst_30 {dimension_numbers = #tpu.dot_dimension_numbers<[1], [1], [0], [0], [0, 0, 1, 0], [], []>} : vector<17x16xbf16>, vector<17x16xbf16>, vector<17x17xf32> -> vector<17x17xf32>
    %cst_31 = arith.constant 2.500000e-01 : f32
    %86 = vector.broadcast %cst_31 : f32 to vector<17x17xf32>
    %87 = arith.mulf %85, %86 : vector<17x17xf32>
    %cst_32 = arith.constant dense<0xFF800000> : vector<17xf32>
    %88 = vector.multi_reduction <maximumf>, %87, %cst_32 [1] : vector<17x17xf32> to vector<17xf32>
    %89 = vector.shape_cast %88 : vector<17xf32> to vector<17x1xf32>
    %90 = vector.broadcast %89 : vector<17x1xf32> to vector<17x17xf32>
    %91 = arith.subf %87, %90 : vector<17x17xf32>
    %92 = math.exp %91 : vector<17x17xf32>
    %cst_33 = arith.constant dense<0.000000e+00> : vector<17xf32>
    %93 = vector.multi_reduction <add>, %92, %cst_33 [1] : vector<17x17xf32> to vector<17xf32>
    %94 = vector.shape_cast %93 : vector<17xf32> to vector<17x1xf32>
    %95 = tpu.reciprocal %94 {approx = true} : vector<17x1xf32> -> vector<17x1xf32>
    %96 = vector.broadcast %95 : vector<17x1xf32> to vector<17x17xf32>
    %97 = arith.mulf %92, %96 : vector<17x17xf32>
    %98 = arith.truncf %97 : vector<17x17xf32> to vector<17x17xbf16>
    %cst_34 = arith.constant dense<0.000000e+00> : vector<17x16xf32>
    %99 = tpu.matmul %98, %84, %cst_34 {dimension_numbers = #tpu.dot_dimension_numbers<[1], [0], [0], [1], [0, 0, 1, 1], [], []>} : vector<17x17xbf16>, vector<17x16xbf16>, vector<17x16xf32> -> vector<17x16xf32>
    %100 = vector.extract_strided_slice %36 {offsets = [0, 48], sizes = [17, 16], strides = [1, 1]} : vector<17x192xf32> to vector<17x16xf32>
    %101 = arith.truncf %100 : vector<17x16xf32> to vector<17x16xbf16>
    %102 = vector.extract_strided_slice %36 {offsets = [0, 112], sizes = [17, 16], strides = [1, 1]} : vector<17x192xf32> to vector<17x16xf32>
    %103 = arith.truncf %102 : vector<17x16xf32> to vector<17x16xbf16>
    %104 = vector.extract_strided_slice %36 {offsets = [0, 176], sizes = [17, 16], strides = [1, 1]} : vector<17x192xf32> to vector<17x16xf32>
    %105 = arith.truncf %104 : vector<17x16xf32> to vector<17x16xbf16>
    %cst_35 = arith.constant dense<0.000000e+00> : vector<17x17xf32>
    %106 = tpu.matmul %101, %103, %cst_35 {dimension_numbers = #tpu.dot_dimension_numbers<[1], [1], [0], [0], [0, 0, 1, 0], [], []>} : vector<17x16xbf16>, vector<17x16xbf16>, vector<17x17xf32> -> vector<17x17xf32>
    %cst_36 = arith.constant 2.500000e-01 : f32
    %107 = vector.broadcast %cst_36 : f32 to vector<17x17xf32>
    %108 = arith.mulf %106, %107 : vector<17x17xf32>
    %cst_37 = arith.constant dense<0xFF800000> : vector<17xf32>
    %109 = vector.multi_reduction <maximumf>, %108, %cst_37 [1] : vector<17x17xf32> to vector<17xf32>
    %110 = vector.shape_cast %109 : vector<17xf32> to vector<17x1xf32>
    %111 = vector.broadcast %110 : vector<17x1xf32> to vector<17x17xf32>
    %112 = arith.subf %108, %111 : vector<17x17xf32>
    %113 = math.exp %112 : vector<17x17xf32>
    %cst_38 = arith.constant dense<0.000000e+00> : vector<17xf32>
    %114 = vector.multi_reduction <add>, %113, %cst_38 [1] : vector<17x17xf32> to vector<17xf32>
    %115 = vector.shape_cast %114 : vector<17xf32> to vector<17x1xf32>
    %116 = tpu.reciprocal %115 {approx = true} : vector<17x1xf32> -> vector<17x1xf32>
    %117 = vector.broadcast %116 : vector<17x1xf32> to vector<17x17xf32>
    %118 = arith.mulf %113, %117 : vector<17x17xf32>
    %119 = arith.truncf %118 : vector<17x17xf32> to vector<17x17xbf16>
    %cst_39 = arith.constant dense<0.000000e+00> : vector<17x16xf32>
    %120 = tpu.matmul %119, %105, %cst_39 {dimension_numbers = #tpu.dot_dimension_numbers<[1], [0], [0], [1], [0, 0, 1, 1], [], []>} : vector<17x17xbf16>, vector<17x16xbf16>, vector<17x16xf32> -> vector<17x16xf32>
    %121 = tpu.concatenate %57, %78, %99, %120 in 1 : vector<17x16xf32>, vector<17x16xf32>, vector<17x16xf32>, vector<17x16xf32> -> vector<17x64xf32>
    %122 = arith.truncf %121 : vector<17x64xf32> to vector<17x64xbf16>
    %c0_40 = arith.constant 0 : index
    %c0_41 = arith.constant 0 : index
    %c0_42 = arith.constant 0 : index
    %123 = vector.load %arg11[%c0_40, %c0_41, %c0_42] : memref<1x64x64xbf16, #tpu.memory_space<vmem>>, vector<1x64x64xbf16>
    %124 = vector.shape_cast %123 : vector<1x64x64xbf16> to vector<64x64xbf16>
    %cst_43 = arith.constant dense<0.000000e+00> : vector<17x64xf32>
    %125 = tpu.matmul %122, %124, %cst_43 {dimension_numbers = #tpu.dot_dimension_numbers<[1], [0], [0], [1], [0, 0, 1, 1], [], []>} : vector<17x64xbf16>, vector<64x64xbf16>, vector<17x64xf32> -> vector<17x64xf32>
    %126 = arith.addf %4, %125 : vector<17x64xf32>
    %c0_44 = arith.constant 0 : index
    %c0_45 = arith.constant 0 : index
    %c0_46 = arith.constant 0 : index
    %127 = vector.load %arg12[%c0_44, %c0_45, %c0_46] : memref<1x1x64xf32, #tpu.memory_space<vmem>>, vector<1x1x64xf32>
    %128 = vector.shape_cast %127 : vector<1x1x64xf32> to vector<1x64xf32>
    %129 = vector.broadcast %128 : vector<1x64xf32> to vector<17x64xf32>
    %130 = arith.addf %126, %129 : vector<17x64xf32>
    %c0_47 = arith.constant 0 : index
    %c0_48 = arith.constant 0 : index
    %c0_49 = arith.constant 0 : index
    %131 = vector.load %arg13[%c0_47, %c0_48, %c0_49] : memref<1x1x64xf32, #tpu.memory_space<vmem>>, vector<1x1x64xf32>
    %132 = vector.shape_cast %131 : vector<1x1x64xf32> to vector<1x64xf32>
    %c0_50 = arith.constant 0 : index
    %c0_51 = arith.constant 0 : index
    %c0_52 = arith.constant 0 : index
    %133 = vector.load %arg14[%c0_50, %c0_51, %c0_52] : memref<1x1x64xf32, #tpu.memory_space<vmem>>, vector<1x1x64xf32>
    %134 = vector.shape_cast %133 : vector<1x1x64xf32> to vector<1x64xf32>
    %cst_53 = arith.constant dense<0.000000e+00> : vector<17xf32>
    %135 = vector.multi_reduction <add>, %130, %cst_53 [1] : vector<17x64xf32> to vector<17xf32>
    %136 = vector.shape_cast %135 : vector<17xf32> to vector<17x1xf32>
    %cst_54 = arith.constant 6.400000e+01 : f32
    %137 = vector.broadcast %cst_54 : f32 to vector<17x1xf32>
    %138 = arith.divf %136, %137 : vector<17x1xf32>
    %139 = vector.broadcast %138 : vector<17x1xf32> to vector<17x64xf32>
    %140 = arith.subf %130, %139 : vector<17x64xf32>
    %141 = arith.mulf %140, %140 : vector<17x64xf32>
    %cst_55 = arith.constant dense<0.000000e+00> : vector<17xf32>
    %142 = vector.multi_reduction <add>, %141, %cst_55 [1] : vector<17x64xf32> to vector<17xf32>
    %143 = vector.shape_cast %142 : vector<17xf32> to vector<17x1xf32>
    %cst_56 = arith.constant 6.400000e+01 : f32
    %144 = vector.broadcast %cst_56 : f32 to vector<17x1xf32>
    %145 = arith.divf %143, %144 : vector<17x1xf32>
    %cst_57 = arith.constant 9.99999997E-7 : f32
    %146 = vector.broadcast %cst_57 : f32 to vector<17x1xf32>
    %147 = arith.addf %145, %146 : vector<17x1xf32>
    %148 = math.rsqrt %147 : vector<17x1xf32>
    %149 = vector.broadcast %148 : vector<17x1xf32> to vector<17x64xf32>
    %150 = arith.mulf %140, %149 : vector<17x64xf32>
    %151 = vector.broadcast %132 : vector<1x64xf32> to vector<17x64xf32>
    %152 = arith.mulf %150, %151 : vector<17x64xf32>
    %153 = vector.broadcast %134 : vector<1x64xf32> to vector<17x64xf32>
    %154 = arith.addf %152, %153 : vector<17x64xf32>
    %155 = arith.truncf %154 : vector<17x64xf32> to vector<17x64xbf16>
    %c0_58 = arith.constant 0 : index
    %c0_59 = arith.constant 0 : index
    %c0_60 = arith.constant 0 : index
    %156 = vector.load %arg15[%c0_58, %c0_59, %c0_60] : memref<1x64x256xbf16, #tpu.memory_space<vmem>>, vector<1x64x256xbf16>
    %157 = vector.shape_cast %156 : vector<1x64x256xbf16> to vector<64x256xbf16>
    %cst_61 = arith.constant dense<0.000000e+00> : vector<17x256xf32>
    %158 = tpu.matmul %155, %157, %cst_61 {dimension_numbers = #tpu.dot_dimension_numbers<[1], [0], [0], [1], [0, 0, 1, 1], [], []>} : vector<17x64xbf16>, vector<64x256xbf16>, vector<17x256xf32> -> vector<17x256xf32>
    %c0_62 = arith.constant 0 : index
    %c0_63 = arith.constant 0 : index
    %c0_64 = arith.constant 0 : index
    %159 = vector.load %arg16[%c0_62, %c0_63, %c0_64] : memref<1x1x256xf32, #tpu.memory_space<vmem>>, vector<1x1x256xf32>
    %160 = vector.shape_cast %159 : vector<1x1x256xf32> to vector<1x256xf32>
    %161 = vector.broadcast %160 : vector<1x256xf32> to vector<17x256xf32>
    %162 = arith.addf %158, %161 : vector<17x256xf32>
    %cst_65 = arith.constant 5.000000e-01 : f32
    %163 = vector.broadcast %cst_65 : f32 to vector<17x256xf32>
    %164 = arith.mulf %163, %162 : vector<17x256xf32>
    %cst_66 = arith.constant 0.707106769 : f32
    %165 = vector.broadcast %cst_66 : f32 to vector<17x256xf32>
    %166 = arith.mulf %162, %165 : vector<17x256xf32>
    %167 = math.erf %166 : vector<17x256xf32>
    %cst_67 = arith.constant 1.000000e+00 : f32
    %168 = vector.broadcast %cst_67 : f32 to vector<17x256xf32>
    %169 = arith.addf %168, %167 : vector<17x256xf32>
    %170 = arith.mulf %164, %169 : vector<17x256xf32>
    %171 = arith.truncf %170 : vector<17x256xf32> to vector<17x256xbf16>
    %c0_68 = arith.constant 0 : index
    %c0_69 = arith.constant 0 : index
    %c0_70 = arith.constant 0 : index
    %172 = vector.load %arg17[%c0_68, %c0_69, %c0_70] : memref<1x256x64xbf16, #tpu.memory_space<vmem>>, vector<1x256x64xbf16>
    %173 = vector.shape_cast %172 : vector<1x256x64xbf16> to vector<256x64xbf16>
    %cst_71 = arith.constant dense<0.000000e+00> : vector<17x64xf32>
    %174 = tpu.matmul %171, %173, %cst_71 {dimension_numbers = #tpu.dot_dimension_numbers<[1], [0], [0], [1], [0, 0, 1, 1], [], []>} : vector<17x256xbf16>, vector<256x64xbf16>, vector<17x64xf32> -> vector<17x64xf32>
    %175 = arith.addf %130, %174 : vector<17x64xf32>
    %c0_72 = arith.constant 0 : index
    %c0_73 = arith.constant 0 : index
    %c0_74 = arith.constant 0 : index
    %176 = vector.load %arg18[%c0_72, %c0_73, %c0_74] : memref<1x1x64xf32, #tpu.memory_space<vmem>>, vector<1x1x64xf32>
    %177 = vector.shape_cast %176 : vector<1x1x64xf32> to vector<1x64xf32>
    %178 = vector.broadcast %177 : vector<1x64xf32> to vector<17x64xf32>
    %179 = arith.addf %175, %178 : vector<17x64xf32>
    %180 = vector.shape_cast %179 : vector<17x64xf32> to vector<1x17x64xf32>
    %c0_75 = arith.constant 0 : index
    %c0_76 = arith.constant 0 : index
    %c0_77 = arith.constant 0 : index
    %181 = vector.load %arg19[%c0_75, %c0_76, %c0_77] : memref<1x17x64xf32, #tpu.memory_space<vmem>>, vector<1x17x64xf32>
    tpu.vector_store %arg19[%c0_75, %c0_76, %c0_77], %180 {strides = array<i32>} : memref<1x17x64xf32, #tpu.memory_space<vmem>>, vector<1x17x64xf32>,
    return
  }
  func.func @transform_0(%arg0: i32, %arg1: i32) -> (i32, i32, i32) {
    %c0_i32 = arith.constant 0 : i32
    %c0_i32_0 = arith.constant 0 : i32
    %c0_i32_1 = arith.constant 0 : i32
    return %arg0, %c0_i32, %c0_i32_0 : i32, i32, i32
  }
  func.func @transform_1(%arg0: i32, %arg1: i32) -> (i32, i32) {
    %c0_i32 = arith.constant 0 : i32
    %c0_i32_0 = arith.constant 0 : i32
    %c0_i32_1 = arith.constant 0 : i32
    return %c0_i32, %c0_i32_0 : i32, i32
  }
  func.func @transform_2(%arg0: i32, %arg1: i32) -> (i32, i32) {
    %c0_i32 = arith.constant 0 : i32
    %c0_i32_0 = arith.constant 0 : i32
    %c0_i32_1 = arith.constant 0 : i32
    return %c0_i32, %c0_i32_0 : i32, i32
  }
  func.func @transform_3(%arg0: i32, %arg1: i32) -> (i32, i32) {
    %c0_i32 = arith.constant 0 : i32
    %c0_i32_0 = arith.constant 0 : i32
    %c0_i32_1 = arith.constant 0 : i32
    return %c0_i32, %c0_i32_0 : i32, i32
  }
  func.func @transform_4(%arg0: i32, %arg1: i32) -> (i32, i32) {
    %c0_i32 = arith.constant 0 : i32
    %c0_i32_0 = arith.constant 0 : i32
    %c0_i32_1 = arith.constant 0 : i32
    return %c0_i32, %c0_i32_0 : i32, i32
  }
  func.func @transform_5(%arg0: i32, %arg1: i32) -> (i32, i32, i32) {
    %c0_i32 = arith.constant 0 : i32
    %c0_i32_0 = arith.constant 0 : i32
    %c0_i32_1 = arith.constant 0 : i32
    return %arg1, %c0_i32, %c0_i32_0 : i32, i32, i32
  }
  func.func @transform_6(%arg0: i32, %arg1: i32) -> (i32, i32, i32) {
    %c0_i32 = arith.constant 0 : i32
    %c0_i32_0 = arith.constant 0 : i32
    %c0_i32_1 = arith.constant 0 : i32
    return %arg1, %c0_i32, %c0_i32_0 : i32, i32, i32
  }
  func.func @transform_7(%arg0: i32, %arg1: i32) -> (i32, i32, i32) {
    %c0_i32 = arith.constant 0 : i32
    %c0_i32_0 = arith.constant 0 : i32
    %c0_i32_1 = arith.constant 0 : i32
    return %arg1, %c0_i32, %c0_i32_0 : i32, i32, i32
  }
  func.func @transform_8(%arg0: i32, %arg1: i32) -> (i32, i32, i32) {
    %c0_i32 = arith.constant 0 : i32
    %c0_i32_0 = arith.constant 0 : i32
    %c0_i32_1 = arith.constant 0 : i32
    return %arg1, %c0_i32, %c0_i32_0 : i32, i32, i32
  }
  func.func @transform_9(%arg0: i32, %arg1: i32) -> (i32, i32, i32) {
    %c0_i32 = arith.constant 0 : i32
    %c0_i32_0 = arith.constant 0 : i32
    %c0_i32_1 = arith.constant 0 : i32
    return %arg1, %c0_i32, %c0_i32_0 : i32, i32, i32
  }
  func.func @transform_10(%arg0: i32, %arg1: i32) -> (i32, i32, i32) {
    %c0_i32 = arith.constant 0 : i32
    %c0_i32_0 = arith.constant 0 : i32
    %c0_i32_1 = arith.constant 0 : i32
    return %arg1, %c0_i32, %c0_i32_0 : i32, i32, i32
  }
  func.func @transform_11(%arg0: i32, %arg1: i32) -> (i32, i32, i32) {
    %c0_i32 = arith.constant 0 : i32
    %c0_i32_0 = arith.constant 0 : i32
    %c0_i32_1 = arith.constant 0 : i32
    return %arg1, %c0_i32, %c0_i32_0 : i32, i32, i32
  }
  func.func @transform_12(%arg0: i32, %arg1: i32) -> (i32, i32, i32) {
    %c0_i32 = arith.constant 0 : i32
    %c0_i32_0 = arith.constant 0 : i32
    %c0_i32_1 = arith.constant 0 : i32
    return %arg1, %c0_i32, %c0_i32_0 : i32, i32, i32
  }
  func.func @transform_13(%arg0: i32, %arg1: i32) -> (i32, i32, i32) {
    %c0_i32 = arith.constant 0 : i32
    %c0_i32_0 = arith.constant 0 : i32
    %c0_i32_1 = arith.constant 0 : i32
    return %arg1, %c0_i32, %c0_i32_0 : i32, i32, i32
  }
  func.func @transform_14(%arg0: i32, %arg1: i32) -> (i32, i32, i32) {
    %c0_i32 = arith.constant 0 : i32
    %c0_i32_0 = arith.constant 0 : i32
    %c0_i32_1 = arith.constant 0 : i32
    return %arg1, %c0_i32, %c0_i32_0 : i32, i32, i32
  }
  func.func @transform_15(%arg0: i32, %arg1: i32) -> (i32, i32, i32) {
    %c0_i32 = arith.constant 0 : i32
    %c0_i32_0 = arith.constant 0 : i32
    %c0_i32_1 = arith.constant 0 : i32
    return %arg1, %c0_i32, %c0_i32_0 : i32, i32, i32
  }
  func.func @transform_16(%arg0: i32, %arg1: i32) -> (i32, i32, i32) {
    %c0_i32 = arith.constant 0 : i32
    %c0_i32_0 = arith.constant 0 : i32
    %c0_i32_1 = arith.constant 0 : i32
    return %arg1, %c0_i32, %c0_i32_0 : i32, i32, i32
  }
  func.func @transform_17(%arg0: i32, %arg1: i32) -> (i32, i32, i32) {
    %c0_i32 = arith.constant 0 : i32
    %c0_i32_0 = arith.constant 0 : i32
    %c0_i32_1 = arith.constant 0 : i32
    return %arg0, %c0_i32, %c0_i32_0 : i32, i32, i32
  }
}

</mosaic_0001>

<llo_original>
// kernel: forward.3
$region0: #{forward.3}
  #allocation0 [shape = 'u32[]', space=smem, size = 0x4, offset = 0x4, fixed_abs, tag = 'smem constant byte address 0x4 - core index']
  #allocation1 [shape = 'u32[144,128]{1,0:T(1,128)}', space=vmem, size = 0x12000, scoped, tag = 'internal scratch']
  %s0 = inlined_call_operand.vmem [shape: f32[2,17,64], index: 0, kind: input, shape index: {}]
  %s1 = inlined_call_operand.vmem [shape: bf16[64,32], index: 1, kind: input, shape index: {}]
  %s2 = inlined_call_operand.vmem [shape: f32[1,32], index: 2, kind: input, shape index: {}]
  %s3 = inlined_call_operand.vmem [shape: f32[2,16,32], index: 3, kind: input, shape index: {}]
  %s4 = inlined_call_operand.hbm [shape: f32[2,16,32], index: 4, kind: output, shape index: {0}]
  %s5 = inlined_call_operand.vmem [shape: f32[2,1,16], index: 5, kind: output, shape index: {1}]
  %6 = xla_tuple %s4, %s5
  %s7 = sld [smem:[#allocation0]]
  $region57: #{forward.3} parent=0
    _
  %s9 = ssub.s32 1, %s7
  %s10 = scalar_select 0, %s9, %s7
  $region1: #{forward.3} parent=0
    #allocation2 [shape = 'u8[16384]{0}', space=vmem, size = 0x4000, scoped, tag = 'output window, operand 0']
    #allocation3 [shape = 's32[2]{0}', space=sflag, size = 0x8, scoped, tag = 'scoped memory for forward.3']
    %11 = vsyncpa [#allocation3], 0
    %s12 = scalar_lea.sflag [#allocation3], 1
    %13 = vsyncpa %s12, 0
    loop: start=0, step=1, limit=4
    $region2: #{forward.3} parent=1 // loop_pre_header
      _
    $region3: #{forward.3} parent=1 // loop_header
      %s15 = sphi 0, %s19
      %p16 = scmp.ge.s32.totalorder %s15, 4
      %s25 = sphi 0, %s27
      %s28 = sphi 0, %s25
      %s29 = sphi 0, %s28
      %s45 = sphi 0, %s29
      %s49 = sphi 0, %s49
      %s51 = sphi 0, %s49
      %s52 = sphi 0, %s51
      %s66 = sphi 0, %s52
      %s70 = sphi 0, %s70
      %s72 = sphi 0, %s70
      %s73 = sphi 0, %s72
      %s87 = sphi 0, %s73
      %s93 = sphi 0, %s95
      %s96 = sphi 0, %s93
      %s97 = sphi 0, %s96
      %s113 = sphi 0, %s97
      %s119 = sphi 0, %s121
      %s122 = sphi 0, %s119
      %s123 = sphi 0, %s122
      %s139 = sphi 0, %s123
      %s145 = sphi 0, %s147
      %s148 = sphi 0, %s145
      %s149 = sphi 0, %s148
      %s165 = sphi 0, %s149
    $region4: #{forward.3} parent=1 // loop_header_branch
      %18 = sbr.rel (%p16) target = $region8
    $region5: #{forward.3} parent=1 // loop_body
      %s20 = ssub.s32 %s15, 1
      %s21 = ssub.s32 %s15, 2
      %s22 = sadd.s32 %s15, 1
      %s23 = ssub.s32 %s15, %s22
      %p24 = scmp.eq.s32.totalorder %s23, 0
      %s26 = sadd.s32 %s25, 1
      %s27 = scalar_select %p24, %s25, %s26
      %p30 = pneg %p24
      %p31 = scmp.eq.s32.totalorder %s15, 1
      %p32 = por %p30, %p31
      %p33 = scmp.ne.s32.totalorder %s25, %s28
      %p34 = scmp.eq.s32.totalorder %s15, 0
      %p35 = por %p33, %p34
      %p36 = scmp.ne.s32.totalorder %s25, %s28
      %p37 = scmp.eq.s32.totalorder %s20, 1
      %p38 = por %p36, %p37
      %p39 = scmp.ne.s32.totalorder %s28, %s29
      %p40 = scmp.eq.s32.totalorder %s20, 0
      %p41 = por %p39, %p40
      %p42 = scmp.ne.s32.totalorder %s28, %s29
      %p43 = scmp.eq.s32.totalorder %s21, 1
      %p44 = por %p42, %p43
      %p46 = scmp.ne.s32.totalorder %s29, %s45
      %p47 = scmp.eq.s32.totalorder %s21, 0
      %p48 = por %p46, %p47
      %s50 = sadd.s32 %s49, 1
      %p53 = scmp.eq.s32.totalorder %s15, 1
      %p54 = scmp.ne.s32.totalorder %s49, %s51
      %p55 = scmp.eq.s32.totalorder %s15, 0
      %p56 = por %p54, %p55
      %p57 = scmp.ne.s32.totalorder %s49, %s51
      %p58 = scmp.eq.s32.totalorder %s20, 1
      %p59 = por %p57, %p58
      %p60 = scmp.ne.s32.totalorder %s51, %s52
      %p61 = scmp.eq.s32.totalorder %s20, 0
      %p62 = por %p60, %p61
      %p63 = scmp.ne.s32.totalorder %s51, %s52
      %p64 = scmp.eq.s32.totalorder %s21, 1
      %p65 = por %p63, %p64
      %p67 = scmp.ne.s32.totalorder %s52, %s66
      %p68 = scmp.eq.s32.totalorder %s21, 0
      %p69 = por %p67, %p68
      %s71 = sadd.s32 %s70, 1
      %p74 = scmp.eq.s32.totalorder %s15, 1
      %p75 = scmp.ne.s32.totalorder %s70, %s72
      %p76 = scmp.eq.s32.totalorder %s15, 0
      %p77 = por %p75, %p76
      %p78 = scmp.ne.s32.totalorder %s70, %s72
      %p79 = scmp.eq.s32.totalorder %s20, 1
      %p80 = por %p78, %p79
      %p81 = scmp.ne.s32.totalorder %s72, %s73
      %p82 = scmp.eq.s32.totalorder %s20, 0
      %p83 = por %p81, %p82
      %p84 = scmp.ne.s32.totalorder %s72, %s73
      %p85 = scmp.eq.s32.totalorder %s21, 1
      %p86 = por %p84, %p85
      %p88 = scmp.ne.s32.totalorder %s73, %s87
      %p89 = scmp.eq.s32.totalorder %s21, 0
      %p90 = por %p88, %p89
      %s91 = ssub.s32 %s15, %s22
      %p92 = scmp.eq.s32.totalorder %s91, 0
      %s94 = sadd.s32 %s93, 1
      %s95 = scalar_select %p92, %s93, %s94
      %p98 = pneg %p92
      %p99 = scmp.eq.s32.totalorder %s15, 1
      %p100 = por %p98, %p99
      %p101 = scmp.ne.s32.totalorder %s93, %s96
      %p102 = scmp.eq.s32.totalorder %s15, 0
      %p103 = por %p101, %p102
      %p104 = scmp.ne.s32.totalorder %s93, %s96
      %p105 = scmp.eq.s32.totalorder %s20, 1
      %p106 = por %p104, %p105
      %p107 = scmp.ne.s32.totalorder %s96, %s97
      %p108 = scmp.eq.s32.totalorder %s20, 0
      %p109 = por %p107, %p108
      %p110 = scmp.ne.s32.totalorder %s96, %s97
      %p111 = scmp.eq.s32.totalorder %s21, 1
      %p112 = por %p110, %p111
      %p114 = scmp.ne.s32.totalorder %s97, %s113
      %p115 = scmp.eq.s32.totalorder %s21, 0
      %p116 = por %p114, %p115
      %s117 = ssub.s32 %s15, %s22
      %p118 = scmp.eq.s32.totalorder %s117, 0
      %s120 = sadd.s32 %s119, 1
      %s121 = scalar_select %p118, %s119, %s120
      %p124 = pneg %p118
      %p125 = scmp.eq.s32.totalorder %s15, 1
      %p126 = por %p124, %p125
      %p127 = scmp.ne.s32.totalorder %s119, %s122
      %p128 = scmp.eq.s32.totalorder %s15, 0
      %p129 = por %p127, %p128
      %p130 = scmp.ne.s32.totalorder %s119, %s122
      %p131 = scmp.eq.s32.totalorder %s20, 1
      %p132 = por %p130, %p131
      %p133 = scmp.ne.s32.totalorder %s122, %s123
      %p134 = scmp.eq.s32.totalorder %s20, 0
      %p135 = por %p133, %p134
      %p136 = scmp.ne.s32.totalorder %s122, %s123
      %p137 = scmp.eq.s32.totalorder %s21, 1
      %p138 = por %p136, %p137
      %p140 = scmp.ne.s32.totalorder %s123, %s139
      %p141 = scmp.eq.s32.totalorder %s21, 0
      %p142 = por %p140, %p141
      %s143 = ssub.s32 %s15, %s22
      %p144 = scmp.eq.s32.totalorder %s143, 0
      %s146 = sadd.s32 %s145, 1
      %s147 = scalar_select %p144, %s145, %s146
      %p150 = pneg %p144
      %p151 = scmp.eq.s32.totalorder %s15, 1
      %p152 = por %p150, %p151
      %p153 = scmp.ne.s32.totalorder %s145, %s148
      %p154 = scmp.eq.s32.totalorder %s15, 0
      %p155 = por %p153, %p154
      %p156 = scmp.ne.s32.totalorder %s145, %s148
      %p157 = scmp.eq.s32.totalorder %s20, 1
      %p158 = por %p156, %p157
      %p159 = scmp.ne.s32.totalorder %s148, %s149
      %p160 = scmp.eq.s32.totalorder %s20, 0
      %p161 = por %p159, %p160
      %p162 = scmp.ne.s32.totalorder %s148, %s149
      %p163 = scmp.eq.s32.totalorder %s21, 1
      %p164 = por %p162, %p163
      %p166 = scmp.ne.s32.totalorder %s149, %s165
      %p167 = scmp.eq.s32.totalorder %s21, 0
      %p168 = por %p166, %p167
      %p169 = scmp.le.s32.totalorder 1, %s15
      %p170 = scmp.lt.s32.totalorder %s15, 3
      %p171 = pnand %p169, %p170
      %p172 = pneg %p171
      // Predicated region
      $region9: #{forward.3} parent=5 // pred_check
        _
      $region10: #{forward.3} parent=5 // pred_check_branch
        %174 = sbr.rel (%p171) target = $region12
      $region11: #{forward.3} parent=5 // pred_region
        %s175 = ssub.s32 %s15, 1
        // Predicated region
        $region13: #{forward.3} parent=11 // pred_check
          %p176 = pneg %p62
        $region14: #{forward.3} parent=11 // pred_check_branch
          %178 = sbr.rel (%p176) target = $region16
        $region15: #{forward.3} parent=11 // pred_region
          _
        $region16: #{forward.3} parent=11 // pred_fallthru
          _
        // Predicated region
        $region17: #{forward.3} parent=11 // pred_check
          %p179 = pneg %p83
        $region18: #{forward.3} parent=11 // pred_check_branch
          %181 = sbr.rel (%p179) target = $region20
        $region19: #{forward.3} parent=11 // pred_region
          _
        $region20: #{forward.3} parent=11 // pred_fallthru
          _
      $region12: #{forward.3} parent=5 // pred_fallthru
        _
      %p182 = scmp.lt.s32.totalorder %s15, 2
      // Predicated region
      $region21: #{forward.3} parent=5 // pred_check
        %p183 = pneg %p182
      $region22: #{forward.3} parent=5 // pred_check_branch
        %185 = sbr.rel (%p183) target = $region24
      $region23: #{forward.3} parent=5 // pred_region
        // Predicated region
        $region25: #{forward.3} parent=23 // pred_check
          %p186 = pneg %p35
        $region26: #{forward.3} parent=23 // pred_check_branch
          %188 = sbr.rel (%p186) target = $region28
        $region27: #{forward.3} parent=23 // pred_region
          %p189 = scmp.lt.s32.totalorder %s15, 1
          %s190 = scalar_select %p189, %s15, 1
          %s191 = smul.addr %s190, 3
          %s192 = smul.addr %s191, 8
          %s193 = scalar_lea.vmem %s0, %s192
        $region28: #{forward.3} parent=23 // pred_fallthru
          _
        // Predicated region
        $region29: #{forward.3} parent=23 // pred_check
          %p194 = pneg %p103
        $region30: #{forward.3} parent=23 // pred_check_branch
          %196 = sbr.rel (%p194) target = $region32
        $region31: #{forward.3} parent=23 // pred_region
          %p197 = scmp.lt.s32.totalorder %s15, 1
          %s198 = scalar_select %p197, %s15, 1
          %s199 = smul.addr %s198, 2
          %s200 = smul.addr %s199, 8
          %s201 = scalar_lea.vmem %s3, %s200
        $region32: #{forward.3} parent=23 // pred_fallthru
          _
      $region24: #{forward.3} parent=5 // pred_fallthru
        _
      %p202 = scmp.le.s32.totalorder 1, %s15
      %p203 = scmp.lt.s32.totalorder %s15, 3
      %p204 = pnand %p202, %p203
      %p205 = pneg %p204
      // Predicated region
      $region33: #{forward.3} parent=5 // pred_check
        _
      $region34: #{forward.3} parent=5 // pred_check_branch
        %207 = sbr.rel (%p204) target = $region36
      $region35: #{forward.3} parent=5 // pred_region
        %s208 = ssub.s32 %s15, 1
        %p209 = scmp.lt.s32.totalorder %s20, 1
        %s210 = scalar_select %p209, %s20, 1
        %s211 = smul.addr %s210, 3
        %s212 = smul.addr %s211, 8
        %s213 = scalar_lea.vmem %s0, %s212
        %p214 = pneg %p41
        %p215 = pneg %p38
        %p216 = pneg %p62
        %p217 = pneg %p59
        %p218 = pneg %p83
        %p219 = pneg %p80
        %p220 = scmp.lt.s32.totalorder %s20, 1
        %s221 = scalar_select %p220, %s20, 1
        %s222 = smul.addr %s221, 2
        %s223 = smul.addr %s222, 8
        %s224 = scalar_lea.vmem %s3, %s223
        %p225 = pneg %p109
        %p226 = pneg %p106
        %p227 = pneg %p135
        %p228 = pneg %p132
        %s229 = sand.u32 %s122, 1
        %s230 = scalar_lea.sflag [#allocation3], %s229
        %s231 = sand.u32 %s122, 1
        %s232 = smul.addr %s231, 16
        %s233 = scalar_lea.vmem [#allocation2], %s232
        %p234 = pneg %p161
        %p235 = pneg %p158
        %p236 = scmp.lt.s32.totalorder %s20, 1
        %s237 = scalar_select %p236, %s20, 1
        %s238 = scalar_lea.vmem %s5, %s237
        %p239 = scmp.lt.s32.totalorder %s20, 1
        %s240 = scalar_select %p239, %s20, 1
        %s241 = smul.addr %s240, 3
        %s242 = smul.addr %s241, 8
        %s243 = scalar_lea.vmem %s0, %s242
        %p244 = scmp.lt.s32.totalorder %s20, 1
        %s245 = scalar_select %p244, %s20, 1
        %s246 = smul.addr %s245, 2
        %s247 = smul.addr %s246, 8
        %s248 = scalar_lea.vmem %s3, %s247
        %p249 = scmp.lt.s32.totalorder %s20, 1
        %s250 = scalar_select %p249, %s20, 1
        %s251 = scalar_lea.vmem %s5, %s250
        %v253 = vld [vmem:[%s243] sm:$0xff]
        %v254 = vld [vmem:[%s243 + $0x8] sm:$0xff]
        %v255 = vld [vmem:[%s243 + $0x10] sm:$0x1]
        %v256 = vpack.c.bf16 %v254, %v253
        %v257 = vpack.c.bf16 %v255, %v255
        %v258 = vld [vmem:[%s1] sm:$0xf]
        %v259 = vld [vmem:[%s1 + $0x4] sm:$0xf]
        %v260 = vld [vmem:[%s1 + $0x8] sm:$0xf]
        %v261 = vld [vmem:[%s1 + $0xc] sm:$0xf]
        %v262 = vld [vmem:[%s1 + $0x10] sm:$0xf]
        %v263 = vld [vmem:[%s1 + $0x14] sm:$0xf]
        %v264 = vld [vmem:[%s1 + $0x18] sm:$0xf]
        %v265 = vld [vmem:[%s1 + $0x1c] sm:$0xf]
        %v266 = vld [vmem:[%s2] sm:$0x1]
        %v268 = vlaneseq
        %v269 = vshrl.u32 %v268, 7
        %v270 = vsub.s32 0, %v269
        %v271 = vrot.slane %v266, %v270
        %v281 = vunpack.c.l.b16 %v258
        %v282 = vunpack.c.l.b16 %v259
        %v283 = vunpack.c.l.b16 %v260
        %v284 = vunpack.c.l.b16 %v261
        %v285 = vunpack.c.l.b16 %v262
        %v286 = vunpack.c.l.b16 %v263
        %v287 = vunpack.c.l.b16 %v264
        %v288 = vunpack.c.l.b16 %v265
        %v289 = vpack.c.b16 %v282, %v281
        %v290 = vpack.c.b16 %v284, %v283
        %v291 = vpack.c.b16 %v286, %v285
        %v292 = vpack.c.b16 %v288, %v287
        %vm297 = vcmask 523264
        %v299 = vsel %vm297, %v256, 0
        %v302 = vsel %vm297, %v257, 0
        %304 = vmatprep.subr.bf16.mxu0 0
        %305 = vmatpush1.bf16.msra.mxu0 %v289
        %306 = vmatprep.subr.bf16.mxu0 0
        %307 = vmatpush1.bf16.msra.mxu0 %v290
        %308 = vmatprep.subr.bf16.mxu0 0
        %309 = vmatpush1.bf16.msra.mxu0 %v291
        %310 = vmatprep.subr.bf16.mxu0 0
        %311 = vmatpush1.bf16.msra.mxu0 %v292
        %312 = vmatprep.subr.bf16.mxu0 0
        %313 = vmatpush1.bf16.msra.mxu0 0
        %314 = vmatprep.subr.bf16.mxu0 0
        %315 = vmatpush1.bf16.msra.mxu0 0
        %316 = vmatprep.subr.bf16.mxu0 0
        %317 = vmatpush1.bf16.msra.mxu0 0
        %318 = vmatprep.subr.bf16.mxu0 0
        %319 = vmatpush1.bf16.msra.mxu0 0
        %320 = vmatprep.subr.bf16.mxu0 0
        %321 = vmatpush1.bf16.msra.mxu0 0
        %322 = vmatprep.subr.bf16.mxu0 0
        %323 = vmatpush1.bf16.msra.mxu0 0
        %324 = vmatprep.subr.bf16.mxu0 0
        %325 = vmatpush1.bf16.msra.mxu0 0
        %326 = vmatprep.subr.bf16.mxu0 0
        %327 = vmatpush1.bf16.msra.mxu0 0
        %328 = vmatprep.subr.bf16.mxu0 0
        %329 = vmatpush1.bf16.msra.mxu0 0
        %330 = vmatprep.subr.bf16.mxu0 0
        %331 = vmatpush1.bf16.msra.mxu0 0
        %332 = vmatprep.subr.bf16.mxu0 0
        %333 = vmatpush1.bf16.msra.mxu0 0
        %334 = vmatprep.subr.bf16.mxu0 0
        %335 = vmatpush1.bf16.msra.mxu0 0
        %336 = vmatprep.mubr.bf16.mxu0 0
        %337 = vmatmul.mubr.bf16.gmra.mrb[0].mxu0 %v299
        %v338 = vpop.f32.mrb[0].mxu0
        %v339 = vadd.f32 %v271, %v338
        %v340 = vpop.f32.mrb[0].mxu0
        %v341 = vpop.f32.mrb[0].mxu0
        %v342 = vadd.f32 %v271, %v341
        %v343 = vpop.f32.mrb[0].mxu0
        %344 = vmatprep.mubr.bf16.mxu0 0
        %345 = vmatmul.mubr.bf16.gmra.mrb[0].mxu0 %v302
        %v346 = vpop.f32.mrb[0].mxu0
        %v347 = vadd.f32 %v271, %v346
        %v348 = vpop.f32.mrb[0].mxu0
        %v349 = vpop.f32.mrb[0].mxu0
        %v350 = vpop.f32.mrb[0].mxu0
        %351 = vdwg.mxu0
        %vm352 = vcmask 261121
        %353 = vst.msk [vmem:[%s233 - $0x1] sm:$0xfe] %vm352, %v339
        %vm354 = vcmask 261120
        %355 = vst.msk [vmem:[%s233 + $0x7] sm:$0xff] %vm354, %v342
        %vm356 = vcmask 253952
        %357 = vst.msk [vmem:[%s233 + $0xf] sm:$0x1] %vm356, %v347
        %v358 = vld [vmem:[%s248] sm:$0xff]
        %v359 = vld [vmem:[%s248 + $0x8] sm:$0xff]
        %vm362 = vcmask 1040384
        %v363 = vrot.slane %v358, 7
        %v364 = vrot.slane %v359, 7
        %v365 = vsel %vm362, %v363, %v364
        %v369 = vsub.f32 %v339, %v363
        %v370 = vsub.f32 %v342, %v365
        %v371 = vsub.f32 %v347, %v364
        %v372 = vmul.f32 %v369, %v369
        %v373 = vmul.f32 %v370, %v370
        %v374 = vmul.f32 %v371, %v371
        %v375 = vsel %vm352, %v372, 0.0
        %376 = vadd.xlane.f32.xlu0 %v375
        %v377 = vpop.xlane.xlu0 %376
        %v378 = vsel %vm354, %v373, 0.0
        %379 = vadd.xlane.f32.xlu0 %v378
        %v380 = vpop.xlane.xlu0 %379
        %v381 = vsel %vm356, %v374, 0.0
        %382 = vadd.xlane.f32.xlu0 %v381
        %v383 = vpop.xlane.xlu0 %382
        %v384 = vrsqrt.pop %v377
        %v385 = vmul.f32 %v377, %v384
        %vm386 = vcmp.eq.f32.partialorder %v377, inf
        %v387 = vsel %vm386, %v377, %v385
        %vm388 = vcmp.eq.f32.partialorder %v377, 0.0
        %v389 = vand.u32 %v377, 2147483648
        %v390 = vsel %vm388, %v389, %v387
        %v391 = vrsqrt.pop %v380
        %v392 = vmul.f32 %v380, %v391
        %vm393 = vcmp.eq.f32.partialorder %v380, inf
        %v394 = vsel %vm393, %v380, %v392
        %vm395 = vcmp.eq.f32.partialorder %v380, 0.0
        %v396 = vand.u32 %v380, 2147483648
        %v397 = vsel %vm395, %v396, %v394
        %v398 = vrsqrt.pop %v383
        %v399 = vmul.f32 %v383, %v398
        %vm400 = vcmp.eq.f32.partialorder %v383, inf
        %v401 = vsel %vm400, %v383, %v399
        %vm402 = vcmp.eq.f32.partialorder %v383, 0.0
        %v403 = vand.u32 %v383, 2147483648
        %v404 = vsel %vm402, %v403, %v401
        %v408 = vlaneseq
        %v409 = vand.u32 %v408, 127
        %v410 = vadd.s32 %v409, 1
        %v411 = vlaneseq
        %v412 = vshrl.u32 %v411, 7
        %v413 = vsub.s32 %v410, %v412
        %v414 = vrot.slane %v390, %v413
        %v415 = vadd.s32 %v409, 4294967289
        %v416 = vlaneseq
        %v417 = vshrl.u32 %v416, 7
        %v418 = vsub.s32 %v415, %v417
        %v419 = vrot.slane %v397, %v418
        %vm420 = vcmask 121912
        %v421 = vsel %vm420, %v419, %v414
        %v422 = vadd.s32 %v409, 4294967281
        %v423 = vlaneseq
        %v424 = vshrl.u32 %v423, 7
        %v425 = vsub.s32 %v422, %v424
        %v426 = vrot.slane %v404, %v425
        %vm427 = vcmask 187512
        %v428 = vsel %vm427, %v426, %v421
        %vm430 = vcmask 123905
        %431 = vst.msk [vmem:[%s251 - $0x1] sm:$0x2] %vm430, %v428
        %s432 = sand.u32 %s122, 1
        %s433 = scalar_lea.sflag [#allocation3], %s432
        %s434 = sand.u32 %s122, 1
        %s435 = smul.addr %s434, 16
        %s436 = scalar_lea.vmem [#allocation2], %s435
        %p437 = scmp.lt.s32.totalorder %s20, 1
        %s438 = scalar_select %p437, %s20, 1
        %s439 = scalar_lea.vmem %s5, %s438
        // Predicated region
        $region37: #{forward.3} parent=35 // pred_check
          %p440 = pneg %p132
        $region38: #{forward.3} parent=35 // pred_check_branch
          %442 = sbr.rel (%p440) target = $region40
        $region39: #{forward.3} parent=35 // pred_region
          %s444 = ssub.s32 256, 256
          %445 = vsyncadd %s433, %s444
          %s446 = smul.addr %s20, 2
          %s447 = smul.addr %s446, 128
          %s448 = scalar_lea.hbm %s4, %s447
          %s449 = sshll.u32 %s436, 4
          %s450 = int_to_ptr.vmem [resolvable:$true] %s449
          %455 = dma.vmem_to_hbm [thread:$0]  %s450, 256, %s448, %s433, 128, 128, 8
        $region40: #{forward.3} parent=35 // pred_fallthru
          _
        // Predicated region
        $region41: #{forward.3} parent=35 // pred_check
          %p456 = pneg %p158
        $region42: #{forward.3} parent=35 // pred_check_branch
          %458 = sbr.rel (%p456) target = $region44
        $region43: #{forward.3} parent=35 // pred_region
          _
        $region44: #{forward.3} parent=35 // pred_fallthru
          _
      $region36: #{forward.3} parent=5 // pred_fallthru
        _
      %p459 = scmp.le.s32.totalorder 2, %s15
      // Predicated region
      $region45: #{forward.3} parent=5 // pred_check
        %p460 = pneg %p459
      $region46: #{forward.3} parent=5 // pred_check_branch
        %462 = sbr.rel (%p460) target = $region48
      $region47: #{forward.3} parent=5 // pred_region
        %s463 = ssub.s32 %s15, 2
        // Predicated region
        $region49: #{forward.3} parent=47 // pred_check
          %p464 = pneg %p138
        $region50: #{forward.3} parent=47 // pred_check_branch
          %466 = sbr.rel (%p464) target = $region52
        $region51: #{forward.3} parent=47 // pred_region
          %s467 = sand.u32 %s123, 1
          %s468 = scalar_lea.sflag [#allocation3], %s467
          %s469 = sand.u32 %s123, 1
          %s470 = smul.addr %s469, 16
          %s471 = scalar_lea.vmem [#allocation2], %s470
          %472 = dma.done %s468, 256
        $region52: #{forward.3} parent=47 // pred_fallthru
          _
        // Predicated region
        $region53: #{forward.3} parent=47 // pred_check
          %p473 = pneg %p164
        $region54: #{forward.3} parent=47 // pred_check_branch
          %475 = sbr.rel (%p473) target = $region56
        $region55: #{forward.3} parent=47 // pred_region
          %p476 = scmp.lt.s32.totalorder %s21, 1
          %s477 = scalar_select %p476, %s21, 1
          %s478 = scalar_lea.vmem %s5, %s477
        $region56: #{forward.3} parent=47 // pred_fallthru
          _
      $region48: #{forward.3} parent=5 // pred_fallthru
        _
    $region6: #{forward.3} parent=1 // loop_footer
      %s19 = sadd.s32 1, %s15
    $region7: #{forward.3} parent=1 // loop_footer_branch
      %14 = sbr.rel target = $region3
    $region8: #{forward.3} parent=1 // loop_exit
      _
    %479 = vsyncpa [#allocation3], 1
    %s480 = scalar_lea.sflag [#allocation3], 1
    %481 = vsyncpa %s480, 1

// kernel: forward.2
$region0: #{forward.2}
  #allocation0 [shape = 'u32[]', space=smem, size = 0x4, offset = 0x4, fixed_abs, tag = 'smem constant byte address 0x4 - core index']
  #allocation1 [shape = 'u32[144,128]{1,0:T(1,128)}', space=vmem, size = 0x12000, scoped, tag = 'internal scratch']
  %s0 = inlined_call_operand.vmem [shape: f32[2,16,32], index: 0, kind: input, shape index: {}]
  %s1 = inlined_call_operand.vmem [shape: bf16[32,64], index: 1, kind: input, shape index: {}]
  %s2 = inlined_call_operand.vmem [shape: f32[1,64], index: 2, kind: input, shape index: {}]
  %s3 = inlined_call_operand.vmem [shape: f32[1,64], index: 3, kind: input, shape index: {}]
  %s4 = inlined_call_operand.vmem [shape: f32[16,64], index: 4, kind: input, shape index: {}]
  %s5 = inlined_call_operand.vmem [shape: f32[2,1,64], index: 5, kind: input, shape index: {}]
  %s6 = inlined_call_operand.vmem [shape: f32[2,1,64], index: 6, kind: input, shape index: {}]
  %s7 = inlined_call_operand.vmem [shape: bf16[2,64,192], index: 7, kind: input, shape index: {}]
  %s8 = inlined_call_operand.vmem [shape: f32[2,1,192], index: 8, kind: input, shape index: {}]
  %s9 = inlined_call_operand.vmem [shape: bf16[2,64,64], index: 9, kind: input, shape index: {}]
  %s10 = inlined_call_operand.vmem [shape: f32[2,1,64], index: 10, kind: input, shape index: {}]
  %s11 = inlined_call_operand.vmem [shape: f32[2,1,64], index: 11, kind: input, shape index: {}]
  %s12 = inlined_call_operand.vmem [shape: f32[2,1,64], index: 12, kind: input, shape index: {}]
  %s13 = inlined_call_operand.vmem [shape: bf16[2,64,256], index: 13, kind: input, shape index: {}]
  %s14 = inlined_call_operand.vmem [shape: f32[2,1,256], index: 14, kind: input, shape index: {}]
  %s15 = inlined_call_operand.vmem [shape: bf16[2,256,64], index: 15, kind: input, shape index: {}]
  %s16 = inlined_call_operand.vmem [shape: f32[2,1,64], index: 16, kind: input, shape index: {}]
  %s17 = inlined_call_operand.vmem [shape: f32[2,17,64], index: 17, kind: output, shape index: {}]
  %s18 = sld [smem:[#allocation0]]
  $region105: #{forward.2} parent=0
    _
  %s20 = ssub.s32 1, %s18
  %s21 = scalar_select 0, %s20, %s18
  loop: start=0, step=1, limit=6
  $region2: #{forward.2} parent=0 // loop_pre_header
    _
  $region3: #{forward.2} parent=0 // loop_header
    %s23 = sphi 0, %s27
    %p24 = scmp.ge.s32.totalorder %s23, 6
    %s30 = sphi 0, %s42
    %s31 = sphi 0, %s38
    %s32 = sphi 0, %s30
    %s33 = sphi 0, %s31
    %s34 = sphi 0, %s32
    %s35 = sphi 0, %s33
    %s45 = sphi 0, %s47
    %s48 = sphi 0, %s45
    %s49 = sphi 0, %s48
    %s65 = sphi 0, %s49
    %s69 = sphi 0, %s69
    %s71 = sphi 0, %s69
    %s72 = sphi 0, %s71
    %s86 = sphi 0, %s72
    %s90 = sphi 0, %s90
    %s92 = sphi 0, %s90
    %s93 = sphi 0, %s92
    %s107 = sphi 0, %s93
    %s111 = sphi 0, %s111
    %s113 = sphi 0, %s111
    %s114 = sphi 0, %s113
    %s128 = sphi 0, %s114
    %s132 = sphi 0, %s132
    %s134 = sphi 0, %s132
    %s135 = sphi 0, %s134
    %s149 = sphi 0, %s135
    %s155 = sphi 0, %s157
    %s158 = sphi 0, %s155
    %s159 = sphi 0, %s158
    %s175 = sphi 0, %s159
    %s181 = sphi 0, %s183
    %s184 = sphi 0, %s181
    %s185 = sphi 0, %s184
    %s201 = sphi 0, %s185
    %s207 = sphi 0, %s209
    %s210 = sphi 0, %s207
    %s211 = sphi 0, %s210
    %s227 = sphi 0, %s211
    %s233 = sphi 0, %s235
    %s236 = sphi 0, %s233
    %s237 = sphi 0, %s236
    %s253 = sphi 0, %s237
    %s259 = sphi 0, %s261
    %s262 = sphi 0, %s259
    %s263 = sphi 0, %s262
    %s279 = sphi 0, %s263
    %s285 = sphi 0, %s287
    %s288 = sphi 0, %s285
    %s289 = sphi 0, %s288
    %s305 = sphi 0, %s289
    %s311 = sphi 0, %s313
    %s314 = sphi 0, %s311
    %s315 = sphi 0, %s314
    %s331 = sphi 0, %s315
    %s337 = sphi 0, %s339
    %s340 = sphi 0, %s337
    %s341 = sphi 0, %s340
    %s357 = sphi 0, %s341
    %s363 = sphi 0, %s365
    %s366 = sphi 0, %s363
    %s367 = sphi 0, %s366
    %s383 = sphi 0, %s367
    %s389 = sphi 0, %s391
    %s392 = sphi 0, %s389
    %s393 = sphi 0, %s392
    %s409 = sphi 0, %s393
    %s415 = sphi 0, %s417
    %s418 = sphi 0, %s415
    %s419 = sphi 0, %s418
    %s435 = sphi 0, %s419
    %s441 = sphi 0, %s443
    %s444 = sphi 0, %s441
    %s445 = sphi 0, %s444
    %s461 = sphi 0, %s445
    %s467 = sphi 0, %s469
    %s470 = sphi 0, %s467
    %s471 = sphi 0, %s470
    %s487 = sphi 0, %s471
  $region4: #{forward.2} parent=0 // loop_header_branch
    %26 = sbr.rel (%p24) target = $region8
  $region5: #{forward.2} parent=0 // loop_body
    %s28 = ssub.s32 %s23, 1
    %s29 = ssub.s32 %s23, 2
    %s36 = sadd.s32 1, %s31
    %p37 = scmp.ge.s32.totalorder %s36, 2
    %s38 = scalar_select %p37, 0, %s36
    %s39 = sadd.s32 1, %s30
    %s40 = scalar_select %p37, %s39, %s30
    %p41 = scmp.ge.s32.totalorder %s40, 2
    %s42 = scalar_select %p41, 0, %s40
    %s43 = ssub.s32 %s30, %s42
    %p44 = scmp.eq.s32.totalorder %s43, 0
    %s46 = sadd.s32 %s45, 1
    %s47 = scalar_select %p44, %s45, %s46
    %p50 = pneg %p44
    %p51 = scmp.eq.s32.totalorder %s23, 3
    %p52 = por %p50, %p51
    %p53 = scmp.ne.s32.totalorder %s45, %s48
    %p54 = scmp.eq.s32.totalorder %s23, 0
    %p55 = por %p53, %p54
    %p56 = scmp.ne.s32.totalorder %s45, %s48
    %p57 = scmp.eq.s32.totalorder %s28, 3
    %p58 = por %p56, %p57
    %p59 = scmp.ne.s32.totalorder %s48, %s49
    %p60 = scmp.eq.s32.totalorder %s28, 0
    %p61 = por %p59, %p60
    %p62 = scmp.ne.s32.totalorder %s48, %s49
    %p63 = scmp.eq.s32.totalorder %s29, 3
    %p64 = por %p62, %p63
    %p66 = scmp.ne.s32.totalorder %s49, %s65
    %p67 = scmp.eq.s32.totalorder %s29, 0
    %p68 = por %p66, %p67
    %s70 = sadd.s32 %s69, 1
    %p73 = scmp.eq.s32.totalorder %s23, 3
    %p74 = scmp.ne.s32.totalorder %s69, %s71
    %p75 = scmp.eq.s32.totalorder %s23, 0
    %p76 = por %p74, %p75
    %p77 = scmp.ne.s32.totalorder %s69, %s71
    %p78 = scmp.eq.s32.totalorder %s28, 3
    %p79 = por %p77, %p78
    %p80 = scmp.ne.s32.totalorder %s71, %s72
    %p81 = scmp.eq.s32.totalorder %s28, 0
    %p82 = por %p80, %p81
    %p83 = scmp.ne.s32.totalorder %s71, %s72
    %p84 = scmp.eq.s32.totalorder %s29, 3
    %p85 = por %p83, %p84
    %p87 = scmp.ne.s32.totalorder %s72, %s86
    %p88 = scmp.eq.s32.totalorder %s29, 0
    %p89 = por %p87, %p88
    %s91 = sadd.s32 %s90, 1
    %p94 = scmp.eq.s32.totalorder %s23, 3
    %p95 = scmp.ne.s32.totalorder %s90, %s92
    %p96 = scmp.eq.s32.totalorder %s23, 0
    %p97 = por %p95, %p96
    %p98 = scmp.ne.s32.totalorder %s90, %s92
    %p99 = scmp.eq.s32.totalorder %s28, 3
    %p100 = por %p98, %p99
    %p101 = scmp.ne.s32.totalorder %s92, %s93
    %p102 = scmp.eq.s32.totalorder %s28, 0
    %p103 = por %p101, %p102
    %p104 = scmp.ne.s32.totalorder %s92, %s93
    %p105 = scmp.eq.s32.totalorder %s29, 3
    %p106 = por %p104, %p105
    %p108 = scmp.ne.s32.totalorder %s93, %s107
    %p109 = scmp.eq.s32.totalorder %s29, 0
    %p110 = por %p108, %p109
    %s112 = sadd.s32 %s111, 1
    %p115 = scmp.eq.s32.totalorder %s23, 3
    %p116 = scmp.ne.s32.totalorder %s111, %s113
    %p117 = scmp.eq.s32.totalorder %s23, 0
    %p118 = por %p116, %p117
    %p119 = scmp.ne.s32.totalorder %s111, %s113
    %p120 = scmp.eq.s32.totalorder %s28, 3
    %p121 = por %p119, %p120
    %p122 = scmp.ne.s32.totalorder %s113, %s114
    %p123 = scmp.eq.s32.totalorder %s28, 0
    %p124 = por %p122, %p123
    %p125 = scmp.ne.s32.totalorder %s113, %s114
    %p126 = scmp.eq.s32.totalorder %s29, 3
    %p127 = por %p125, %p126
    %p129 = scmp.ne.s32.totalorder %s114, %s128
    %p130 = scmp.eq.s32.totalorder %s29, 0
    %p131 = por %p129, %p130
    %s133 = sadd.s32 %s132, 1
    %p136 = scmp.eq.s32.totalorder %s23, 3
    %p137 = scmp.ne.s32.totalorder %s132, %s134
    %p138 = scmp.eq.s32.totalorder %s23, 0
    %p139 = por %p137, %p138
    %p140 = scmp.ne.s32.totalorder %s132, %s134
    %p141 = scmp.eq.s32.totalorder %s28, 3
    %p142 = por %p140, %p141
    %p143 = scmp.ne.s32.totalorder %s134, %s135
    %p144 = scmp.eq.s32.totalorder %s28, 0
    %p145 = por %p143, %p144
    %p146 = scmp.ne.s32.totalorder %s134, %s135
    %p147 = scmp.eq.s32.totalorder %s29, 3
    %p148 = por %p146, %p147
    %p150 = scmp.ne.s32.totalorder %s135, %s149
    %p151 = scmp.eq.s32.totalorder %s29, 0
    %p152 = por %p150, %p151
    %s153 = ssub.s32 %s31, %s38
    %p154 = scmp.eq.s32.totalorder %s153, 0
    %s156 = sadd.s32 %s155, 1
    %s157 = scalar_select %p154, %s155, %s156
    %p160 = pneg %p154
    %p161 = scmp.eq.s32.totalorder %s23, 3
    %p162 = por %p160, %p161
    %p163 = scmp.ne.s32.totalorder %s155, %s158
    %p164 = scmp.eq.s32.totalorder %s23, 0
    %p165 = por %p163, %p164
    %p166 = scmp.ne.s32.totalorder %s155, %s158
    %p167 = scmp.eq.s32.totalorder %s28, 3
    %p168 = por %p166, %p167
    %p169 = scmp.ne.s32.totalorder %s158, %s159
    %p170 = scmp.eq.s32.totalorder %s28, 0
    %p171 = por %p169, %p170
    %p172 = scmp.ne.s32.totalorder %s158, %s159
    %p173 = scmp.eq.s32.totalorder %s29, 3
    %p174 = por %p172, %p173
    %p176 = scmp.ne.s32.totalorder %s159, %s175
    %p177 = scmp.eq.s32.totalorder %s29, 0
    %p178 = por %p176, %p177
    %s179 = ssub.s32 %s31, %s38
    %p180 = scmp.eq.s32.totalorder %s179, 0
    %s182 = sadd.s32 %s181, 1
    %s183 = scalar_select %p180, %s181, %s182
    %p186 = pneg %p180
    %p187 = scmp.eq.s32.totalorder %s23, 3
    %p188 = por %p186, %p187
    %p189 = scmp.ne.s32.totalorder %s181, %s184
    %p190 = scmp.eq.s32.totalorder %s23, 0
    %p191 = por %p189, %p190
    %p192 = scmp.ne.s32.totalorder %s181, %s184
    %p193 = scmp.eq.s32.totalorder %s28, 3
    %p194 = por %p192, %p193
    %p195 = scmp.ne.s32.totalorder %s184, %s185
    %p196 = scmp.eq.s32.totalorder %s28, 0
    %p197 = por %p195, %p196
    %p198 = scmp.ne.s32.totalorder %s184, %s185
    %p199 = scmp.eq.s32.totalorder %s29, 3
    %p200 = por %p198, %p199
    %p202 = scmp.ne.s32.totalorder %s185, %s201
    %p203 = scmp.eq.s32.totalorder %s29, 0
    %p204 = por %p202, %p203
    %s205 = ssub.s32 %s31, %s38
    %p206 = scmp.eq.s32.totalorder %s205, 0
    %s208 = sadd.s32 %s207, 1
    %s209 = scalar_select %p206, %s207, %s208
    %p212 = pneg %p206
    %p213 = scmp.eq.s32.totalorder %s23, 3
    %p214 = por %p212, %p213
    %p215 = scmp.ne.s32.totalorder %s207, %s210
    %p216 = scmp.eq.s32.totalorder %s23, 0
    %p217 = por %p215, %p216
    %p218 = scmp.ne.s32.totalorder %s207, %s210
    %p219 = scmp.eq.s32.totalorder %s28, 3
    %p220 = por %p218, %p219
    %p221 = scmp.ne.s32.totalorder %s210, %s211
    %p222 = scmp.eq.s32.totalorder %s28, 0
    %p223 = por %p221, %p222
    %p224 = scmp.ne.s32.totalorder %s210, %s211
    %p225 = scmp.eq.s32.totalorder %s29, 3
    %p226 = por %p224, %p225
    %p228 = scmp.ne.s32.totalorder %s211, %s227
    %p229 = scmp.eq.s32.totalorder %s29, 0
    %p230 = por %p228, %p229
    %s231 = ssub.s32 %s31, %s38
    %p232 = scmp.eq.s32.totalorder %s231, 0
    %s234 = sadd.s32 %s233, 1
    %s235 = scalar_select %p232, %s233, %s234
    %p238 = pneg %p232
    %p239 = scmp.eq.s32.totalorder %s23, 3
    %p240 = por %p238, %p239
    %p241 = scmp.ne.s32.totalorder %s233, %s236
    %p242 = scmp.eq.s32.totalorder %s23, 0
    %p243 = por %p241, %p242
    %p244 = scmp.ne.s32.totalorder %s233, %s236
    %p245 = scmp.eq.s32.totalorder %s28, 3
    %p246 = por %p244, %p245
    %p247 = scmp.ne.s32.totalorder %s236, %s237
    %p248 = scmp.eq.s32.totalorder %s28, 0
    %p249 = por %p247, %p248
    %p250 = scmp.ne.s32.totalorder %s236, %s237
    %p251 = scmp.eq.s32.totalorder %s29, 3
    %p252 = por %p250, %p251
    %p254 = scmp.ne.s32.totalorder %s237, %s253
    %p255 = scmp.eq.s32.totalorder %s29, 0
    %p256 = por %p254, %p255
    %s257 = ssub.s32 %s31, %s38
    %p258 = scmp.eq.s32.totalorder %s257, 0
    %s260 = sadd.s32 %s259, 1
    %s261 = scalar_select %p258, %s259, %s260
    %p264 = pneg %p258
    %p265 = scmp.eq.s32.totalorder %s23, 3
    %p266 = por %p264, %p265
    %p267 = scmp.ne.s32.totalorder %s259, %s262
    %p268 = scmp.eq.s32.totalorder %s23, 0
    %p269 = por %p267, %p268
    %p270 = scmp.ne.s32.totalorder %s259, %s262
    %p271 = scmp.eq.s32.totalorder %s28, 3
    %p272 = por %p270, %p271
    %p273 = scmp.ne.s32.totalorder %s262, %s263
    %p274 = scmp.eq.s32.totalorder %s28, 0
    %p275 = por %p273, %p274
    %p276 = scmp.ne.s32.totalorder %s262, %s263
    %p277 = scmp.eq.s32.totalorder %s29, 3
    %p278 = por %p276, %p277
    %p280 = scmp.ne.s32.totalorder %s263, %s279
    %p281 = scmp.eq.s32.totalorder %s29, 0
    %p282 = por %p280, %p281
    %s283 = ssub.s32 %s31, %s38
    %p284 = scmp.eq.s32.totalorder %s283, 0
    %s286 = sadd.s32 %s285, 1
    %s287 = scalar_select %p284, %s285, %s286
    %p290 = pneg %p284
    %p291 = scmp.eq.s32.totalorder %s23, 3
    %p292 = por %p290, %p291
    %p293 = scmp.ne.s32.totalorder %s285, %s288
    %p294 = scmp.eq.s32.totalorder %s23, 0
    %p295 = por %p293, %p294
    %p296 = scmp.ne.s32.totalorder %s285, %s288
    %p297 = scmp.eq.s32.totalorder %s28, 3
    %p298 = por %p296, %p297
    %p299 = scmp.ne.s32.totalorder %s288, %s289
    %p300 = scmp.eq.s32.totalorder %s28, 0
    %p301 = por %p299, %p300
    %p302 = scmp.ne.s32.totalorder %s288, %s289
    %p303 = scmp.eq.s32.totalorder %s29, 3
    %p304 = por %p302, %p303
    %p306 = scmp.ne.s32.totalorder %s289, %s305
    %p307 = scmp.eq.s32.totalorder %s29, 0
    %p308 = por %p306, %p307
    %s309 = ssub.s32 %s31, %s38
    %p310 = scmp.eq.s32.totalorder %s309, 0
    %s312 = sadd.s32 %s311, 1
    %s313 = scalar_select %p310, %s311, %s312
    %p316 = pneg %p310
    %p317 = scmp.eq.s32.totalorder %s23, 3
    %p318 = por %p316, %p317
    %p319 = scmp.ne.s32.totalorder %s311, %s314
    %p320 = scmp.eq.s32.totalorder %s23, 0
    %p321 = por %p319, %p320
    %p322 = scmp.ne.s32.totalorder %s311, %s314
    %p323 = scmp.eq.s32.totalorder %s28, 3
    %p324 = por %p322, %p323
    %p325 = scmp.ne.s32.totalorder %s314, %s315
    %p326 = scmp.eq.s32.totalorder %s28, 0
    %p327 = por %p325, %p326
    %p328 = scmp.ne.s32.totalorder %s314, %s315
    %p329 = scmp.eq.s32.totalorder %s29, 3
    %p330 = por %p328, %p329
    %p332 = scmp.ne.s32.totalorder %s315, %s331
    %p333 = scmp.eq.s32.totalorder %s29, 0
    %p334 = por %p332, %p333
    %s335 = ssub.s32 %s31, %s38
    %p336 = scmp.eq.s32.totalorder %s335, 0
    %s338 = sadd.s32 %s337, 1
    %s339 = scalar_select %p336, %s337, %s338
    %p342 = pneg %p336
    %p343 = scmp.eq.s32.totalorder %s23, 3
    %p344 = por %p342, %p343
    %p345 = scmp.ne.s32.totalorder %s337, %s340
    %p346 = scmp.eq.s32.totalorder %s23, 0
    %p347 = por %p345, %p346
    %p348 = scmp.ne.s32.totalorder %s337, %s340
    %p349 = scmp.eq.s32.totalorder %s28, 3
    %p350 = por %p348, %p349
    %p351 = scmp.ne.s32.totalorder %s340, %s341
    %p352 = scmp.eq.s32.totalorder %s28, 0
    %p353 = por %p351, %p352
    %p354 = scmp.ne.s32.totalorder %s340, %s341
    %p355 = scmp.eq.s32.totalorder %s29, 3
    %p356 = por %p354, %p355
    %p358 = scmp.ne.s32.totalorder %s341, %s357
    %p359 = scmp.eq.s32.totalorder %s29, 0
    %p360 = por %p358, %p359
    %s361 = ssub.s32 %s31, %s38
    %p362 = scmp.eq.s32.totalorder %s361, 0
    %s364 = sadd.s32 %s363, 1
    %s365 = scalar_select %p362, %s363, %s364
    %p368 = pneg %p362
    %p369 = scmp.eq.s32.totalorder %s23, 3
    %p370 = por %p368, %p369
    %p371 = scmp.ne.s32.totalorder %s363, %s366
    %p372 = scmp.eq.s32.totalorder %s23, 0
    %p373 = por %p371, %p372
    %p374 = scmp.ne.s32.totalorder %s363, %s366
    %p375 = scmp.eq.s32.totalorder %s28, 3
    %p376 = por %p374, %p375
    %p377 = scmp.ne.s32.totalorder %s366, %s367
    %p378 = scmp.eq.s32.totalorder %s28, 0
    %p379 = por %p377, %p378
    %p380 = scmp.ne.s32.totalorder %s366, %s367
    %p381 = scmp.eq.s32.totalorder %s29, 3
    %p382 = por %p380, %p381
    %p384 = scmp.ne.s32.totalorder %s367, %s383
    %p385 = scmp.eq.s32.totalorder %s29, 0
    %p386 = por %p384, %p385
    %s387 = ssub.s32 %s31, %s38
    %p388 = scmp.eq.s32.totalorder %s387, 0
    %s390 = sadd.s32 %s389, 1
    %s391 = scalar_select %p388, %s389, %s390
    %p394 = pneg %p388
    %p395 = scmp.eq.s32.totalorder %s23, 3
    %p396 = por %p394, %p395
    %p397 = scmp.ne.s32.totalorder %s389, %s392
    %p398 = scmp.eq.s32.totalorder %s23, 0
    %p399 = por %p397, %p398
    %p400 = scmp.ne.s32.totalorder %s389, %s392
    %p401 = scmp.eq.s32.totalorder %s28, 3
    %p402 = por %p400, %p401
    %p403 = scmp.ne.s32.totalorder %s392, %s393
    %p404 = scmp.eq.s32.totalorder %s28, 0
    %p405 = por %p403, %p404
    %p406 = scmp.ne.s32.totalorder %s392, %s393
    %p407 = scmp.eq.s32.totalorder %s29, 3
    %p408 = por %p406, %p407
    %p410 = scmp.ne.s32.totalorder %s393, %s409
    %p411 = scmp.eq.s32.totalorder %s29, 0
    %p412 = por %p410, %p411
    %s413 = ssub.s32 %s31, %s38
    %p414 = scmp.eq.s32.totalorder %s413, 0
    %s416 = sadd.s32 %s415, 1
    %s417 = scalar_select %p414, %s415, %s416
    %p420 = pneg %p414
    %p421 = scmp.eq.s32.totalorder %s23, 3
    %p422 = por %p420, %p421
    %p423 = scmp.ne.s32.totalorder %s415, %s418
    %p424 = scmp.eq.s32.totalorder %s23, 0
    %p425 = por %p423, %p424
    %p426 = scmp.ne.s32.totalorder %s415, %s418
    %p427 = scmp.eq.s32.totalorder %s28, 3
    %p428 = por %p426, %p427
    %p429 = scmp.ne.s32.totalorder %s418, %s419
    %p430 = scmp.eq.s32.totalorder %s28, 0
    %p431 = por %p429, %p430
    %p432 = scmp.ne.s32.totalorder %s418, %s419
    %p433 = scmp.eq.s32.totalorder %s29, 3
    %p434 = por %p432, %p433
    %p436 = scmp.ne.s32.totalorder %s419, %s435
    %p437 = scmp.eq.s32.totalorder %s29, 0
    %p438 = por %p436, %p437
    %s439 = ssub.s32 %s31, %s38
    %p440 = scmp.eq.s32.totalorder %s439, 0
    %s442 = sadd.s32 %s441, 1
    %s443 = scalar_select %p440, %s441, %s442
    %p446 = pneg %p440
    %p447 = scmp.eq.s32.totalorder %s23, 3
    %p448 = por %p446, %p447
    %p449 = scmp.ne.s32.totalorder %s441, %s444
    %p450 = scmp.eq.s32.totalorder %s23, 0
    %p451 = por %p449, %p450
    %p452 = scmp.ne.s32.totalorder %s441, %s444
    %p453 = scmp.eq.s32.totalorder %s28, 3
    %p454 = por %p452, %p453
    %p455 = scmp.ne.s32.totalorder %s444, %s445
    %p456 = scmp.eq.s32.totalorder %s28, 0
    %p457 = por %p455, %p456
    %p458 = scmp.ne.s32.totalorder %s444, %s445
    %p459 = scmp.eq.s32.totalorder %s29, 3
    %p460 = por %p458, %p459
    %p462 = scmp.ne.s32.totalorder %s445, %s461
    %p463 = scmp.eq.s32.totalorder %s29, 0
    %p464 = por %p462, %p463
    %s465 = ssub.s32 %s30, %s42
    %p466 = scmp.eq.s32.totalorder %s465, 0
    %s468 = sadd.s32 %s467, 1
    %s469 = scalar_select %p466, %s467, %s468
    %p472 = pneg %p466
    %p473 = scmp.eq.s32.totalorder %s23, 3
    %p474 = por %p472, %p473
    %p475 = scmp.ne.s32.totalorder %s467, %s470
    %p476 = scmp.eq.s32.totalorder %s23, 0
    %p477 = por %p475, %p476
    %p478 = scmp.ne.s32.totalorder %s467, %s470
    %p479 = scmp.eq.s32.totalorder %s28, 3
    %p480 = por %p478, %p479
    %p481 = scmp.ne.s32.totalorder %s470, %s471
    %p482 = scmp.eq.s32.totalorder %s28, 0
    %p483 = por %p481, %p482
    %p484 = scmp.ne.s32.totalorder %s470, %s471
    %p485 = scmp.eq.s32.totalorder %s29, 3
    %p486 = por %p484, %p485
    %p488 = scmp.ne.s32.totalorder %s471, %s487
    %p489 = scmp.eq.s32.totalorder %s29, 0
    %p490 = por %p488, %p489
    %p491 = scmp.le.s32.totalorder 1, %s23
    %p492 = scmp.lt.s32.totalorder %s23, 5
    %p493 = pnand %p491, %p492
    %p494 = pneg %p493
    // Predicated region
    $region9: #{forward.2} parent=5 // pred_check
      _
    $region10: #{forward.2} parent=5 // pred_check_branch
      %496 = sbr.rel (%p493) target = $region12
    $region11: #{forward.2} parent=5 // pred_region
      %s497 = ssub.s32 %s23, 1
      // Predicated region
      $region13: #{forward.2} parent=11 // pred_check
        %p498 = pneg %p82
      $region14: #{forward.2} parent=11 // pred_check_branch
        %500 = sbr.rel (%p498) target = $region16
      $region15: #{forward.2} parent=11 // pred_region
        _
      $region16: #{forward.2} parent=11 // pred_fallthru
        _
      // Predicated region
      $region17: #{forward.2} parent=11 // pred_check
        %p501 = pneg %p103
      $region18: #{forward.2} parent=11 // pred_check_branch
        %503 = sbr.rel (%p501) target = $region20
      $region19: #{forward.2} parent=11 // pred_region
        _
      $region20: #{forward.2} parent=11 // pred_fallthru
        _
      // Predicated region
      $region21: #{forward.2} parent=11 // pred_check
        %p504 = pneg %p124
      $region22: #{forward.2} parent=11 // pred_check_branch
        %506 = sbr.rel (%p504) target = $region24
      $region23: #{forward.2} parent=11 // pred_region
        _
      $region24: #{forward.2} parent=11 // pred_fallthru
        _
      // Predicated region
      $region25: #{forward.2} parent=11 // pred_check
        %p507 = pneg %p145
      $region26: #{forward.2} parent=11 // pred_check_branch
        %509 = sbr.rel (%p507) target = $region28
      $region27: #{forward.2} parent=11 // pred_region
        _
      $region28: #{forward.2} parent=11 // pred_fallthru
        _
    $region12: #{forward.2} parent=5 // pred_fallthru
      _
    %p510 = scmp.lt.s32.totalorder %s23, 4
    // Predicated region
    $region29: #{forward.2} parent=5 // pred_check
      %p511 = pneg %p510
    $region30: #{forward.2} parent=5 // pred_check_branch
      %513 = sbr.rel (%p511) target = $region32
    $region31: #{forward.2} parent=5 // pred_region
      // Predicated region
      $region33: #{forward.2} parent=31 // pred_check
        %p514 = pneg %p55
      $region34: #{forward.2} parent=31 // pred_check_branch
        %516 = sbr.rel (%p514) target = $region36
      $region35: #{forward.2} parent=31 // pred_region
        %p517 = scmp.lt.s32.totalorder %s30, 1
        %s518 = scalar_select %p517, %s30, 1
        %s519 = smul.addr %s518, 2
        %s520 = smul.addr %s519, 8
        %s521 = scalar_lea.vmem %s0, %s520
      $region36: #{forward.2} parent=31 // pred_fallthru
        _
      // Predicated region
      $region37: #{forward.2} parent=31 // pred_check
        %p522 = pneg %p165
      $region38: #{forward.2} parent=31 // pred_check_branch
        %524 = sbr.rel (%p522) target = $region40
      $region39: #{forward.2} parent=31 // pred_region
        %p525 = scmp.lt.s32.totalorder %s31, 1
        %s526 = scalar_select %p525, %s31, 1
        %s527 = scalar_lea.vmem %s5, %s526
      $region40: #{forward.2} parent=31 // pred_fallthru
        _
      // Predicated region
      $region41: #{forward.2} parent=31 // pred_check
        %p528 = pneg %p191
      $region42: #{forward.2} parent=31 // pred_check_branch
        %530 = sbr.rel (%p528) target = $region44
      $region43: #{forward.2} parent=31 // pred_region
        %p531 = scmp.lt.s32.totalorder %s31, 1
        %s532 = scalar_select %p531, %s31, 1
        %s533 = scalar_lea.vmem %s6, %s532
      $region44: #{forward.2} parent=31 // pred_fallthru
        _
      // Predicated region
      $region45: #{forward.2} parent=31 // pred_check
        %p534 = pneg %p217
      $region46: #{forward.2} parent=31 // pred_check_branch
        %536 = sbr.rel (%p534) target = $region48
      $region47: #{forward.2} parent=31 // pred_region
        %p537 = scmp.lt.s32.totalorder %s31, 1
        %s538 = scalar_select %p537, %s31, 1
        %s539 = smul.addr %s538, 16
        %s540 = smul.addr %s539, 4
        %s541 = scalar_lea.vmem %s7, %s540
      $region48: #{forward.2} parent=31 // pred_fallthru
        _
      // Predicated region
      $region49: #{forward.2} parent=31 // pred_check
        %p542 = pneg %p243
      $region50: #{forward.2} parent=31 // pred_check_branch
        %544 = sbr.rel (%p542) target = $region52
      $region51: #{forward.2} parent=31 // pred_region
        %p545 = scmp.lt.s32.totalorder %s31, 1
        %s546 = scalar_select %p545, %s31, 1
        %s547 = smul.addr %s546, 2
        %s548 = scalar_lea.vmem %s8, %s547
      $region52: #{forward.2} parent=31 // pred_fallthru
        _
      // Predicated region
      $region53: #{forward.2} parent=31 // pred_check
        %p549 = pneg %p269
      $region54: #{forward.2} parent=31 // pred_check_branch
        %551 = sbr.rel (%p549) target = $region56
      $region55: #{forward.2} parent=31 // pred_region
        %p552 = scmp.lt.s32.totalorder %s31, 1
        %s553 = scalar_select %p552, %s31, 1
        %s554 = smul.addr %s553, 8
        %s555 = smul.addr %s554, 4
        %s556 = scalar_lea.vmem %s9, %s555
      $region56: #{forward.2} parent=31 // pred_fallthru
        _
      // Predicated region
      $region57: #{forward.2} parent=31 // pred_check
        %p557 = pneg %p295
      $region58: #{forward.2} parent=31 // pred_check_branch
        %559 = sbr.rel (%p557) target = $region60
      $region59: #{forward.2} parent=31 // pred_region
        %p560 = scmp.lt.s32.totalorder %s31, 1
        %s561 = scalar_select %p560, %s31, 1
        %s562 = scalar_lea.vmem %s10, %s561
      $region60: #{forward.2} parent=31 // pred_fallthru
        _
      // Predicated region
      $region61: #{forward.2} parent=31 // pred_check
        %p563 = pneg %p321
      $region62: #{forward.2} parent=31 // pred_check_branch
        %565 = sbr.rel (%p563) target = $region64
      $region63: #{forward.2} parent=31 // pred_region
        %p566 = scmp.lt.s32.totalorder %s31, 1
        %s567 = scalar_select %p566, %s31, 1
        %s568 = scalar_lea.vmem %s11, %s567
      $region64: #{forward.2} parent=31 // pred_fallthru
        _
      // Predicated region
      $region65: #{forward.2} parent=31 // pred_check
        %p569 = pneg %p347
      $region66: #{forward.2} parent=31 // pred_check_branch
        %571 = sbr.rel (%p569) target = $region68
      $region67: #{forward.2} parent=31 // pred_region
        %p572 = scmp.lt.s32.totalorder %s31, 1
        %s573 = scalar_select %p572, %s31, 1
        %s574 = scalar_lea.vmem %s12, %s573
      $region68: #{forward.2} parent=31 // pred_fallthru
        _
      // Predicated region
      $region69: #{forward.2} parent=31 // pred_check
        %p575 = pneg %p373
      $region70: #{forward.2} parent=31 // pred_check_branch
        %577 = sbr.rel (%p575) target = $region72
      $region71: #{forward.2} parent=31 // pred_region
        %p578 = scmp.lt.s32.totalorder %s31, 1
        %s579 = scalar_select %p578, %s31, 1
        %s580 = smul.addr %s579, 16
        %s581 = smul.addr %s580, 4
        %s582 = scalar_lea.vmem %s13, %s581
      $region72: #{forward.2} parent=31 // pred_fallthru
        _
      // Predicated region
      $region73: #{forward.2} parent=31 // pred_check
        %p583 = pneg %p399
      $region74: #{forward.2} parent=31 // pred_check_branch
        %585 = sbr.rel (%p583) target = $region76
      $region75: #{forward.2} parent=31 // pred_region
        %p586 = scmp.lt.s32.totalorder %s31, 1
        %s587 = scalar_select %p586, %s31, 1
        %s588 = smul.addr %s587, 2
        %s589 = scalar_lea.vmem %s14, %s588
      $region76: #{forward.2} parent=31 // pred_fallthru
        _
      // Predicated region
      $region77: #{forward.2} parent=31 // pred_check
        %p590 = pneg %p425
      $region78: #{forward.2} parent=31 // pred_check_branch
        %592 = sbr.rel (%p590) target = $region80
      $region79: #{forward.2} parent=31 // pred_region
        %p593 = scmp.lt.s32.totalorder %s31, 1
        %s594 = scalar_select %p593, %s31, 1
        %s595 = smul.addr %s594, 32
        %s596 = smul.addr %s595, 4
        %s597 = scalar_lea.vmem %s15, %s596
      $region80: #{forward.2} parent=31 // pred_fallthru
        _
      // Predicated region
      $region81: #{forward.2} parent=31 // pred_check
        %p598 = pneg %p451
      $region82: #{forward.2} parent=31 // pred_check_branch
        %600 = sbr.rel (%p598) target = $region84
      $region83: #{forward.2} parent=31 // pred_region
        %p601 = scmp.lt.s32.totalorder %s31, 1
        %s602 = scalar_select %p601, %s31, 1
        %s603 = scalar_lea.vmem %s16, %s602
      $region84: #{forward.2} parent=31 // pred_fallthru
        _
    $region32: #{forward.2} parent=5 // pred_fallthru
      _
    %p604 = scmp.le.s32.totalorder 1, %s23
    %p605 = scmp.lt.s32.totalorder %s23, 5
    %p606 = pnand %p604, %p605
    %p607 = pneg %p606
    // Predicated region
    $region85: #{forward.2} parent=5 // pred_check
      _
    $region86: #{forward.2} parent=5 // pred_check_branch
      %609 = sbr.rel (%p606) target = $region88
    $region87: #{forward.2} parent=5 // pred_region
      %s610 = ssub.s32 %s23, 1
      %p611 = scmp.lt.s32.totalorder %s32, 1
      %s612 = scalar_select %p611, %s32, 1
      %s613 = smul.addr %s612, 2
      %s614 = smul.addr %s613, 8
      %s615 = scalar_lea.vmem %s0, %s614
      %p616 = pneg %p61
      %p617 = pneg %p58
      %p618 = pneg %p82
      %p619 = pneg %p79
      %p620 = pneg %p103
      %p621 = pneg %p100
      %p622 = pneg %p124
      %p623 = pneg %p121
      %p624 = pneg %p145
      %p625 = pneg %p142
      %p626 = scmp.lt.s32.totalorder %s33, 1
      %s627 = scalar_select %p626, %s33, 1
      %s628 = scalar_lea.vmem %s5, %s627
      %p629 = pneg %p171
      %p630 = pneg %p168
      %p631 = scmp.lt.s32.totalorder %s33, 1
      %s632 = scalar_select %p631, %s33, 1
      %s633 = scalar_lea.vmem %s6, %s632
      %p634 = pneg %p197
      %p635 = pneg %p194
      %p636 = scmp.lt.s32.totalorder %s33, 1
      %s637 = scalar_select %p636, %s33, 1
      %s638 = smul.addr %s637, 16
      %s639 = smul.addr %s638, 4
      %s640 = scalar_lea.vmem %s7, %s639
      %p641 = pneg %p223
      %p642 = pneg %p220
      %p643 = scmp.lt.s32.totalorder %s33, 1
      %s644 = scalar_select %p643, %s33, 1
      %s645 = smul.addr %s644, 2
      %s646 = scalar_lea.vmem %s8, %s645
      %p647 = pneg %p249
      %p648 = pneg %p246
      %p649 = scmp.lt.s32.totalorder %s33, 1
      %s650 = scalar_select %p649, %s33, 1
      %s651 = smul.addr %s650, 8
      %s652 = smul.addr %s651, 4
      %s653 = scalar_lea.vmem %s9, %s652
      %p654 = pneg %p275
      %p655 = pneg %p272
      %p656 = scmp.lt.s32.totalorder %s33, 1
      %s657 = scalar_select %p656, %s33, 1
      %s658 = scalar_lea.vmem %s10, %s657
      %p659 = pneg %p301
      %p660 = pneg %p298
      %p661 = scmp.lt.s32.totalorder %s33, 1
      %s662 = scalar_select %p661, %s33, 1
      %s663 = scalar_lea.vmem %s11, %s662
      %p664 = pneg %p327
      %p665 = pneg %p324
      %p666 = scmp.lt.s32.totalorder %s33, 1
      %s667 = scalar_select %p666, %s33, 1
      %s668 = scalar_lea.vmem %s12, %s667
      %p669 = pneg %p353
      %p670 = pneg %p350
      %p671 = scmp.lt.s32.totalorder %s33, 1
      %s672 = scalar_select %p671, %s33, 1
      %s673 = smul.addr %s672, 16
      %s674 = smul.addr %s673, 4
      %s675 = scalar_lea.vmem %s13, %s674
      %p676 = pneg %p379
      %p677 = pneg %p376
      %p678 = scmp.lt.s32.totalorder %s33, 1
      %s679 = scalar_select %p678, %s33, 1
      %s680 = smul.addr %s679, 2
      %s681 = scalar_lea.vmem %s14, %s680
      %p682 = pneg %p405
      %p683 = pneg %p402
      %p684 = scmp.lt.s32.totalorder %s33, 1
      %s685 = scalar_select %p684, %s33, 1
      %s686 = smul.addr %s685, 32
      %s687 = smul.addr %s686, 4
      %s688 = scalar_lea.vmem %s15, %s687
      %p689 = pneg %p431
      %p690 = pneg %p428
      %p691 = scmp.lt.s32.totalorder %s33, 1
      %s692 = scalar_select %p691, %s33, 1
      %s693 = scalar_lea.vmem %s16, %s692
      %p694 = pneg %p457
      %p695 = pneg %p454
      %p696 = pneg %p483
      %p697 = pneg %p480
      %p698 = scmp.lt.s32.totalorder %s32, 1
      %s699 = scalar_select %p698, %s32, 1
      %s700 = smul.addr %s699, 3
      %s701 = smul.addr %s700, 8
      %s702 = scalar_lea.vmem %s17, %s701
      %p703 = scmp.lt.s32.totalorder %s32, 1
      %s704 = scalar_select %p703, %s32, 1
      %s705 = smul.addr %s704, 2
      %s706 = smul.addr %s705, 8
      %s707 = scalar_lea.vmem %s0, %s706
      %p708 = scmp.lt.s32.totalorder %s33, 1
      %s709 = scalar_select %p708, %s33, 1
      %s710 = scalar_lea.vmem %s5, %s709
      %p711 = scmp.lt.s32.totalorder %s33, 1
      %s712 = scalar_select %p711, %s33, 1
      %s713 = scalar_lea.vmem %s6, %s712
      %p714 = scmp.lt.s32.totalorder %s33, 1
      %s715 = scalar_select %p714, %s33, 1
      %s716 = smul.addr %s715, 16
      %s717 = smul.addr %s716, 4
      %s718 = scalar_lea.vmem %s7, %s717
      %p719 = scmp.lt.s32.totalorder %s33, 1
      %s720 = scalar_select %p719, %s33, 1
      %s721 = smul.addr %s720, 2
      %s722 = scalar_lea.vmem %s8, %s721
      %p723 = scmp.lt.s32.totalorder %s33, 1
      %s724 = scalar_select %p723, %s33, 1
      %s725 = smul.addr %s724, 8
      %s726 = smul.addr %s725, 4
      %s727 = scalar_lea.vmem %s9, %s726
      %p728 = scmp.lt.s32.totalorder %s33, 1
      %s729 = scalar_select %p728, %s33, 1
      %s730 = scalar_lea.vmem %s10, %s729
      %p731 = scmp.lt.s32.totalorder %s33, 1
      %s732 = scalar_select %p731, %s33, 1
      %s733 = scalar_lea.vmem %s11, %s732
      %p734 = scmp.lt.s32.totalorder %s33, 1
      %s735 = scalar_select %p734, %s33, 1
      %s736 = scalar_lea.vmem %s12, %s735
      %p737 = scmp.lt.s32.totalorder %s33, 1
      %s738 = scalar_select %p737, %s33, 1
      %s739 = smul.addr %s738, 16
      %s740 = smul.addr %s739, 4
      %s741 = scalar_lea.vmem %s13, %s740
      %p742 = scmp.lt.s32.totalorder %s33, 1
      %s743 = scalar_select %p742, %s33, 1
      %s744 = smul.addr %s743, 2
      %s745 = scalar_lea.vmem %s14, %s744
      %p746 = scmp.lt.s32.totalorder %s33, 1
      %s747 = scalar_select %p746, %s33, 1
      %s748 = smul.addr %s747, 32
      %s749 = smul.addr %s748, 4
      %s750 = scalar_lea.vmem %s15, %s749
      %p751 = scmp.lt.s32.totalorder %s33, 1
      %s752 = scalar_select %p751, %s33, 1
      %s753 = scalar_lea.vmem %s16, %s752
      %p754 = scmp.lt.s32.totalorder %s32, 1
      %s755 = scalar_select %p754, %s32, 1
      %s756 = smul.addr %s755, 3
      %s757 = smul.addr %s756, 8
      %s758 = scalar_lea.vmem %s17, %s757
      %p760 = scmp.eq.s32.totalorder %s33, 0
      // Predicated region
      $region89: #{forward.2} parent=87 // pred_check
        %p761 = pneg %p760
      $region90: #{forward.2} parent=87 // pred_check_branch
        %763 = sbr.rel (%p761) target = $region92
      $region91: #{forward.2} parent=87 // pred_region
        %v764 = vld [vmem:[%s707] sm:$0xff]
        %v765 = vld [vmem:[%s707 + $0x8] sm:$0xff]
        %v766 = vpack.c.bf16 %v765, %v764
        %v767 = vld [vmem:[%s1] sm:$0xf]
        %v768 = vld [vmem:[%s1 + $0x4] sm:$0xf]
        %v769 = vld [vmem:[%s1 + $0x8] sm:$0xf]
        %v770 = vld [vmem:[%s1 + $0xc] sm:$0xf]
        %v771 = vld [vmem:[%s2] sm:$0x1]
        %v773 = vlaneseq
        %v774 = vshrl.u32 %v773, 7
        %v775 = vsub.s32 0, %v774
        %v776 = vrot.slane %v771, %v775
        %v782 = vunpack.c.l.b16 %v767
        %v783 = vunpack.c.l.b16 %v768
        %v784 = vunpack.c.l.b16 %v769
        %v785 = vunpack.c.l.b16 %v770
        %v786 = vpack.c.b16 %v783, %v782
        %v787 = vpack.c.b16 %v785, %v784
        %vm790 = vcmask 261120
        %v792 = vsel %vm790, %v766, 0
        %794 = vmatprep.subr.bf16.mxu0 0
        %795 = vmatpush1.bf16.msra.mxu0 %v786
        %796 = vmatprep.subr.bf16.mxu0 0
        %797 = vmatpush1.bf16.msra.mxu0 %v787
        %798 = vmatprep.subr.bf16.mxu0 0
        %799 = vmatpush1.bf16.msra.mxu0 0
        %800 = vmatprep.subr.bf16.mxu0 0
        %801 = vmatpush1.bf16.msra.mxu0 0
        %802 = vmatprep.subr.bf16.mxu0 0
        %803 = vmatpush1.bf16.msra.mxu0 0
        %804 = vmatprep.subr.bf16.mxu0 0
        %805 = vmatpush1.bf16.msra.mxu0 0
        %806 = vmatprep.subr.bf16.mxu0 0
        %807 = vmatpush1.bf16.msra.mxu0 0
        %808 = vmatprep.subr.bf16.mxu0 0
        %809 = vmatpush1.bf16.msra.mxu0 0
        %810 = vmatprep.subr.bf16.mxu0 0
        %811 = vmatpush1.bf16.msra.mxu0 0
        %812 = vmatprep.subr.bf16.mxu0 0
        %813 = vmatpush1.bf16.msra.mxu0 0
        %814 = vmatprep.subr.bf16.mxu0 0
        %815 = vmatpush1.bf16.msra.mxu0 0
        %816 = vmatprep.subr.bf16.mxu0 0
        %817 = vmatpush1.bf16.msra.mxu0 0
        %818 = vmatprep.subr.bf16.mxu0 0
        %819 = vmatpush1.bf16.msra.mxu0 0
        %820 = vmatprep.subr.bf16.mxu0 0
        %821 = vmatpush1.bf16.msra.mxu0 0
        %822 = vmatprep.subr.bf16.mxu0 0
        %823 = vmatpush1.bf16.msra.mxu0 0
        %824 = vmatprep.subr.bf16.mxu0 0
        %825 = vmatpush1.bf16.msra.mxu0 0
        %826 = vmatprep.mubr.bf16.mxu0 0
        %827 = vmatmul.mubr.bf16.gmra.mrb[0].mxu0 %v792
        %v828 = vpop.f32.mrb[0].mxu0
        %v829 = vadd.f32 %v776, %v828
        %v830 = vpop.f32.mrb[0].mxu0
        %v831 = vpop.f32.mrb[0].mxu0
        %v832 = vadd.f32 %v776, %v831
        %v833 = vpop.f32.mrb[0].mxu0
        %834 = vdwg.mxu0
        %v835 = vld [vmem:[%s4] sm:$0xff]
        %v836 = vld [vmem:[%s4 + $0x8] sm:$0xff]
        %v837 = vadd.f32 %v829, %v835
        %v838 = vadd.f32 %v832, %v836
        %v839 = vld [vmem:[%s3] sm:$0x1]
        %vm840 = vcmask 516096
        %841 = vst.msk [vmem:[%s758] sm:$0x1] %vm840, %v839
        %vm842 = vcmask 523264
        %843 = vst.msk [vmem:[%s758 + $0x1] sm:$0xff] %vm842, %v837
        %844 = vst.msk [vmem:[%s758 + $0x9] sm:$0xff] %vm842, %v838
      $region92: #{forward.2} parent=87 // pred_fallthru
        _
      %v845 = vld [vmem:[%s758] sm:$0xff]
      %v846 = vld [vmem:[%s758 + $0x8] sm:$0xff]
      %v847 = vld [vmem:[%s758 + $0x10] sm:$0x1]
      %v848 = vld [vmem:[%s710] sm:$0x1]
      %v849 = vld [vmem:[%s713] sm:$0x1]
      %vm850 = vcmask 523264
      %v851 = vsel %vm850, %v845, 0.0
      %852 = vadd.xlane.f32.xlu0 %v851
      %v853 = vpop.xlane.xlu0 %852
      %v854 = vsel %vm850, %v846, 0.0
      %855 = vadd.xlane.f32.xlu0 %v854
      %v856 = vpop.xlane.xlu0 %855
      %vm857 = vcmask 516096
      %v858 = vsel %vm857, %v847, 0.0
      %859 = vadd.xlane.f32.xlu0 %v858
      %v860 = vpop.xlane.xlu0 %859
      %v861 = vrcp.pop 64.0
      %v862 = vmul.f32 %v853, %v861
      %v863 = vmul.f32 %v856, %v861
      %v864 = vmul.f32 %v860, %v861
      %v865 = vsub.f32 %v845, %v862
      %v866 = vsub.f32 %v846, %v863
      %v867 = vsub.f32 %v847, %v864
      %v868 = vmul.f32 %v865, %v865
      %v869 = vmul.f32 %v866, %v866
      %v870 = vmul.f32 %v867, %v867
      %v871 = vsel %vm850, %v868, 0.0
      %872 = vadd.xlane.f32.xlu0 %v871
      %v873 = vpop.xlane.xlu0 %872
      %v874 = vsel %vm850, %v869, 0.0
      %875 = vadd.xlane.f32.xlu0 %v874
      %v876 = vpop.xlane.xlu0 %875
      %v877 = vsel %vm857, %v870, 0.0
      %878 = vadd.xlane.f32.xlu0 %v877
      %v879 = vpop.xlane.xlu0 %878
      %v880 = vmul.f32 %v873, %v861
      %v881 = vmul.f32 %v876, %v861
      %v882 = vmul.f32 %v879, %v861
      %v883 = vadd.f32 %v880, 1e-06
      %v884 = vadd.f32 %v881, 1e-06
      %v885 = vadd.f32 %v882, 1e-06
      %v886 = vrsqrt.pop %v883
      %v887 = vrsqrt.pop %v884
      %v888 = vrsqrt.pop %v885
      %v889 = vmul.f32 %v865, %v886
      %v890 = vmul.f32 %v866, %v887
      %v891 = vmul.f32 %v867, %v888
      %v893 = vlaneseq
      %v894 = vshrl.u32 %v893, 7
      %v895 = vsub.s32 0, %v894
      %v896 = vrot.slane %v848, %v895
      %v898 = vmul.f32 %v889, %v896
      %v899 = vmul.f32 %v890, %v896
      %v900 = vmul.f32 %v891, %v896
      %v902 = vlaneseq
      %v903 = vshrl.u32 %v902, 7
      %v904 = vsub.s32 0, %v903
      %v905 = vrot.slane %v849, %v904
      %v907 = vadd.f32 %v898, %v905
      %v908 = vadd.f32 %v899, %v905
      %v909 = vadd.f32 %v900, %v905
      %v910 = vpack.c.bf16 %v908, %v907
      %v911 = vpack.c.bf16 %v909, %v909
      %v912 = vld [vmem:[%s718] sm:$0xff]
      %v913 = vld [vmem:[%s718 + $0x8] sm:$0xff]
      %v914 = vld [vmem:[%s718 + $0x10] sm:$0xff]
      %v915 = vld [vmem:[%s718 + $0x18] sm:$0xff]
      %v916 = vld [vmem:[%s718 + $0x20] sm:$0xff]
      %v917 = vld [vmem:[%s718 + $0x28] sm:$0xff]
      %v918 = vld [vmem:[%s718 + $0x30] sm:$0xff]
      %v919 = vld [vmem:[%s718 + $0x38] sm:$0xff]
      %v920 = vld [vmem:[%s722] sm:$0x3]
      %v922 = vlaneseq
      %v923 = vshrl.u32 %v922, 7
      %v924 = vsub.s32 0, %v923
      %v925 = vrot.slane %v920, %v924
      %v926 = vlaneseq
      %v927 = vshrl.u32 %v926, 7
      %v928 = vsub.s32 1, %v927
      %v929 = vrot.slane %v920, %v928
      %v940 = vunpack.c.l.b16 %v912
      %v941 = vunpack.c.h.b16 %v912
      %v942 = vunpack.c.l.b16 %v913
      %v943 = vunpack.c.h.b16 %v913
      %v944 = vunpack.c.l.b16 %v914
      %v945 = vunpack.c.h.b16 %v914
      %v946 = vunpack.c.l.b16 %v915
      %v947 = vunpack.c.h.b16 %v915
      %v948 = vunpack.c.l.b16 %v916
      %v949 = vunpack.c.h.b16 %v916
      %v950 = vunpack.c.l.b16 %v917
      %v951 = vunpack.c.h.b16 %v917
      %v952 = vunpack.c.l.b16 %v918
      %v953 = vunpack.c.h.b16 %v918
      %v954 = vunpack.c.l.b16 %v919
      %v955 = vunpack.c.h.b16 %v919
      %v956 = vpack.c.b16 %v942, %v940
      %v957 = vpack.c.b16 %v943, %v941
      %v958 = vpack.c.b16 %v946, %v944
      %v959 = vpack.c.b16 %v947, %v945
      %v960 = vpack.c.b16 %v950, %v948
      %v961 = vpack.c.b16 %v951, %v949
      %v962 = vpack.c.b16 %v954, %v952
      %v963 = vpack.c.b16 %v955, %v953
      %v973 = vsel %vm850, %v910, 0
      %v976 = vsel %vm850, %v911, 0
      %978 = vmatprep.subr.bf16.mxu0 %v957
      %979 = vmatpush1.bf16.msra.mxu0 %v956
      %980 = vmatprep.subr.bf16.mxu0 %v959
      %981 = vmatpush1.bf16.msra.mxu0 %v958
      %982 = vmatprep.subr.bf16.mxu0 %v961
      %983 = vmatpush1.bf16.msra.mxu0 %v960
      %984 = vmatprep.subr.bf16.mxu0 %v963
      %985 = vmatpush1.bf16.msra.mxu0 %v962
      %986 = vmatprep.subr.bf16.mxu0 0
      %987 = vmatpush1.bf16.msra.mxu0 0
      %988 = vmatprep.subr.bf16.mxu0 0
      %989 = vmatpush1.bf16.msra.mxu0 0
      %990 = vmatprep.subr.bf16.mxu0 0
      %991 = vmatpush1.bf16.msra.mxu0 0
      %992 = vmatprep.subr.bf16.mxu0 0
      %993 = vmatpush1.bf16.msra.mxu0 0
      %994 = vmatprep.subr.bf16.mxu0 0
      %995 = vmatpush1.bf16.msra.mxu0 0
      %996 = vmatprep.subr.bf16.mxu0 0
      %997 = vmatpush1.bf16.msra.mxu0 0
      %998 = vmatprep.subr.bf16.mxu0 0
      %999 = vmatpush1.bf16.msra.mxu0 0
      %1000 = vmatprep.subr.bf16.mxu0 0
      %1001 = vmatpush1.bf16.msra.mxu0 0
      %1002 = vmatprep.subr.bf16.mxu0 0
      %1003 = vmatpush1.bf16.msra.mxu0 0
      %1004 = vmatprep.subr.bf16.mxu0 0
      %1005 = vmatpush1.bf16.msra.mxu0 0
      %1006 = vmatprep.subr.bf16.mxu0 0
      %1007 = vmatpush1.bf16.msra.mxu0 0
      %1008 = vmatprep.subr.bf16.mxu0 0
      %1009 = vmatpush1.bf16.msra.mxu0 0
      %1010 = vmatprep.mubr.bf16.mxu0 0
      %1011 = vmatmul.mubr.bf16.gmra.mrb[0].mxu0 %v973
      %v1012 = vpop.f32.mrb[0].mxu0
      %v1013 = vadd.f32 %v925, %v1012
      %v1014 = vpop.f32.mrb[0].mxu0
      %v1015 = vadd.f32 %v929, %v1014
      %v1016 = vpop.f32.mrb[0].mxu0
      %v1017 = vadd.f32 %v925, %v1016
      %v1018 = vpop.f32.mrb[0].mxu0
      %v1019 = vadd.f32 %v929, %v1018
      %1020 = vmatprep.mubr.bf16.mxu0 0
      %1021 = vmatmul.mubr.bf16.gmra.mrb[0].mxu0 %v976
      %v1022 = vpop.f32.mrb[0].mxu0
      %v1023 = vadd.f32 %v925, %v1022
      %v1024 = vpop.f32.mrb[0].mxu0
      %v1025 = vadd.f32 %v929, %v1024
      %v1026 = vpop.f32.mrb[0].mxu0
      %v1027 = vpop.f32.mrb[0].mxu0
      %1028 = vdwg.mxu0
      %v1029 = vpack.c.bf16 %v1017, %v1013
      %v1030 = vpack.c.bf16 %v1023, %v1023
      %v1031 = vpack.c.bf16 %v1019, %v1015
      %v1032 = vpack.c.bf16 %v1025, %v1025
      %1035 = vrot.lane.b32.xlu0 %v1029, 64
      %v1036 = vpop.permute.xlu0 %1035
      %1037 = vrot.lane.b32.xlu0 %v1030, 64
      %v1038 = vpop.permute.xlu0 %1037
      %vm1039 = vcmask 130048
      %v1041 = vsel %vm1039, %v1029, 0
      %v1044 = vsel %vm1039, %v1030, 0
      %v1047 = vsel %vm1039, %v1036, 0
      %v1050 = vsel %vm1039, %v1038, 0
      %1052 = vmatprep.subr.bf16.mxu0 0
      %1053 = vmatpush1.bf16.xpose.msra.mxu0 %v1047
      %1054 = vmatprep.subr.bf16.mxu0 0
      %1055 = vmatpush1.bf16.xpose.msra.mxu0 %v1050
      %1056 = vmatprep.subr.bf16.mxu0 0
      %1057 = vmatpush1.bf16.xpose.msra.mxu0 0
      %1058 = vmatprep.subr.bf16.mxu0 0
      %1059 = vmatpush1.bf16.xpose.msra.mxu0 0
      %1060 = vmatprep.subr.bf16.mxu0 0
      %1061 = vmatpush1.bf16.xpose.msra.mxu0 0
      %1062 = vmatprep.subr.bf16.mxu0 0
      %1063 = vmatpush1.bf16.xpose.msra.mxu0 0
      %1064 = vmatprep.subr.bf16.mxu0 0
      %1065 = vmatpush1.bf16.xpose.msra.mxu0 0
      %1066 = vmatprep.subr.bf16.mxu0 0
      %1067 = vmatpush1.bf16.xpose.msra.mxu0 0
      %1068 = vmatprep.subr.bf16.mxu0 0
      %1069 = vmatpush1.bf16.xpose.msra.mxu0 0
      %1070 = vmatprep.subr.bf16.mxu0 0
      %1071 = vmatpush1.bf16.xpose.msra.mxu0 0
      %1072 = vmatprep.subr.bf16.mxu0 0
      %1073 = vmatpush1.bf16.xpose.msra.mxu0 0
      %1074 = vmatprep.subr.bf16.mxu0 0
      %1075 = vmatpush1.bf16.xpose.msra.mxu0 0
      %1076 = vmatprep.subr.bf16.mxu0 0
      %1077 = vmatpush1.bf16.xpose.msra.mxu0 0
      %1078 = vmatprep.subr.bf16.mxu0 0
      %1079 = vmatpush1.bf16.xpose.msra.mxu0 0
      %1080 = vmatprep.subr.bf16.mxu0 0
      %1081 = vmatpush1.bf16.xpose.msra.mxu0 0
      %1082 = vmatprep.subr.bf16.mxu0 0
      %1083 = vmatpush1.bf16.xpose.msra.mxu0 0
      %1084 = vmatprep.mubr.bf16.mxu0 0
      %1085 = vmatmul.mubr.bf16.gmra.mrb[0].mxu0 %v1041
      %v1086 = vpop.f32.mrb[0].mxu0
      %v1087 = vadd.f32 0.0, %v1086
      %v1088 = vpop.f32.mrb[0].mxu0
      %v1089 = vpop.f32.mrb[0].mxu0
      %v1090 = vadd.f32 0.0, %v1089
      %v1091 = vpop.f32.mrb[0].mxu0
      %1092 = vmatprep.mubr.bf16.mxu0 0
      %1093 = vmatmul.mubr.bf16.gmra.mrb[0].mxu0 %v1044
      %v1094 = vpop.f32.mrb[0].mxu0
      %v1095 = vadd.f32 0.0, %v1094
      %v1096 = vpop.f32.mrb[0].mxu0
      %v1097 = vpop.f32.mrb[0].mxu0
      %v1098 = vpop.f32.mrb[0].mxu0
      %1099 = vdwg.mxu0
      %v1100 = vmul.f32 %v1087, 0.25
      %v1101 = vmul.f32 %v1090, 0.25
      %v1102 = vmul.f32 %v1095, 0.25
      %vm1103 = vcmask 138240
      %v1104 = vsel %vm1103, %v1100, -inf
      %1105 = vmax.xlane.f32.xlu0 %v1104
      %v1106 = vpop.xlane.xlu0 %1105
      %v1107 = vsel %vm1103, %v1101, -inf
      %1108 = vmax.xlane.f32.xlu0 %v1107
      %v1109 = vpop.xlane.xlu0 %1108
      %vm1110 = vcmask 131072
      %v1111 = vsel %vm1110, %v1102, -inf
      %1112 = vmax.xlane.f32.xlu0 %v1111
      %v1113 = vpop.xlane.xlu0 %1112
      %v1114 = vsub.f32 %v1100, %v1106
      %v1115 = vsub.f32 %v1101, %v1109
      %v1116 = vsub.f32 %v1102, %v1113
      %v1117 = vmul.f32 %v1114, 1.442695
      %v1118 = vpow.pop %v1117
      %v1119 = vmul.f32 %v1115, 1.442695
      %v1120 = vpow.pop %v1119
      %v1121 = vmul.f32 %v1116, 1.442695
      %v1122 = vpow.pop %v1121
      %v1123 = vsel %vm1103, %v1118, 0.0
      %1124 = vadd.xlane.f32.xlu0 %v1123
      %v1125 = vpop.xlane.xlu0 %1124
      %v1126 = vsel %vm1103, %v1120, 0.0
      %1127 = vadd.xlane.f32.xlu0 %v1126
      %v1128 = vpop.xlane.xlu0 %1127
      %v1129 = vsel %vm1110, %v1122, 0.0
      %1130 = vadd.xlane.f32.xlu0 %v1129
      %v1131 = vpop.xlane.xlu0 %1130
      %v1132 = vrcp.pop %v1125
      %v1133 = vrcp.pop %v1128
      %v1134 = vrcp.pop %v1131
      %v1135 = vmul.f32 %v1118, %v1132
      %v1136 = vmul.f32 %v1120, %v1133
      %v1137 = vmul.f32 %v1122, %v1134
      %v1138 = vpack.c.bf16 %v1136, %v1135
      %v1139 = vpack.c.bf16 %v1137, %v1137
      %v1141 = vsel %vm1103, %v1138, 0
      %v1144 = vsel %vm1103, %v1139, 0
      %vm1146 = vcmask 1040384
      %v1147 = vsel 0, 4294967295, 65535
      %v1148 = vsel %vm1146, %v1147, 0
      %v1150 = vand.u32 %v1032, %v1148
      %1152 = vmatprep.subr.bf16.mxu0 0
      %1153 = vmatpush1.bf16.msra.mxu0 %v1031
      %1154 = vmatprep.subr.bf16.mxu0 0
      %1155 = vmatpush1.bf16.msra.mxu0 %v1150
      %1156 = vmatprep.subr.bf16.mxu0 0
      %1157 = vmatpush1.bf16.msra.mxu0 0
      %1158 = vmatprep.subr.bf16.mxu0 0
      %1159 = vmatpush1.bf16.msra.mxu0 0
      %1160 = vmatprep.subr.bf16.mxu0 0
      %1161 = vmatpush1.bf16.msra.mxu0 0
      %1162 = vmatprep.subr.bf16.mxu0 0
      %1163 = vmatpush1.bf16.msra.mxu0 0
      %1164 = vmatprep.subr.bf16.mxu0 0
      %1165 = vmatpush1.bf16.msra.mxu0 0
      %1166 = vmatprep.subr.bf16.mxu0 0
      %1167 = vmatpush1.bf16.msra.mxu0 0
      %1168 = vmatprep.subr.bf16.mxu0 0
      %1169 = vmatpush1.bf16.msra.mxu0 0
      %1170 = vmatprep.subr.bf16.mxu0 0
      %1171 = vmatpush1.bf16.msra.mxu0 0
      %1172 = vmatprep.subr.bf16.mxu0 0
      %1173 = vmatpush1.bf16.msra.mxu0 0
      %1174 = vmatprep.subr.bf16.mxu0 0
      %1175 = vmatpush1.bf16.msra.mxu0 0
      %1176 = vmatprep.subr.bf16.mxu0 0
      %1177 = vmatpush1.bf16.msra.mxu0 0
      %1178 = vmatprep.subr.bf16.mxu0 0
      %1179 = vmatpush1.bf16.msra.mxu0 0
      %1180 = vmatprep.subr.bf16.mxu0 0
      %1181 = vmatpush1.bf16.msra.mxu0 0
      %1182 = vmatprep.subr.bf16.mxu0 0
      %1183 = vmatpush1.bf16.msra.mxu0 0
      %1184 = vmatprep.mubr.bf16.mxu0 0
      %1185 = vmatmul.mubr.bf16.gmra.mrb[0].mxu0 %v1141
      %v1186 = vpop.f32.mrb[0].mxu0
      %v1187 = vadd.f32 0.0, %v1186
      %v1188 = vpop.f32.mrb[0].mxu0
      %v1189 = vpop.f32.mrb[0].mxu0
      %v1190 = vadd.f32 0.0, %v1189
      %v1191 = vpop.f32.mrb[0].mxu0
      %1192 = vmatprep.mubr.bf16.mxu0 0
      %1193 = vmatmul.mubr.bf16.gmra.mrb[0].mxu0 %v1144
      %v1194 = vpop.f32.mrb[0].mxu0
      %v1195 = vadd.f32 0.0, %v1194
      %v1196 = vpop.f32.mrb[0].mxu0
      %v1197 = vpop.f32.mrb[0].mxu0
      %v1198 = vpop.f32.mrb[0].mxu0
      %1199 = vdwg.mxu0
      %1200 = vrot.lane.b32.xlu0 %v1029, 112
      %v1201 = vpop.permute.xlu0 %1200
      %1202 = vrot.lane.b32.xlu0 %v1030, 112
      %v1203 = vpop.permute.xlu0 %1202
      %1204 = vrot.lane.b32.xlu0 %v1029, 48
      %v1205 = vpop.permute.xlu0 %1204
      %1206 = vrot.lane.b32.xlu0 %v1030, 48
      %v1207 = vpop.permute.xlu0 %1206
      %v1209 = vsel %vm1039, %v1201, 0
      %v1212 = vsel %vm1039, %v1203, 0
      %v1215 = vsel %vm1039, %v1205, 0
      %v1218 = vsel %vm1039, %v1207, 0
      %1220 = vmatprep.subr.bf16.mxu0 0
      %1221 = vmatpush1.bf16.xpose.msra.mxu0 %v1215
      %1222 = vmatprep.subr.bf16.mxu0 0
      %1223 = vmatpush1.bf16.xpose.msra.mxu0 %v1218
      %1224 = vmatprep.subr.bf16.mxu0 0
      %1225 = vmatpush1.bf16.xpose.msra.mxu0 0
      %1226 = vmatprep.subr.bf16.mxu0 0
      %1227 = vmatpush1.bf16.xpose.msra.mxu0 0
      %1228 = vmatprep.subr.bf16.mxu0 0
      %1229 = vmatpush1.bf16.xpose.msra.mxu0 0
      %1230 = vmatprep.subr.bf16.mxu0 0
      %1231 = vmatpush1.bf16.xpose.msra.mxu0 0
      %1232 = vmatprep.subr.bf16.mxu0 0
      %1233 = vmatpush1.bf16.xpose.msra.mxu0 0
      %1234 = vmatprep.subr.bf16.mxu0 0
      %1235 = vmatpush1.bf16.xpose.msra.mxu0 0
      %1236 = vmatprep.subr.bf16.mxu0 0
      %1237 = vmatpush1.bf16.xpose.msra.mxu0 0
      %1238 = vmatprep.subr.bf16.mxu0 0
      %1239 = vmatpush1.bf16.xpose.msra.mxu0 0
      %1240 = vmatprep.subr.bf16.mxu0 0
      %1241 = vmatpush1.bf16.xpose.msra.mxu0 0
      %1242 = vmatprep.subr.bf16.mxu0 0
      %1243 = vmatpush1.bf16.xpose.msra.mxu0 0
      %1244 = vmatprep.subr.bf16.mxu0 0
      %1245 = vmatpush1.bf16.xpose.msra.mxu0 0
      %1246 = vmatprep.subr.bf16.mxu0 0
      %1247 = vmatpush1.bf16.xpose.msra.mxu0 0
      %1248 = vmatprep.subr.bf16.mxu0 0
      %1249 = vmatpush1.bf16.xpose.msra.mxu0 0
      %1250 = vmatprep.subr.bf16.mxu0 0
      %1251 = vmatpush1.bf16.xpose.msra.mxu0 0
      %1252 = vmatprep.mubr.bf16.mxu0 0
      %1253 = vmatmul.mubr.bf16.gmra.mrb[0].mxu0 %v1209
      %v1254 = vpop.f32.mrb[0].mxu0
      %v1255 = vadd.f32 0.0, %v1254
      %v1256 = vpop.f32.mrb[0].mxu0
      %v1257 = vpop.f32.mrb[0].mxu0
      %v1258 = vadd.f32 0.0, %v1257
      %v1259 = vpop.f32.mrb[0].mxu0
      %1260 = vmatprep.mubr.bf16.mxu0 0
      %1261 = vmatmul.mubr.bf16.gmra.mrb[0].mxu0 %v1212
      %v1262 = vpop.f32.mrb[0].mxu0
      %v1263 = vadd.f32 0.0, %v1262
      %v1264 = vpop.f32.mrb[0].mxu0
      %v1265 = vpop.f32.mrb[0].mxu0
      %v1266 = vpop.f32.mrb[0].mxu0
      %1267 = vdwg.mxu0
      %v1268 = vmul.f32 %v1255, 0.25
      %v1269 = vmul.f32 %v1258, 0.25
      %v1270 = vmul.f32 %v1263, 0.25
      %v1271 = vsel %vm1103, %v1268, -inf
      %1272 = vmax.xlane.f32.xlu0 %v1271
      %v1273 = vpop.xlane.xlu0 %1272
      %v1274 = vsel %vm1103, %v1269, -inf
      %1275 = vmax.xlane.f32.xlu0 %v1274
      %v1276 = vpop.xlane.xlu0 %1275
      %v1277 = vsel %vm1110, %v1270, -inf
      %1278 = vmax.xlane.f32.xlu0 %v1277
      %v1279 = vpop.xlane.xlu0 %1278
      %v1280 = vsub.f32 %v1268, %v1273
      %v1281 = vsub.f32 %v1269, %v1276
      %v1282 = vsub.f32 %v1270, %v1279
      %v1283 = vmul.f32 %v1280, 1.442695
      %v1284 = vpow.pop %v1283
      %v1285 = vmul.f32 %v1281, 1.442695
      %v1286 = vpow.pop %v1285
      %v1287 = vmul.f32 %v1282, 1.442695
      %v1288 = vpow.pop %v1287
      %v1289 = vsel %vm1103, %v1284, 0.0
      %1290 = vadd.xlane.f32.xlu0 %v1289
      %v1291 = vpop.xlane.xlu0 %1290
      %v1292 = vsel %vm1103, %v1286, 0.0
      %1293 = vadd.xlane.f32.xlu0 %v1292
      %v1294 = vpop.xlane.xlu0 %1293
      %v1295 = vsel %vm1110, %v1288, 0.0
      %1296 = vadd.xlane.f32.xlu0 %v1295
      %v1297 = vpop.xlane.xlu0 %1296
      %v1298 = vrcp.pop %v1291
      %v1299 = vrcp.pop %v1294
      %v1300 = vrcp.pop %v1297
      %v1301 = vmul.f32 %v1284, %v1298
      %v1302 = vmul.f32 %v1286, %v1299
      %v1303 = vmul.f32 %v1288, %v1300
      %v1304 = vpack.c.bf16 %v1302, %v1301
      %v1305 = vpack.c.bf16 %v1303, %v1303
      %1308 = vrot.lane.b32.xlu0 %v1031, 112
      %v1309 = vpop.permute.xlu0 %1308
      %1310 = vrot.lane.b32.xlu0 %v1032, 112
      %v1311 = vpop.permute.xlu0 %1310
      %v1314 = vsel %vm1103, %v1304, 0
      %v1317 = vsel %vm1103, %v1305, 0
      %v1320 = vand.u32 %v1311, %v1148
      %1322 = vmatprep.subr.bf16.mxu0 0
      %1323 = vmatpush1.bf16.msra.mxu0 %v1309
      %1324 = vmatprep.subr.bf16.mxu0 0
      %1325 = vmatpush1.bf16.msra.mxu0 %v1320
      %1326 = vmatprep.subr.bf16.mxu0 0
      %1327 = vmatpush1.bf16.msra.mxu0 0
      %1328 = vmatprep.subr.bf16.mxu0 0
      %1329 = vmatpush1.bf16.msra.mxu0 0
      %1330 = vmatprep.subr.bf16.mxu0 0
      %1331 = vmatpush1.bf16.msra.mxu0 0
      %1332 = vmatprep.subr.bf16.mxu0 0
      %1333 = vmatpush1.bf16.msra.mxu0 0
      %1334 = vmatprep.subr.bf16.mxu0 0
      %1335 = vmatpush1.bf16.msra.mxu0 0
      %1336 = vmatprep.subr.bf16.mxu0 0
      %1337 = vmatpush1.bf16.msra.mxu0 0
      %1338 = vmatprep.subr.bf16.mxu0 0
      %1339 = vmatpush1.bf16.msra.mxu0 0
      %1340 = vmatprep.subr.bf16.mxu0 0
      %1341 = vmatpush1.bf16.msra.mxu0 0
      %1342 = vmatprep.subr.bf16.mxu0 0
      %1343 = vmatpush1.bf16.msra.mxu0 0
      %1344 = vmatprep.subr.bf16.mxu0 0
      %1345 = vmatpush1.bf16.msra.mxu0 0
      %1346 = vmatprep.subr.bf16.mxu0 0
      %1347 = vmatpush1.bf16.msra.mxu0 0
      %1348 = vmatprep.subr.bf16.mxu0 0
      %1349 = vmatpush1.bf16.msra.mxu0 0
      %1350 = vmatprep.subr.bf16.mxu0 0
      %1351 = vmatpush1.bf16.msra.mxu0 0
      %1352 = vmatprep.subr.bf16.mxu0 0
      %1353 = vmatpush1.bf16.msra.mxu0 0
      %1354 = vmatprep.mubr.bf16.mxu0 0
      %1355 = vmatmul.mubr.bf16.gmra.mrb[0].mxu0 %v1314
      %v1356 = vpop.f32.mrb[0].mxu0
      %v1357 = vadd.f32 0.0, %v1356
      %v1358 = vpop.f32.mrb[0].mxu0
      %v1359 = vpop.f32.mrb[0].mxu0
      %v1360 = vadd.f32 0.0, %v1359
      %v1361 = vpop.f32.mrb[0].mxu0
      %1362 = vmatprep.mubr.bf16.mxu0 0
      %1363 = vmatmul.mubr.bf16.gmra.mrb[0].mxu0 %v1317
      %v1364 = vpop.f32.mrb[0].mxu0
      %v1365 = vadd.f32 0.0, %v1364
      %v1366 = vpop.f32.mrb[0].mxu0
      %v1367 = vpop.f32.mrb[0].mxu0
      %v1368 = vpop.f32.mrb[0].mxu0
      %1369 = vdwg.mxu0
      %1370 = vrot.lane.b32.xlu0 %v1029, 96
      %v1371 = vpop.permute.xlu0 %1370
      %1372 = vrot.lane.b32.xlu0 %v1030, 96
      %v1373 = vpop.permute.xlu0 %1372
      %1374 = vrot.lane.b32.xlu0 %v1029, 32
      %v1375 = vpop.permute.xlu0 %1374
      %1376 = vrot.lane.b32.xlu0 %v1030, 32
      %v1377 = vpop.permute.xlu0 %1376
      %v1379 = vsel %vm1039, %v1371, 0
      %v1382 = vsel %vm1039, %v1373, 0
      %v1385 = vsel %vm1039, %v1375, 0
      %v1388 = vsel %vm1039, %v1377, 0
      %1390 = vmatprep.subr.bf16.mxu0 0
      %1391 = vmatpush1.bf16.xpose.msra.mxu0 %v1385
      %1392 = vmatprep.subr.bf16.mxu0 0
      %1393 = vmatpush1.bf16.xpose.msra.mxu0 %v1388
      %1394 = vmatprep.subr.bf16.mxu0 0
      %1395 = vmatpush1.bf16.xpose.msra.mxu0 0
      %1396 = vmatprep.subr.bf16.mxu0 0
      %1397 = vmatpush1.bf16.xpose.msra.mxu0 0
      %1398 = vmatprep.subr.bf16.mxu0 0
      %1399 = vmatpush1.bf16.xpose.msra.mxu0 0
      %1400 = vmatprep.subr.bf16.mxu0 0
      %1401 = vmatpush1.bf16.xpose.msra.mxu0 0
      %1402 = vmatprep.subr.bf16.mxu0 0
      %1403 = vmatpush1.bf16.xpose.msra.mxu0 0
      %1404 = vmatprep.subr.bf16.mxu0 0
      %1405 = vmatpush1.bf16.xpose.msra.mxu0 0
      %1406 = vmatprep.subr.bf16.mxu0 0
      %1407 = vmatpush1.bf16.xpose.msra.mxu0 0
      %1408 = vmatprep.subr.bf16.mxu0 0
      %1409 = vmatpush1.bf16.xpose.msra.mxu0 0
      %1410 = vmatprep.subr.bf16.mxu0 0
      %1411 = vmatpush1.bf16.xpose.msra.mxu0 0
      %1412 = vmatprep.subr.bf16.mxu0 0
      %1413 = vmatpush1.bf16.xpose.msra.mxu0 0
      %1414 = vmatprep.subr.bf16.mxu0 0
      %1415 = vmatpush1.bf16.xpose.msra.mxu0 0
      %1416 = vmatprep.subr.bf16.mxu0 0
      %1417 = vmatpush1.bf16.xpose.msra.mxu0 0
      %1418 = vmatprep.subr.bf16.mxu0 0
      %1419 = vmatpush1.bf16.xpose.msra.mxu0 0
      %1420 = vmatprep.subr.bf16.mxu0 0
      %1421 = vmatpush1.bf16.xpose.msra.mxu0 0
      %1422 = vmatprep.mubr.bf16.mxu0 0
      %1423 = vmatmul.mubr.bf16.gmra.mrb[0].mxu0 %v1379
      %v1424 = vpop.f32.mrb[0].mxu0
      %v1425 = vadd.f32 0.0, %v1424
      %v1426 = vpop.f32.mrb[0].mxu0
      %v1427 = vpop.f32.mrb[0].mxu0
      %v1428 = vadd.f32 0.0, %v1427
      %v1429 = vpop.f32.mrb[0].mxu0
      %1430 = vmatprep.mubr.bf16.mxu0 0
      %1431 = vmatmul.mubr.bf16.gmra.mrb[0].mxu0 %v1382
      %v1432 = vpop.f32.mrb[0].mxu0
      %v1433 = vadd.f32 0.0, %v1432
      %v1434 = vpop.f32.mrb[0].mxu0
      %v1435 = vpop.f32.mrb[0].mxu0
      %v1436 = vpop.f32.mrb[0].mxu0
      %1437 = vdwg.mxu0
      %v1438 = vmul.f32 %v1425, 0.25
      %v1439 = vmul.f32 %v1428, 0.25
      %v1440 = vmul.f32 %v1433, 0.25
      %v1441 = vsel %vm1103, %v1438, -inf
      %1442 = vmax.xlane.f32.xlu0 %v1441
      %v1443 = vpop.xlane.xlu0 %1442
      %v1444 = vsel %vm1103, %v1439, -inf
      %1445 = vmax.xlane.f32.xlu0 %v1444
      %v1446 = vpop.xlane.xlu0 %1445
      %v1447 = vsel %vm1110, %v1440, -inf
      %1448 = vmax.xlane.f32.xlu0 %v1447
      %v1449 = vpop.xlane.xlu0 %1448
      %v1450 = vsub.f32 %v1438, %v1443
      %v1451 = vsub.f32 %v1439, %v1446
      %v1452 = vsub.f32 %v1440, %v1449
      %v1453 = vmul.f32 %v1450, 1.442695
      %v1454 = vpow.pop %v1453
      %v1455 = vmul.f32 %v1451, 1.442695
      %v1456 = vpow.pop %v1455
      %v1457 = vmul.f32 %v1452, 1.442695
      %v1458 = vpow.pop %v1457
      %v1459 = vsel %vm1103, %v1454, 0.0
      %1460 = vadd.xlane.f32.xlu0 %v1459
      %v1461 = vpop.xlane.xlu0 %1460
      %v1462 = vsel %vm1103, %v1456, 0.0
      %1463 = vadd.xlane.f32.xlu0 %v1462
      %v1464 = vpop.xlane.xlu0 %1463
      %v1465 = vsel %vm1110, %v1458, 0.0
      %1466 = vadd.xlane.f32.xlu0 %v1465
      %v1467 = vpop.xlane.xlu0 %1466
      %v1468 = vrcp.pop %v1461
      %v1469 = vrcp.pop %v1464
      %v1470 = vrcp.pop %v1467
      %v1471 = vmul.f32 %v1454, %v1468
      %v1472 = vmul.f32 %v1456, %v1469
      %v1473 = vmul.f32 %v1458, %v1470
      %v1474 = vpack.c.bf16 %v1472, %v1471
      %v1475 = vpack.c.bf16 %v1473, %v1473
      %1476 = vrot.lane.b32.xlu0 %v1031, 96
      %v1477 = vpop.permute.xlu0 %1476
      %1478 = vrot.lane.b32.xlu0 %v1032, 96
      %v1479 = vpop.permute.xlu0 %1478
      %v1482 = vsel %vm1103, %v1474, 0
      %v1485 = vsel %vm1103, %v1475, 0
      %v1488 = vand.u32 %v1479, %v1148
      %1490 = vmatprep.subr.bf16.mxu0 0
      %1491 = vmatpush1.bf16.msra.mxu0 %v1477
      %1492 = vmatprep.subr.bf16.mxu0 0
      %1493 = vmatpush1.bf16.msra.mxu0 %v1488
      %1494 = vmatprep.subr.bf16.mxu0 0
      %1495 = vmatpush1.bf16.msra.mxu0 0
      %1496 = vmatprep.subr.bf16.mxu0 0
      %1497 = vmatpush1.bf16.msra.mxu0 0
      %1498 = vmatprep.subr.bf16.mxu0 0
      %1499 = vmatpush1.bf16.msra.mxu0 0
      %1500 = vmatprep.subr.bf16.mxu0 0
      %1501 = vmatpush1.bf16.msra.mxu0 0
      %1502 = vmatprep.subr.bf16.mxu0 0
      %1503 = vmatpush1.bf16.msra.mxu0 0
      %1504 = vmatprep.subr.bf16.mxu0 0
      %1505 = vmatpush1.bf16.msra.mxu0 0
      %1506 = vmatprep.subr.bf16.mxu0 0
      %1507 = vmatpush1.bf16.msra.mxu0 0
      %1508 = vmatprep.subr.bf16.mxu0 0
      %1509 = vmatpush1.bf16.msra.mxu0 0
      %1510 = vmatprep.subr.bf16.mxu0 0
      %1511 = vmatpush1.bf16.msra.mxu0 0
      %1512 = vmatprep.subr.bf16.mxu0 0
      %1513 = vmatpush1.bf16.msra.mxu0 0
      %1514 = vmatprep.subr.bf16.mxu0 0
      %1515 = vmatpush1.bf16.msra.mxu0 0
      %1516 = vmatprep.subr.bf16.mxu0 0
      %1517 = vmatpush1.bf16.msra.mxu0 0
      %1518 = vmatprep.subr.bf16.mxu0 0
      %1519 = vmatpush1.bf16.msra.mxu0 0
      %1520 = vmatprep.subr.bf16.mxu0 0
      %1521 = vmatpush1.bf16.msra.mxu0 0
      %1522 = vmatprep.mubr.bf16.mxu0 0
      %1523 = vmatmul.mubr.bf16.gmra.mrb[0].mxu0 %v1482
      %v1524 = vpop.f32.mrb[0].mxu0
      %v1525 = vadd.f32 0.0, %v1524
      %v1526 = vpop.f32.mrb[0].mxu0
      %v1527 = vpop.f32.mrb[0].mxu0
      %v1528 = vadd.f32 0.0, %v1527
      %v1529 = vpop.f32.mrb[0].mxu0
      %1530 = vmatprep.mubr.bf16.mxu0 0
      %1531 = vmatmul.mubr.bf16.gmra.mrb[0].mxu0 %v1485
      %v1532 = vpop.f32.mrb[0].mxu0
      %v1533 = vadd.f32 0.0, %v1532
      %v1534 = vpop.f32.mrb[0].mxu0
      %v1535 = vpop.f32.mrb[0].mxu0
      %v1536 = vpop.f32.mrb[0].mxu0
      %1537 = vdwg.mxu0
      %1538 = vrot.lane.b32.xlu0 %v1029, 80
      %v1539 = vpop.permute.xlu0 %1538
      %1540 = vrot.lane.b32.xlu0 %v1030, 80
      %v1541 = vpop.permute.xlu0 %1540
      %1542 = vrot.lane.b32.xlu0 %v1029, 16
      %v1543 = vpop.permute.xlu0 %1542
      %1544 = vrot.lane.b32.xlu0 %v1030, 16
      %v1545 = vpop.permute.xlu0 %1544
      %v1547 = vsel %vm1039, %v1539, 0
      %v1550 = vsel %vm1039, %v1541, 0
      %v1553 = vsel %vm1039, %v1543, 0
      %v1556 = vsel %vm1039, %v1545, 0
      %1558 = vmatprep.subr.bf16.mxu0 0
      %1559 = vmatpush1.bf16.xpose.msra.mxu0 %v1553
      %1560 = vmatprep.subr.bf16.mxu0 0
      %1561 = vmatpush1.bf16.xpose.msra.mxu0 %v1556
      %1562 = vmatprep.subr.bf16.mxu0 0
      %1563 = vmatpush1.bf16.xpose.msra.mxu0 0
      %1564 = vmatprep.subr.bf16.mxu0 0
      %1565 = vmatpush1.bf16.xpose.msra.mxu0 0
      %1566 = vmatprep.subr.bf16.mxu0 0
      %1567 = vmatpush1.bf16.xpose.msra.mxu0 0
      %1568 = vmatprep.subr.bf16.mxu0 0
      %1569 = vmatpush1.bf16.xpose.msra.mxu0 0
      %1570 = vmatprep.subr.bf16.mxu0 0
      %1571 = vmatpush1.bf16.xpose.msra.mxu0 0
      %1572 = vmatprep.subr.bf16.mxu0 0
      %1573 = vmatpush1.bf16.xpose.msra.mxu0 0
      %1574 = vmatprep.subr.bf16.mxu0 0
      %1575 = vmatpush1.bf16.xpose.msra.mxu0 0
      %1576 = vmatprep.subr.bf16.mxu0 0
      %1577 = vmatpush1.bf16.xpose.msra.mxu0 0
      %1578 = vmatprep.subr.bf16.mxu0 0
      %1579 = vmatpush1.bf16.xpose.msra.mxu0 0
      %1580 = vmatprep.subr.bf16.mxu0 0
      %1581 = vmatpush1.bf16.xpose.msra.mxu0 0
      %1582 = vmatprep.subr.bf16.mxu0 0
      %1583 = vmatpush1.bf16.xpose.msra.mxu0 0
      %1584 = vmatprep.subr.bf16.mxu0 0
      %1585 = vmatpush1.bf16.xpose.msra.mxu0 0
      %1586 = vmatprep.subr.bf16.mxu0 0
      %1587 = vmatpush1.bf16.xpose.msra.mxu0 0
      %1588 = vmatprep.subr.bf16.mxu0 0
      %1589 = vmatpush1.bf16.xpose.msra.mxu0 0
      %1590 = vmatprep.mubr.bf16.mxu0 0
      %1591 = vmatmul.mubr.bf16.gmra.mrb[0].mxu0 %v1547
      %v1592 = vpop.f32.mrb[0].mxu0
      %v1593 = vadd.f32 0.0, %v1592
      %v1594 = vpop.f32.mrb[0].mxu0
      %v1595 = vpop.f32.mrb[0].mxu0
      %v1596 = vadd.f32 0.0, %v1595
      %v1597 = vpop.f32.mrb[0].mxu0
      %1598 = vmatprep.mubr.bf16.mxu0 0
      %1599 = vmatmul.mubr.bf16.gmra.mrb[0].mxu0 %v1550
      %v1600 = vpop.f32.mrb[0].mxu0
      %v1601 = vadd.f32 0.0, %v1600
      %v1602 = vpop.f32.mrb[0].mxu0
      %v1603 = vpop.f32.mrb[0].mxu0
      %v1604 = vpop.f32.mrb[0].mxu0
      %1605 = vdwg.mxu0
      %v1606 = vmul.f32 %v1593, 0.25
      %v1607 = vmul.f32 %v1596, 0.25
      %v1608 = vmul.f32 %v1601, 0.25
      %v1609 = vsel %vm1103, %v1606, -inf
      %1610 = vmax.xlane.f32.xlu0 %v1609
      %v1611 = vpop.xlane.xlu0 %1610
      %v1612 = vsel %vm1103, %v1607, -inf
      %1613 = vmax.xlane.f32.xlu0 %v1612
      %v1614 = vpop.xlane.xlu0 %1613
      %v1615 = vsel %vm1110, %v1608, -inf
      %1616 = vmax.xlane.f32.xlu0 %v1615
      %v1617 = vpop.xlane.xlu0 %1616
      %v1618 = vsub.f32 %v1606, %v1611
      %v1619 = vsub.f32 %v1607, %v1614
      %v1620 = vsub.f32 %v1608, %v1617
      %v1621 = vmul.f32 %v1618, 1.442695
      %v1622 = vpow.pop %v1621
      %v1623 = vmul.f32 %v1619, 1.442695
      %v1624 = vpow.pop %v1623
      %v1625 = vmul.f32 %v1620, 1.442695
      %v1626 = vpow.pop %v1625
      %v1627 = vsel %vm1103, %v1622, 0.0
      %1628 = vadd.xlane.f32.xlu0 %v1627
      %v1629 = vpop.xlane.xlu0 %1628
      %v1630 = vsel %vm1103, %v1624, 0.0
      %1631 = vadd.xlane.f32.xlu0 %v1630
      %v1632 = vpop.xlane.xlu0 %1631
      %v1633 = vsel %vm1110, %v1626, 0.0
      %1634 = vadd.xlane.f32.xlu0 %v1633
      %v1635 = vpop.xlane.xlu0 %1634
      %v1636 = vrcp.pop %v1629
      %v1637 = vrcp.pop %v1632
      %v1638 = vrcp.pop %v1635
      %v1639 = vmul.f32 %v1622, %v1636
      %v1640 = vmul.f32 %v1624, %v1637
      %v1641 = vmul.f32 %v1626, %v1638
      %v1642 = vpack.c.bf16 %v1640, %v1639
      %v1643 = vpack.c.bf16 %v1641, %v1641
      %1644 = vrot.lane.b32.xlu0 %v1031, 80
      %v1645 = vpop.permute.xlu0 %1644
      %1646 = vrot.lane.b32.xlu0 %v1032, 80
      %v1647 = vpop.permute.xlu0 %1646
      %v1650 = vsel %vm1103, %v1642, 0
      %v1653 = vsel %vm1103, %v1643, 0
      %v1656 = vand.u32 %v1647, %v1148
      %1658 = vmatprep.subr.bf16.mxu0 0
      %1659 = vmatpush1.bf16.msra.mxu0 %v1645
      %1660 = vmatprep.subr.bf16.mxu0 0
      %1661 = vmatpush1.bf16.msra.mxu0 %v1656
      %1662 = vmatprep.subr.bf16.mxu0 0
      %1663 = vmatpush1.bf16.msra.mxu0 0
      %1664 = vmatprep.subr.bf16.mxu0 0
      %1665 = vmatpush1.bf16.msra.mxu0 0
      %1666 = vmatprep.subr.bf16.mxu0 0
      %1667 = vmatpush1.bf16.msra.mxu0 0
      %1668 = vmatprep.subr.bf16.mxu0 0
      %1669 = vmatpush1.bf16.msra.mxu0 0
      %1670 = vmatprep.subr.bf16.mxu0 0
      %1671 = vmatpush1.bf16.msra.mxu0 0
      %1672 = vmatprep.subr.bf16.mxu0 0
      %1673 = vmatpush1.bf16.msra.mxu0 0
      %1674 = vmatprep.subr.bf16.mxu0 0
      %1675 = vmatpush1.bf16.msra.mxu0 0
      %1676 = vmatprep.subr.bf16.mxu0 0
      %1677 = vmatpush1.bf16.msra.mxu0 0
      %1678 = vmatprep.subr.bf16.mxu0 0
      %1679 = vmatpush1.bf16.msra.mxu0 0
      %1680 = vmatprep.subr.bf16.mxu0 0
      %1681 = vmatpush1.bf16.msra.mxu0 0
      %1682 = vmatprep.subr.bf16.mxu0 0
      %1683 = vmatpush1.bf16.msra.mxu0 0
      %1684 = vmatprep.subr.bf16.mxu0 0
      %1685 = vmatpush1.bf16.msra.mxu0 0
      %1686 = vmatprep.subr.bf16.mxu0 0
      %1687 = vmatpush1.bf16.msra.mxu0 0
      %1688 = vmatprep.subr.bf16.mxu0 0
      %1689 = vmatpush1.bf16.msra.mxu0 0
      %1690 = vmatprep.mubr.bf16.mxu0 0
      %1691 = vmatmul.mubr.bf16.gmra.mrb[0].mxu0 %v1650
      %v1692 = vpop.f32.mrb[0].mxu0
      %v1693 = vadd.f32 0.0, %v1692
      %v1694 = vpop.f32.mrb[0].mxu0
      %v1695 = vpop.f32.mrb[0].mxu0
      %v1696 = vadd.f32 0.0, %v1695
      %v1697 = vpop.f32.mrb[0].mxu0
      %1698 = vmatprep.mubr.bf16.mxu0 0
      %1699 = vmatmul.mubr.bf16.gmra.mrb[0].mxu0 %v1653
      %v1700 = vpop.f32.mrb[0].mxu0
      %v1701 = vadd.f32 0.0, %v1700
      %v1702 = vpop.f32.mrb[0].mxu0
      %v1703 = vpop.f32.mrb[0].mxu0
      %v1704 = vpop.f32.mrb[0].mxu0
      %1705 = vdwg.mxu0
      %1709 = vrot.lane.b32.xlu0 %v1357, 16
      %v1710 = vpop.permute.xlu0 %1709
      %1711 = vrot.lane.b32.xlu0 %v1360, 16
      %v1712 = vpop.permute.xlu0 %1711
      %1713 = vrot.lane.b32.xlu0 %v1365, 16
      %v1714 = vpop.permute.xlu0 %1713
      %1721 = vrot.lane.b32.xlu0 %v1525, 32
      %v1722 = vpop.permute.xlu0 %1721
      %1723 = vrot.lane.b32.xlu0 %v1528, 32
      %v1724 = vpop.permute.xlu0 %1723
      %1725 = vrot.lane.b32.xlu0 %v1533, 32
      %v1726 = vpop.permute.xlu0 %1725
      %1733 = vrot.lane.b32.xlu0 %v1693, 48
      %v1734 = vpop.permute.xlu0 %1733
      %1735 = vrot.lane.b32.xlu0 %v1696, 48
      %v1736 = vpop.permute.xlu0 %1735
      %1737 = vrot.lane.b32.xlu0 %v1701, 48
      %v1738 = vpop.permute.xlu0 %1737
      %v1742 = vsel %vm1039, %v1187, %v1710
      %v1743 = vsel %vm1039, %v1190, %v1712
      %v1744 = vsel %vm1039, %v1195, %v1714
      %vm1745 = vcmask 261120
      %v1746 = vsel %vm1745, %v1742, %v1722
      %v1747 = vsel %vm1745, %v1743, %v1724
      %v1748 = vsel %vm1745, %v1744, %v1726
      %vm1749 = vcmask 392192
      %v1750 = vsel %vm1749, %v1746, %v1734
      %v1751 = vsel %vm1749, %v1747, %v1736
      %v1752 = vsel %vm1749, %v1748, %v1738
      %v1753 = vpack.c.bf16 %v1751, %v1750
      %v1754 = vpack.c.bf16 %v1752, %v1752
      %v1755 = vld [vmem:[%s727] sm:$0xf]
      %v1756 = vld [vmem:[%s727 + $0x4] sm:$0xf]
      %v1757 = vld [vmem:[%s727 + $0x8] sm:$0xf]
      %v1758 = vld [vmem:[%s727 + $0xc] sm:$0xf]
      %v1759 = vld [vmem:[%s727 + $0x10] sm:$0xf]
      %v1760 = vld [vmem:[%s727 + $0x14] sm:$0xf]
      %v1761 = vld [vmem:[%s727 + $0x18] sm:$0xf]
      %v1762 = vld [vmem:[%s727 + $0x1c] sm:$0xf]
      %v1771 = vunpack.c.l.b16 %v1755
      %v1772 = vunpack.c.l.b16 %v1756
      %v1773 = vunpack.c.l.b16 %v1757
      %v1774 = vunpack.c.l.b16 %v1758
      %v1775 = vunpack.c.l.b16 %v1759
      %v1776 = vunpack.c.l.b16 %v1760
      %v1777 = vunpack.c.l.b16 %v1761
      %v1778 = vunpack.c.l.b16 %v1762
      %v1779 = vpack.c.b16 %v1772, %v1771
      %v1780 = vpack.c.b16 %v1774, %v1773
      %v1781 = vpack.c.b16 %v1776, %v1775
      %v1782 = vpack.c.b16 %v1778, %v1777
      %v1788 = vsel %vm850, %v1753, 0
      %v1791 = vsel %vm850, %v1754, 0
      %1793 = vmatprep.subr.bf16.mxu0 0
      %1794 = vmatpush1.bf16.msra.mxu0 %v1779
      %1795 = vmatprep.subr.bf16.mxu0 0
      %1796 = vmatpush1.bf16.msra.mxu0 %v1780
      %1797 = vmatprep.subr.bf16.mxu0 0
      %1798 = vmatpush1.bf16.msra.mxu0 %v1781
      %1799 = vmatprep.subr.bf16.mxu0 0
      %1800 = vmatpush1.bf16.msra.mxu0 %v1782
      %1801 = vmatprep.subr.bf16.mxu0 0
      %1802 = vmatpush1.bf16.msra.mxu0 0
      %1803 = vmatprep.subr.bf16.mxu0 0
      %1804 = vmatpush1.bf16.msra.mxu0 0
      %1805 = vmatprep.subr.bf16.mxu0 0
      %1806 = vmatpush1.bf16.msra.mxu0 0
      %1807 = vmatprep.subr.bf16.mxu0 0
      %1808 = vmatpush1.bf16.msra.mxu0 0
      %1809 = vmatprep.subr.bf16.mxu0 0
      %1810 = vmatpush1.bf16.msra.mxu0 0
      %1811 = vmatprep.subr.bf16.mxu0 0
      %1812 = vmatpush1.bf16.msra.mxu0 0
      %1813 = vmatprep.subr.bf16.mxu0 0
      %1814 = vmatpush1.bf16.msra.mxu0 0
      %1815 = vmatprep.subr.bf16.mxu0 0
      %1816 = vmatpush1.bf16.msra.mxu0 0
      %1817 = vmatprep.subr.bf16.mxu0 0
      %1818 = vmatpush1.bf16.msra.mxu0 0
      %1819 = vmatprep.subr.bf16.mxu0 0
      %1820 = vmatpush1.bf16.msra.mxu0 0
      %1821 = vmatprep.subr.bf16.mxu0 0
      %1822 = vmatpush1.bf16.msra.mxu0 0
      %1823 = vmatprep.subr.bf16.mxu0 0
      %1824 = vmatpush1.bf16.msra.mxu0 0
      %1825 = vmatprep.mubr.bf16.mxu0 0
      %1826 = vmatmul.mubr.bf16.gmra.mrb[0].mxu0 %v1788
      %v1827 = vpop.f32.mrb[0].mxu0
      %v1828 = vadd.f32 0.0, %v1827
      %v1829 = vpop.f32.mrb[0].mxu0
      %v1830 = vpop.f32.mrb[0].mxu0
      %v1831 = vadd.f32 0.0, %v1830
      %v1832 = vpop.f32.mrb[0].mxu0
      %1833 = vmatprep.mubr.bf16.mxu0 0
      %1834 = vmatmul.mubr.bf16.gmra.mrb[0].mxu0 %v1791
      %v1835 = vpop.f32.mrb[0].mxu0
      %v1836 = vadd.f32 0.0, %v1835
      %v1837 = vpop.f32.mrb[0].mxu0
      %v1838 = vpop.f32.mrb[0].mxu0
      %v1839 = vpop.f32.mrb[0].mxu0
      %1840 = vdwg.mxu0
      %v1841 = vadd.f32 %v845, %v1828
      %v1842 = vadd.f32 %v846, %v1831
      %v1843 = vadd.f32 %v847, %v1836
      %v1844 = vld [vmem:[%s730] sm:$0x1]
      %v1846 = vlaneseq
      %v1847 = vshrl.u32 %v1846, 7
      %v1848 = vsub.s32 0, %v1847
      %v1849 = vrot.slane %v1844, %v1848
      %v1851 = vadd.f32 %v1841, %v1849
      %v1852 = vadd.f32 %v1842, %v1849
      %v1853 = vadd.f32 %v1843, %v1849
      %v1854 = vld [vmem:[%s733] sm:$0x1]
      %v1855 = vld [vmem:[%s736] sm:$0x1]
      %v1856 = vsel %vm850, %v1851, 0.0
      %1857 = vadd.xlane.f32.xlu0 %v1856
      %v1858 = vpop.xlane.xlu0 %1857
      %v1859 = vsel %vm850, %v1852, 0.0
      %1860 = vadd.xlane.f32.xlu0 %v1859
      %v1861 = vpop.xlane.xlu0 %1860
      %v1862 = vsel %vm857, %v1853, 0.0
      %1863 = vadd.xlane.f32.xlu0 %v1862
      %v1864 = vpop.xlane.xlu0 %1863
      %v1865 = vmul.f32 %v1858, %v861
      %v1866 = vmul.f32 %v1861, %v861
      %v1867 = vmul.f32 %v1864, %v861
      %v1868 = vsub.f32 %v1851, %v1865
      %v1869 = vsub.f32 %v1852, %v1866
      %v1870 = vsub.f32 %v1853, %v1867
      %v1871 = vmul.f32 %v1868, %v1868
      %v1872 = vmul.f32 %v1869, %v1869
      %v1873 = vmul.f32 %v1870, %v1870
      %v1874 = vsel %vm850, %v1871, 0.0
      %1875 = vadd.xlane.f32.xlu0 %v1874
      %v1876 = vpop.xlane.xlu0 %1875
      %v1877 = vsel %vm850, %v1872, 0.0
      %1878 = vadd.xlane.f32.xlu0 %v1877
      %v1879 = vpop.xlane.xlu0 %1878
      %v1880 = vsel %vm857, %v1873, 0.0
      %1881 = vadd.xlane.f32.xlu0 %v1880
      %v1882 = vpop.xlane.xlu0 %1881
      %v1883 = vmul.f32 %v1876, %v861
      %v1884 = vmul.f32 %v1879, %v861
      %v1885 = vmul.f32 %v1882, %v861
      %v1886 = vadd.f32 %v1883, 1e-06
      %v1887 = vadd.f32 %v1884, 1e-06
      %v1888 = vadd.f32 %v1885, 1e-06
      %v1889 = vrsqrt.pop %v1886
      %v1890 = vrsqrt.pop %v1887
      %v1891 = vrsqrt.pop %v1888
      %v1892 = vmul.f32 %v1868, %v1889
      %v1893 = vmul.f32 %v1869, %v1890
      %v1894 = vmul.f32 %v1870, %v1891
      %v1896 = vlaneseq
      %v1897 = vshrl.u32 %v1896, 7
      %v1898 = vsub.s32 0, %v1897
      %v1899 = vrot.slane %v1854, %v1898
      %v1901 = vmul.f32 %v1892, %v1899
      %v1902 = vmul.f32 %v1893, %v1899
      %v1903 = vmul.f32 %v1894, %v1899
      %v1905 = vlaneseq
      %v1906 = vshrl.u32 %v1905, 7
      %v1907 = vsub.s32 0, %v1906
      %v1908 = vrot.slane %v1855, %v1907
      %v1910 = vadd.f32 %v1901, %v1908
      %v1911 = vadd.f32 %v1902, %v1908
      %v1912 = vadd.f32 %v1903, %v1908
      %v1913 = vpack.c.bf16 %v1911, %v1910
      %v1914 = vpack.c.bf16 %v1912, %v1912
      %v1915 = vld [vmem:[%s741] sm:$0xff]
      %v1916 = vld [vmem:[%s741 + $0x8] sm:$0xff]
      %v1917 = vld [vmem:[%s741 + $0x10] sm:$0xff]
      %v1918 = vld [vmem:[%s741 + $0x18] sm:$0xff]
      %v1919 = vld [vmem:[%s741 + $0x20] sm:$0xff]
      %v1920 = vld [vmem:[%s741 + $0x28] sm:$0xff]
      %v1921 = vld [vmem:[%s741 + $0x30] sm:$0xff]
      %v1922 = vld [vmem:[%s741 + $0x38] sm:$0xff]
      %v1923 = vld [vmem:[%s745] sm:$0x3]
      %v1925 = vlaneseq
      %v1926 = vshrl.u32 %v1925, 7
      %v1927 = vsub.s32 0, %v1926
      %v1928 = vrot.slane %v1923, %v1927
      %v1929 = vlaneseq
      %v1930 = vshrl.u32 %v1929, 7
      %v1931 = vsub.s32 1, %v1930
      %v1932 = vrot.slane %v1923, %v1931
      %v1943 = vunpack.c.l.b16 %v1915
      %v1944 = vunpack.c.h.b16 %v1915
      %v1945 = vunpack.c.l.b16 %v1916
      %v1946 = vunpack.c.h.b16 %v1916
      %v1947 = vunpack.c.l.b16 %v1917
      %v1948 = vunpack.c.h.b16 %v1917
      %v1949 = vunpack.c.l.b16 %v1918
      %v1950 = vunpack.c.h.b16 %v1918
      %v1951 = vunpack.c.l.b16 %v1919
      %v1952 = vunpack.c.h.b16 %v1919
      %v1953 = vunpack.c.l.b16 %v1920
      %v1954 = vunpack.c.h.b16 %v1920
      %v1955 = vunpack.c.l.b16 %v1921
      %v1956 = vunpack.c.h.b16 %v1921
      %v1957 = vunpack.c.l.b16 %v1922
      %v1958 = vunpack.c.h.b16 %v1922
      %v1959 = vpack.c.b16 %v1945, %v1943
      %v1960 = vpack.c.b16 %v1946, %v1944
      %v1961 = vpack.c.b16 %v1949, %v1947
      %v1962 = vpack.c.b16 %v1950, %v1948
      %v1963 = vpack.c.b16 %v1953, %v1951
      %v1964 = vpack.c.b16 %v1954, %v1952
      %v1965 = vpack.c.b16 %v1957, %v1955
      %v1966 = vpack.c.b16 %v1958, %v1956
      %v1976 = vsel %vm850, %v1913, 0
      %v1979 = vsel %vm850, %v1914, 0
      %1981 = vmatprep.subr.bf16.mxu0 %v1960
      %1982 = vmatpush1.bf16.msra.mxu0 %v1959
      %1983 = vmatprep.subr.bf16.mxu0 %v1962
      %1984 = vmatpush1.bf16.msra.mxu0 %v1961
      %1985 = vmatprep.subr.bf16.mxu0 %v1964
      %1986 = vmatpush1.bf16.msra.mxu0 %v1963
      %1987 = vmatprep.subr.bf16.mxu0 %v1966
      %1988 = vmatpush1.bf16.msra.mxu0 %v1965
      %1989 = vmatprep.subr.bf16.mxu0 0
      %1990 = vmatpush1.bf16.msra.mxu0 0
      %1991 = vmatprep.subr.bf16.mxu0 0
      %1992 = vmatpush1.bf16.msra.mxu0 0
      %1993 = vmatprep.subr.bf16.mxu0 0
      %1994 = vmatpush1.bf16.msra.mxu0 0
      %1995 = vmatprep.subr.bf16.mxu0 0
      %1996 = vmatpush1.bf16.msra.mxu0 0
      %1997 = vmatprep.subr.bf16.mxu0 0
      %1998 = vmatpush1.bf16.msra.mxu0 0
      %1999 = vmatprep.subr.bf16.mxu0 0
      %2000 = vmatpush1.bf16.msra.mxu0 0
      %2001 = vmatprep.subr.bf16.mxu0 0
      %2002 = vmatpush1.bf16.msra.mxu0 0
      %2003 = vmatprep.subr.bf16.mxu0 0
      %2004 = vmatpush1.bf16.msra.mxu0 0
      %2005 = vmatprep.subr.bf16.mxu0 0
      %2006 = vmatpush1.bf16.msra.mxu0 0
      %2007 = vmatprep.subr.bf16.mxu0 0
      %2008 = vmatpush1.bf16.msra.mxu0 0
      %2009 = vmatprep.subr.bf16.mxu0 0
      %2010 = vmatpush1.bf16.msra.mxu0 0
      %2011 = vmatprep.subr.bf16.mxu0 0
      %2012 = vmatpush1.bf16.msra.mxu0 0
      %2013 = vmatprep.mubr.bf16.mxu0 0
      %2014 = vmatmul.mubr.bf16.gmra.mrb[0].mxu0 %v1976
      %v2015 = vpop.f32.mrb[0].mxu0
      %v2016 = vadd.f32 %v1928, %v2015
      %v2017 = vpop.f32.mrb[0].mxu0
      %v2018 = vadd.f32 %v1932, %v2017
      %v2019 = vpop.f32.mrb[0].mxu0
      %v2020 = vadd.f32 %v1928, %v2019
      %v2021 = vpop.f32.mrb[0].mxu0
      %v2022 = vadd.f32 %v1932, %v2021
      %2023 = vmatprep.mubr.bf16.mxu0 0
      %2024 = vmatmul.mubr.bf16.gmra.mrb[0].mxu0 %v1979
      %v2025 = vpop.f32.mrb[0].mxu0
      %v2026 = vadd.f32 %v1928, %v2025
      %v2027 = vpop.f32.mrb[0].mxu0
      %v2028 = vadd.f32 %v1932, %v2027
      %v2029 = vpop.f32.mrb[0].mxu0
      %v2030 = vpop.f32.mrb[0].mxu0
      %2031 = vdwg.mxu0
      %v2032 = vmul.f32 %v2016, 0.5
      %v2033 = vmul.f32 %v2018, 0.5
      %v2034 = vmul.f32 %v2020, 0.5
      %v2035 = vmul.f32 %v2022, 0.5
      %v2036 = vmul.f32 %v2026, 0.5
      %v2037 = vmul.f32 %v2028, 0.5
      %v2038 = vmul.f32 %v2016, 0.70710677
      %v2039 = vmul.f32 %v2018, 0.70710677
      %v2040 = vmul.f32 %v2020, 0.70710677
      %v2041 = vmul.f32 %v2022, 0.70710677
      %v2042 = vmul.f32 %v2026, 0.70710677
      %v2043 = vmul.f32 %v2028, 0.70710677
      %v2044 = verf.f32.pop %v2038
      %v2045 = verf.f32.pop %v2039
      %v2046 = verf.f32.pop %v2040
      %v2047 = verf.f32.pop %v2041
      %v2048 = verf.f32.pop %v2042
      %v2049 = verf.f32.pop %v2043
      %v2050 = vadd.f32 %v2044, 1.0
      %v2051 = vadd.f32 %v2045, 1.0
      %v2052 = vadd.f32 %v2046, 1.0
      %v2053 = vadd.f32 %v2047, 1.0
      %v2054 = vadd.f32 %v2048, 1.0
      %v2055 = vadd.f32 %v2049, 1.0
      %v2056 = vmul.f32 %v2032, %v2050
      %v2057 = vmul.f32 %v2033, %v2051
      %v2058 = vmul.f32 %v2034, %v2052
      %v2059 = vmul.f32 %v2035, %v2053
      %v2060 = vmul.f32 %v2036, %v2054
      %v2061 = vmul.f32 %v2037, %v2055
      %v2062 = vpack.c.bf16 %v2058, %v2056
      %v2063 = vpack.c.bf16 %v2059, %v2057
      %v2064 = vpack.c.bf16 %v2060, %v2060
      %v2065 = vpack.c.bf16 %v2061, %v2061
      %v2066 = vld [vmem:[%s750] sm:$0xf]
      %v2067 = vld [vmem:[%s750 + $0x4] sm:$0xf]
      %v2068 = vld [vmem:[%s750 + $0x8] sm:$0xf]
      %v2069 = vld [vmem:[%s750 + $0xc] sm:$0xf]
      %v2070 = vld [vmem:[%s750 + $0x10] sm:$0xf]
      %v2071 = vld [vmem:[%s750 + $0x14] sm:$0xf]
      %v2072 = vld [vmem:[%s750 + $0x18] sm:$0xf]
      %v2073 = vld [vmem:[%s750 + $0x1c] sm:$0xf]
      %v2074 = vld [vmem:[%s750 + $0x20] sm:$0xf]
      %v2075 = vld [vmem:[%s750 + $0x24] sm:$0xf]
      %v2076 = vld [vmem:[%s750 + $0x28] sm:$0xf]
      %v2077 = vld [vmem:[%s750 + $0x2c] sm:$0xf]
      %v2078 = vld [vmem:[%s750 + $0x30] sm:$0xf]
      %v2079 = vld [vmem:[%s750 + $0x34] sm:$0xf]
      %v2080 = vld [vmem:[%s750 + $0x38] sm:$0xf]
      %v2081 = vld [vmem:[%s750 + $0x3c] sm:$0xf]
      %v2082 = vld [vmem:[%s750 + $0x40] sm:$0xf]
      %v2083 = vld [vmem:[%s750 + $0x44] sm:$0xf]
      %v2084 = vld [vmem:[%s750 + $0x48] sm:$0xf]
      %v2085 = vld [vmem:[%s750 + $0x4c] sm:$0xf]
      %v2086 = vld [vmem:[%s750 + $0x50] sm:$0xf]
      %v2087 = vld [vmem:[%s750 + $0x54] sm:$0xf]
      %v2088 = vld [vmem:[%s750 + $0x58] sm:$0xf]
      %v2089 = vld [vmem:[%s750 + $0x5c] sm:$0xf]
      %v2090 = vld [vmem:[%s750 + $0x60] sm:$0xf]
      %v2091 = vld [vmem:[%s750 + $0x64] sm:$0xf]
      %v2092 = vld [vmem:[%s750 + $0x68] sm:$0xf]
      %v2093 = vld [vmem:[%s750 + $0x6c] sm:$0xf]
      %v2094 = vld [vmem:[%s750 + $0x70] sm:$0xf]
      %v2095 = vld [vmem:[%s750 + $0x74] sm:$0xf]
      %v2096 = vld [vmem:[%s750 + $0x78] sm:$0xf]
      %v2097 = vld [vmem:[%s750 + $0x7c] sm:$0xf]
      %v2130 = vunpack.c.l.b16 %v2066
      %v2131 = vunpack.c.l.b16 %v2067
      %v2132 = vunpack.c.l.b16 %v2068
      %v2133 = vunpack.c.l.b16 %v2069
      %v2134 = vunpack.c.l.b16 %v2070
      %v2135 = vunpack.c.l.b16 %v2071
      %v2136 = vunpack.c.l.b16 %v2072
      %v2137 = vunpack.c.l.b16 %v2073
      %v2138 = vunpack.c.l.b16 %v2074
      %v2139 = vunpack.c.l.b16 %v2075
      %v2140 = vunpack.c.l.b16 %v2076
      %v2141 = vunpack.c.l.b16 %v2077
      %v2142 = vunpack.c.l.b16 %v2078
      %v2143 = vunpack.c.l.b16 %v2079
      %v2144 = vunpack.c.l.b16 %v2080
      %v2145 = vunpack.c.l.b16 %v2081
      %v2146 = vunpack.c.l.b16 %v2082
      %v2147 = vunpack.c.l.b16 %v2083
      %v2148 = vunpack.c.l.b16 %v2084
      %v2149 = vunpack.c.l.b16 %v2085
      %v2150 = vunpack.c.l.b16 %v2086
      %v2151 = vunpack.c.l.b16 %v2087
      %v2152 = vunpack.c.l.b16 %v2088
      %v2153 = vunpack.c.l.b16 %v2089
      %v2154 = vunpack.c.l.b16 %v2090
      %v2155 = vunpack.c.l.b16 %v2091
      %v2156 = vunpack.c.l.b16 %v2092
      %v2157 = vunpack.c.l.b16 %v2093
      %v2158 = vunpack.c.l.b16 %v2094
      %v2159 = vunpack.c.l.b16 %v2095
      %v2160 = vunpack.c.l.b16 %v2096
      %v2161 = vunpack.c.l.b16 %v2097
      %v2162 = vpack.c.b16 %v2131, %v2130
      %v2163 = vpack.c.b16 %v2133, %v2132
      %v2164 = vpack.c.b16 %v2135, %v2134
      %v2165 = vpack.c.b16 %v2137, %v2136
      %v2166 = vpack.c.b16 %v2139, %v2138
      %v2167 = vpack.c.b16 %v2141, %v2140
      %v2168 = vpack.c.b16 %v2143, %v2142
      %v2169 = vpack.c.b16 %v2145, %v2144
      %v2170 = vpack.c.b16 %v2147, %v2146
      %v2171 = vpack.c.b16 %v2149, %v2148
      %v2172 = vpack.c.b16 %v2151, %v2150
      %v2173 = vpack.c.b16 %v2153, %v2152
      %v2174 = vpack.c.b16 %v2155, %v2154
      %v2175 = vpack.c.b16 %v2157, %v2156
      %v2176 = vpack.c.b16 %v2159, %v2158
      %v2177 = vpack.c.b16 %v2161, %v2160
      %2194 = vmatprep.subr.bf16.mxu0 0
      %2195 = vmatpush1.bf16.msra.mxu0 %v2162
      %2196 = vmatprep.subr.bf16.mxu0 0
      %2197 = vmatpush1.bf16.msra.mxu0 %v2163
      %2198 = vmatprep.subr.bf16.mxu0 0
      %2199 = vmatpush1.bf16.msra.mxu0 %v2164
      %2200 = vmatprep.subr.bf16.mxu0 0
      %2201 = vmatpush1.bf16.msra.mxu0 %v2165
      %2202 = vmatprep.subr.bf16.mxu0 0
      %2203 = vmatpush1.bf16.msra.mxu0 %v2166
      %2204 = vmatprep.subr.bf16.mxu0 0
      %2205 = vmatpush1.bf16.msra.mxu0 %v2167
      %2206 = vmatprep.subr.bf16.mxu0 0
      %2207 = vmatpush1.bf16.msra.mxu0 %v2168
      %2208 = vmatprep.subr.bf16.mxu0 0
      %2209 = vmatpush1.bf16.msra.mxu0 %v2169
      %2210 = vmatprep.subr.bf16.mxu0 0
      %2211 = vmatpush1.bf16.msra.mxu0 %v2170
      %2212 = vmatprep.subr.bf16.mxu0 0
      %2213 = vmatpush1.bf16.msra.mxu0 %v2171
      %2214 = vmatprep.subr.bf16.mxu0 0
      %2215 = vmatpush1.bf16.msra.mxu0 %v2172
      %2216 = vmatprep.subr.bf16.mxu0 0
      %2217 = vmatpush1.bf16.msra.mxu0 %v2173
      %2218 = vmatprep.subr.bf16.mxu0 0
      %2219 = vmatpush1.bf16.msra.mxu0 %v2174
      %2220 = vmatprep.subr.bf16.mxu0 0
      %2221 = vmatpush1.bf16.msra.mxu0 %v2175
      %2222 = vmatprep.subr.bf16.mxu0 0
      %2223 = vmatpush1.bf16.msra.mxu0 %v2176
      %2224 = vmatprep.subr.bf16.mxu0 0
      %2225 = vmatpush1.bf16.msra.mxu0 %v2177
      %2226 = vmatprep.mubr.bf16.mxu0 %v2063
      %2227 = vmatmul.mubr.bf16.gmra.mrb[0].mxu0 %v2062
      %v2228 = vpop.f32.mrb[0].mxu0
      %v2229 = vadd.f32 0.0, %v2228
      %v2230 = vpop.f32.mrb[0].mxu0
      %v2231 = vpop.f32.mrb[0].mxu0
      %v2232 = vadd.f32 0.0, %v2231
      %v2233 = vpop.f32.mrb[0].mxu0
      %2234 = vmatprep.mubr.bf16.mxu0 %v2065
      %2235 = vmatmul.mubr.bf16.gmra.mrb[0].mxu0 %v2064
      %v2236 = vpop.f32.mrb[0].mxu0
      %v2237 = vadd.f32 0.0, %v2236
      %v2238 = vpop.f32.mrb[0].mxu0
      %v2239 = vpop.f32.mrb[0].mxu0
      %v2240 = vpop.f32.mrb[0].mxu0
      %2241 = vdwg.mxu0
      %v2242 = vadd.f32 %v1851, %v2229
      %v2243 = vadd.f32 %v1852, %v2232
      %v2244 = vadd.f32 %v1853, %v2237
      %v2245 = vld [vmem:[%s753] sm:$0x1]
      %v2247 = vlaneseq
      %v2248 = vshrl.u32 %v2247, 7
      %v2249 = vsub.s32 0, %v2248
      %v2250 = vrot.slane %v2245, %v2249
      %v2252 = vadd.f32 %v2242, %v2250
      %v2253 = vadd.f32 %v2243, %v2250
      %v2254 = vadd.f32 %v2244, %v2250
      %2255 = vst.msk [vmem:[%s758] sm:$0xff] %vm850, %v2252
      %2256 = vst.msk [vmem:[%s758 + $0x8] sm:$0xff] %vm850, %v2253
      %2257 = vst.msk [vmem:[%s758 + $0x10] sm:$0x1] %vm857, %v2254
      %p2258 = scmp.lt.s32.totalorder %s32, 1
      %s2259 = scalar_select %p2258, %s32, 1
      %s2260 = smul.addr %s2259, 3
      %s2261 = smul.addr %s2260, 8
      %s2262 = scalar_lea.vmem %s17, %s2261
      // Predicated region
      $region93: #{forward.2} parent=87 // pred_check
        %p2263 = pneg %p480
      $region94: #{forward.2} parent=87 // pred_check_branch
        %2265 = sbr.rel (%p2263) target = $region96
      $region95: #{forward.2} parent=87 // pred_region
        _
      $region96: #{forward.2} parent=87 // pred_fallthru
        _
    $region88: #{forward.2} parent=5 // pred_fallthru
      _
    %p2266 = scmp.le.s32.totalorder 2, %s23
    // Predicated region
    $region97: #{forward.2} parent=5 // pred_check
      %p2267 = pneg %p2266
    $region98: #{forward.2} parent=5 // pred_check_branch
      %2269 = sbr.rel (%p2267) target = $region100
    $region99: #{forward.2} parent=5 // pred_region
      %s2270 = ssub.s32 %s23, 2
      // Predicated region
      $region101: #{forward.2} parent=99 // pred_check
        %p2271 = pneg %p486
      $region102: #{forward.2} parent=99 // pred_check_branch
        %2273 = sbr.rel (%p2271) target = $region104
      $region103: #{forward.2} parent=99 // pred_region
        %p2274 = scmp.lt.s32.totalorder %s34, 1
        %s2275 = scalar_select %p2274, %s34, 1
        %s2276 = smul.addr %s2275, 3
        %s2277 = smul.addr %s2276, 8
        %s2278 = scalar_lea.vmem %s17, %s2277
      $region104: #{forward.2} parent=99 // pred_fallthru
        _
    $region100: #{forward.2} parent=5 // pred_fallthru
      _
  $region6: #{forward.2} parent=0 // loop_footer
    %s27 = sadd.s32 1, %s23
  $region7: #{forward.2} parent=0 // loop_footer_branch
    %22 = sbr.rel target = $region3
  $region8: #{forward.2} parent=0 // loop_exit
    _

</llo_original>
